<compile_context>
chip_gen: v7x
topology: tpu7x:2x2x1
jax: 0.10.0
libtpu: 0.0.40
codegen_flags: <defaults>
</compile_context>

<pallas_src>
import numpy as np

import jax
import jax.numpy as jnp
from jax import lax
from jax.experimental import pallas as pl
from jax.experimental.pallas import tpu as pltpu


# (pad_offset, kernel_tap_index) pairs for each output parity of a
# ConvTranspose2d(kernel=4, stride=2, padding=1), given the input padded by 1.
#   even output rows: y[2i]   = xp[i+1]*w[ky=1] + xp[i]*w[ky=3]
#   odd  output rows: y[2i+1] = xp[i+2]*w[ky=0] + xp[i+1]*w[ky=2]
_ROW_TAPS = (((1, 1), (0, 3)),   # parity 0
             ((2, 0), (1, 2)))   # parity 1


# -----------------------------------------------------------------------------
# Host-side constant construction
# -----------------------------------------------------------------------------
def _interp_matrix(in_size, scale):
    """Row-interpolation matrix reproducing F.interpolate(bilinear, align_corners=False)."""
    out_size = in_size * scale
    M = np.zeros((out_size, in_size), np.float32)
    for o in range(out_size):
        src = (o + 0.5) / scale - 0.5
        src = max(src, 0.0)
        i0 = min(int(np.floor(src)), in_size - 1)
        w = src - i0
        i1 = min(i0 + 1, in_size - 1)
        M[o, i0] += 1.0 - w
        M[o, i1] += w
    return M


def _phase_bilinear_mats(H, W, up):
    """Per-deconv-phase matrices folding the final bilinear x`up` upsample.

    Returns (4*H*W, Ho*Wo) with rows grouped phase-major ((r,s) = 00,01,10,11),
    where Ho = 2*H*up, Wo = 2*W*up.
    """
    H2, W2 = 2 * H, 2 * W
    R = _interp_matrix(H2, up)            # (Ho, H2)
    Ct = _interp_matrix(W2, up).T         # (W2, Wo)
    Ho, Wo = H2 * up, W2 * up
    mats = []
    for r in (0, 1):
        for s in (0, 1):
            Rr = R[:, r::2]               # (Ho, H)
            Cs = Ct[s::2, :]              # (W, Wo)
            M = np.einsum('ai,jv->ijav', Rr, Cs).reshape(H * W, Ho * Wo)
            mats.append(M)
    return np.concatenate(mats, axis=0).astype(np.float32)   # (4*H*W, Ho*Wo)


def _pack_deconv_weight(w_ct):
    """PyTorch ConvTranspose2d weight (Cin, Cout, 4, 4) -> per-phase (4, 4*Cin, Cout)."""
    phases = []
    for r in (0, 1):
        for s in (0, 1):
            blocks = []
            for _, ky in _ROW_TAPS[r]:
                for _, kx in _ROW_TAPS[s]:
                    blocks.append(w_ct[:, :, ky, kx])         # (Cin, Cout)
            phases.append(np.concatenate(blocks, axis=0))     # (4*Cin, Cout)
    return np.stack(phases, axis=0).astype(np.float32)        # (4, 4*Cin, Cout)


def _pack_conv_weight(w_oihw):
    """PyTorch Conv2d weight (Cout, Cin, 3, 3) -> im2col layout (9*Cin, Cout)."""
    cout = w_oihw.shape[0]
    return np.transpose(w_oihw, (2, 3, 1, 0)).reshape(-1, cout).astype(np.float32)


# -----------------------------------------------------------------------------
# Fused Pallas kernel
# -----------------------------------------------------------------------------
def _make_fused_kernel(num_convs, H, W, Cin0, Cc, Cd, K):
    """Builds the fused conv-stack + polyphase-deconv + folded-bilinear kernel."""

    def kernel(*refs):
        x_ref = refs[0]                                    # (1, H, W, Cin0)
        conv_refs = refs[1:1 + 2 * num_convs]              # w_i (9*cin, Cc), b_i (1, Cc)
        wd_ref, m_ref, bd_ref, o_ref, pad_ref = refs[1 + 2 * num_convs:]
        # wd_ref: (4, 4*Cd, K)   m_ref: (4*H*W, Ho*Wo)   bd_ref: (K, 1)
        # o_ref:  (1, K, Ho*Wo)  pad_ref: VMEM scratch (H+2, W+2, Cmax)

        # Zero-padded activation buffer (pad=1 halo); input written to the interior.
        pad_ref[...] = jnp.zeros_like(pad_ref)
        pad_ref[1:H + 1, 1:W + 1, :Cin0] = x_ref[0]

        # ---- Conv3x3 + bias + ReLU stack: im2col -> one MXU dot per layer ------
        cin = Cin0
        for i in range(num_convs):
            w_ref = conv_refs[2 * i]
            b_ref = conv_refs[2 * i + 1]
            taps = []
            for kh in range(3):
                for kw in range(3):
                    taps.append(
                        pad_ref[kh:kh + H, kw:kw + W, :cin].reshape(H * W, cin))
            patches = jnp.concatenate(taps, axis=1)                 # (H*W, 9*cin)
            act = jnp.dot(patches, w_ref[...],
                          preferred_element_type=jnp.float32) + b_ref[...]
            act = jnp.maximum(act, 0.0)
            pad_ref[1:H + 1, 1:W + 1, :Cc] = act.reshape(H, W, Cc)  # reuse halo buffer
            cin = Cc

        # ---- Polyphase ConvTranspose2d(k=4, s=2, p=1): four 2x2 valid convs ----
        phs = []
        for r in (0, 1):
            for s in (0, 1):
                p = 2 * r + s
                taps = []
                for oy, _ in _ROW_TAPS[r]:
                    for ox, _ in _ROW_TAPS[s]:
                        taps.append(
                            pad_ref[oy:oy + H, ox:ox + W, :Cd].reshape(H * W, Cd))
                patches = jnp.concatenate(taps, axis=1)             # (H*W, 4*Cd)
                ph = jnp.dot(patches, wd_ref[p],
                             preferred_element_type=jnp.float32)    # (H*W, K)
                phs.append(ph.T)                                    # (K, H*W)

        # ---- Bilinear upsample folded into M: one lane-dense matmul ------------
        p_all = jnp.concatenate(phs, axis=1)                        # (K, 4*H*W)
        out = jnp.dot(p_all, m_ref[...],
                      preferred_element_type=jnp.float32)           # (K, Ho*Wo)
        o_ref[0] = out + bd_ref[...]                                # deconv bias

    return kernel


# -----------------------------------------------------------------------------
# FCNKeypointHead (forward only)
# -----------------------------------------------------------------------------
class FCNKeypointHeadPallas:
    def __init__(self, num_convs=2, in_channels=8, conv_out_channels=8,
                 num_keypoints=4, conv_kernel_size=3, scale_factor=2, up_scale=2,
                 key=jax.random.PRNGKey(0)):
        assert conv_kernel_size == 3, "only 3x3 convs supported"
        assert scale_factor == 2, "polyphase path assumes deconv(k=4, s=2, p=1)"
        self.num_convs = num_convs
        self.in_channels = in_channels
        self.conv_out_channels = conv_out_channels
        self.num_keypoints = num_keypoints
        self.up_scale = up_scale

        keys = jax.random.split(key, 2 * num_convs + 2)

        # Raw parameters in PyTorch layouts (used by the pure-JAX reference).
        self.conv_params = []
        cin = in_channels
        for i in range(num_convs):
            w = jax.random.normal(keys[2 * i], (conv_out_channels, cin, 3, 3),
                                  jnp.float32) * 0.1                       # OIHW
            b = jax.random.normal(keys[2 * i + 1], (conv_out_channels,),
                                  jnp.float32) * 0.05
            self.conv_params.append((w, b))
            cin = conv_out_channels
        cd = conv_out_channels if num_convs > 0 else in_channels
        self.w_up = jax.random.normal(keys[-2], (cd, num_keypoints, 4, 4),
                                      jnp.float32) * 0.1                   # (Cin, Cout, 4, 4)
        self.b_up = jax.random.normal(keys[-1], (num_keypoints,), jnp.float32) * 0.05
        self._deconv_cin = cd

        # Packed parameters for the fused kernel.
        self.conv_packed = []
        for w, b in self.conv_params:
            wp = jnp.asarray(_pack_conv_weight(np.asarray(w)))              # (9*Cin, Cc)
            bp = jnp.asarray(np.asarray(b).reshape(1, -1), jnp.float32)     # (1, Cc)
            self.conv_packed.append((wp, bp))
        self.wd_packed = jnp.asarray(_pack_deconv_weight(np.asarray(self.w_up)))  # (4, 4*Cd, K)
        self.bd_col = jnp.asarray(np.asarray(self.b_up).reshape(num_keypoints, 1),
                                  jnp.float32)                              # (K, 1)
        self._m_cache = {}

    def _phase_mats(self, H, W):
        if (H, W) not in self._m_cache:
            self._m_cache[(H, W)] = jnp.asarray(
                _phase_bilinear_mats(H, W, self.up_scale))
        return self._m_cache[(H, W)]

    def __call__(self, x_nchw):
        x = jnp.asarray(x_nchw, jnp.float32)
        N, Cin, H, W = x.shape
        assert Cin == self.in_channels
        x_nhwc = jnp.transpose(x, (0, 2, 3, 1))                    # NCHW -> NHWC

        K = self.num_keypoints
        Cc = self.conv_out_channels
        Cd = self._deconv_cin
        Cmax = max(Cin, Cc) if self.num_convs > 0 else Cin
        m_all = self._phase_mats(H, W)                             # (4*H*W, Ho*Wo)
        out_lanes = m_all.shape[1]

        kernel = _make_fused_kernel(self.num_convs, H, W, Cin, Cc, Cd, K)

        in_specs = [pl.BlockSpec((1, H, W, Cin), lambda n: (n, 0, 0, 0))]
        inputs = [x_nhwc]
        for wp, bp in self.conv_packed:
            in_specs.append(pl.BlockSpec(wp.shape, lambda n: (0, 0)))
            in_specs.append(pl.BlockSpec(bp.shape, lambda n: (0, 0)))
            inputs.extend([wp, bp])
        in_specs.append(pl.BlockSpec(self.wd_packed.shape, lambda n: (0, 0, 0)))
        in_specs.append(pl.BlockSpec(m_all.shape, lambda n: (0, 0)))
        in_specs.append(pl.BlockSpec(self.bd_col.shape, lambda n: (0, 0)))
        inputs.extend([self.wd_packed, m_all, self.bd_col])

        out = pl.pallas_call(
            kernel,
            out_shape=jax.ShapeDtypeStruct((N, K, out_lanes), jnp.float32),
            grid=(N,),
            in_specs=in_specs,
            out_specs=pl.BlockSpec((1, K, out_lanes), lambda n: (n, 0, 0)),
            scratch_shapes=[pltpu.VMEM((H + 2, W + 2, Cmax), jnp.float32)],
            compiler_params=pltpu.CompilerParams(
                dimension_semantics=("parallel",)),
        )(*inputs)

        Hout = 2 * H * self.up_scale
        Wout = 2 * W * self.up_scale
        return out.reshape(N, K, Hout, Wout)                       # NCHW output


# -----------------------------------------------------------------------------
# Pure JAX / numpy reference for verification
# -----------------------------------------------------------------------------
def _np_bilinear(x, scale):
    x = np.asarray(x, np.float32)
    N, K, H, W = x.shape

    def coords(in_size):
        out_size = in_size * scale
        src = (np.arange(out_size, dtype=np.float64) + 0.5) / scale - 0.5
        src = np.maximum(src, 0.0)
        i0 = np.minimum(np.floor(src).astype(np.int64), in_size - 1)
        i1 = np.minimum(i0 + 1, in_size - 1)
        w = (src - i0).astype(np.float32)
        return i0, i1, w

    y0, y1, wy = coords(H)
    x0, x1, wx = coords(W)
    g = lambda yi, xi: x[:, :, yi][:, :, :, xi]
    top = g(y0, x0) * (1 - wx) + g(y0, x1) * wx
    bot = g(y1, x0) * (1 - wx) + g(y1, x1) * wx
    return top * (1 - wy)[:, None] + bot * wy[:, None]


def reference_forward(head, x_nchw):
    dn = ('NHWC', 'HWIO', 'NHWC')
    x = jnp.transpose(x_nchw.astype(jnp.float32), (0, 2, 3, 1))
    for w_oihw, b in head.conv_params:
        w_hwio = jnp.transpose(w_oihw, (2, 3, 1, 0))
        x = lax.conv_general_dilated(x, w_hwio, (1, 1), ((1, 1), (1, 1)),
                                     dimension_numbers=dn,
                                     precision=lax.Precision.HIGHEST) + b
        x = jnp.maximum(x, 0.0)
    # ConvTranspose2d(k=4, s=2, p=1) == dilated conv with flipped, transposed weight.
    w_conv = jnp.transpose(head.w_up[:, :, ::-1, ::-1], (2, 3, 0, 1))
    x = lax.conv_general_dilated(x, w_conv, (1, 1), ((2, 2), (2, 2)),
                                 lhs_dilation=(2, 2), dimension_numbers=dn,
                                 precision=lax.Precision.HIGHEST) + head.b_up
    x = jnp.transpose(x, (0, 3, 1, 2))
    return _np_bilinear(np.asarray(x), head.up_scale)


# -----------------------------------------------------------------------------
if __name__ == "__main__":
    # Small synthetic config: N=2, in_channels=8, roi_feat 8x8, 2 convs, 4 keypoints.
    N, C, H, W = 2, 8, 8, 8
    head = FCNKeypointHeadPallas(num_convs=2, in_channels=C, conv_out_channels=8,
                                 num_keypoints=4, up_scale=2,
                                 key=jax.random.PRNGKey(42))

    x = jax.random.normal(jax.random.PRNGKey(0), (N, C, H, W), jnp.float32)  # NCHW input

    out = jax.block_until_ready(head(x))
    assert out.shape == (N, 4, 4 * H, 4 * W), out.shape

    ref = reference_forward(head, x)
    err = float(np.max(np.abs(np.asarray(out) - np.asarray(ref))))
    assert np.allclose(np.asarray(out), ref, rtol=1e-2, atol=1e-2), (
        "max abs diff = %g" % err)

    print("KERNEL_OK")
</pallas_src>

<mosaic_0001>
module attributes {stable_mosaic.version = 11 : i64} {
  func.func @kernel(%arg0: i32, %arg1: memref<1x8x8x8xf32, #tpu.memory_space<vmem>>, %arg2: memref<72x8xf32, #tpu.memory_space<vmem>>, %arg3: memref<1x8xf32, #tpu.memory_space<vmem>>, %arg4: memref<72x8xf32, #tpu.memory_space<vmem>>, %arg5: memref<1x8xf32, #tpu.memory_space<vmem>>, %arg6: memref<4x32x4xf32, #tpu.memory_space<vmem>>, %arg7: memref<256x1024xf32, #tpu.memory_space<vmem>>, %arg8: memref<4x1xf32, #tpu.memory_space<vmem>>, %arg9: memref<1x4x1024xf32, #tpu.memory_space<vmem>>, %arg10: memref<10x10x8xf32, #tpu.memory_space<vmem>>) attributes {dimension_semantics = [#tpu.dimension_semantics<parallel>], iteration_bounds = array<i64: 2>, scalar_prefetch = 0 : i64, scratch_operands = 1 : i64, tpu.core_type = #tpu.core_type<tc>, window_params = [{transform_indices = @transform_0, window_bounds = array<i64: 1, 8, 8, 8>}, {pipeline_mode = #tpu.pipeline_mode<synchronous>, transform_indices = @transform_1, window_bounds = array<i64: 72, 8>}, {pipeline_mode = #tpu.pipeline_mode<synchronous>, transform_indices = @transform_2, window_bounds = array<i64: 1, 8>}, {pipeline_mode = #tpu.pipeline_mode<synchronous>, transform_indices = @transform_3, window_bounds = array<i64: 72, 8>}, {pipeline_mode = #tpu.pipeline_mode<synchronous>, transform_indices = @transform_4, window_bounds = array<i64: 1, 8>}, {pipeline_mode = #tpu.pipeline_mode<synchronous>, transform_indices = @transform_5, window_bounds = array<i64: 4, 32, 4>}, {pipeline_mode = #tpu.pipeline_mode<synchronous>, transform_indices = @transform_6, window_bounds = array<i64: 256, 1024>}, {pipeline_mode = #tpu.pipeline_mode<synchronous>, transform_indices = @transform_7, window_bounds = array<i64: 4, 1>}, {transform_indices = @transform_8, window_bounds = array<i64: 1, 4, 1024>}]} {
    %cst = arith.constant 0.000000e+00 : f32
    %0 = vector.broadcast %cst : f32 to vector<10x10x8xf32>
    %c0 = arith.constant 0 : index
    %c0_0 = arith.constant 0 : index
    %c0_1 = arith.constant 0 : index
    %1 = vector.load %arg10[%c0, %c0_0, %c0_1] : memref<10x10x8xf32, #tpu.memory_space<vmem>>, vector<10x10x8xf32>
    tpu.vector_store %arg10[%c0, %c0_0, %c0_1], %0 {strides = array<i32>} : memref<10x10x8xf32, #tpu.memory_space<vmem>>, vector<10x10x8xf32>,
    %c0_2 = arith.constant 0 : index
    %c0_3 = arith.constant 0 : index
    %c0_4 = arith.constant 0 : index
    %c0_5 = arith.constant 0 : index
    %2 = vector.load %arg1[%c0_2, %c0_3, %c0_4, %c0_5] : memref<1x8x8x8xf32, #tpu.memory_space<vmem>>, vector<1x8x8x8xf32>
    %3 = vector.shape_cast %2 : vector<1x8x8x8xf32> to vector<8x8x8xf32>
    %c1 = arith.constant 1 : index
    %c1_6 = arith.constant 1 : index
    %c0_7 = arith.constant 0 : index
    %4 = vector.load %arg10[%c1, %c1_6, %c0_7] : memref<10x10x8xf32, #tpu.memory_space<vmem>>, vector<8x8x8xf32>
    tpu.vector_store %arg10[%c1, %c1_6, %c0_7], %3 {strides = array<i32>} : memref<10x10x8xf32, #tpu.memory_space<vmem>>, vector<8x8x8xf32>,
    %c0_8 = arith.constant 0 : index
    %c0_9 = arith.constant 0 : index
    %c0_10 = arith.constant 0 : index
    %5 = vector.load %arg10[%c0_8, %c0_9, %c0_10] : memref<10x10x8xf32, #tpu.memory_space<vmem>>, vector<8x8x8xf32>
    %6 = vector.shape_cast %5 : vector<8x8x8xf32> to vector<64x8xf32>
    %c0_11 = arith.constant 0 : index
    %c1_12 = arith.constant 1 : index
    %c0_13 = arith.constant 0 : index
    %7 = vector.load %arg10[%c0_11, %c1_12, %c0_13] : memref<10x10x8xf32, #tpu.memory_space<vmem>>, vector<8x8x8xf32>
    %8 = vector.shape_cast %7 : vector<8x8x8xf32> to vector<64x8xf32>
    %c0_14 = arith.constant 0 : index
    %c2 = arith.constant 2 : index
    %c0_15 = arith.constant 0 : index
    %9 = vector.load %arg10[%c0_14, %c2, %c0_15] : memref<10x10x8xf32, #tpu.memory_space<vmem>>, vector<8x8x8xf32>
    %10 = vector.shape_cast %9 : vector<8x8x8xf32> to vector<64x8xf32>
    %c1_16 = arith.constant 1 : index
    %c0_17 = arith.constant 0 : index
    %c0_18 = arith.constant 0 : index
    %11 = vector.load %arg10[%c1_16, %c0_17, %c0_18] : memref<10x10x8xf32, #tpu.memory_space<vmem>>, vector<8x8x8xf32>
    %12 = vector.shape_cast %11 : vector<8x8x8xf32> to vector<64x8xf32>
    %c1_19 = arith.constant 1 : index
    %c1_20 = arith.constant 1 : index
    %c0_21 = arith.constant 0 : index
    %13 = vector.load %arg10[%c1_19, %c1_20, %c0_21] : memref<10x10x8xf32, #tpu.memory_space<vmem>>, vector<8x8x8xf32>
    %14 = vector.shape_cast %13 : vector<8x8x8xf32> to vector<64x8xf32>
    %c1_22 = arith.constant 1 : index
    %c2_23 = arith.constant 2 : index
    %c0_24 = arith.constant 0 : index
    %15 = vector.load %arg10[%c1_22, %c2_23, %c0_24] : memref<10x10x8xf32, #tpu.memory_space<vmem>>, vector<8x8x8xf32>
    %16 = vector.shape_cast %15 : vector<8x8x8xf32> to vector<64x8xf32>
    %c2_25 = arith.constant 2 : index
    %c0_26 = arith.constant 0 : index
    %c0_27 = arith.constant 0 : index
    %17 = vector.load %arg10[%c2_25, %c0_26, %c0_27] : memref<10x10x8xf32, #tpu.memory_space<vmem>>, vector<8x8x8xf32>
    %18 = vector.shape_cast %17 : vector<8x8x8xf32> to vector<64x8xf32>
    %c2_28 = arith.constant 2 : index
    %c1_29 = arith.constant 1 : index
    %c0_30 = arith.constant 0 : index
    %19 = vector.load %arg10[%c2_28, %c1_29, %c0_30] : memref<10x10x8xf32, #tpu.memory_space<vmem>>, vector<8x8x8xf32>
    %20 = vector.shape_cast %19 : vector<8x8x8xf32> to vector<64x8xf32>
    %c2_31 = arith.constant 2 : index
    %c2_32 = arith.constant 2 : index
    %c0_33 = arith.constant 0 : index
    %21 = vector.load %arg10[%c2_31, %c2_32, %c0_33] : memref<10x10x8xf32, #tpu.memory_space<vmem>>, vector<8x8x8xf32>
    %22 = vector.shape_cast %21 : vector<8x8x8xf32> to vector<64x8xf32>
    %23 = tpu.concatenate %6, %8, %10, %12, %14, %16, %18, %20, %22 in 1 : vector<64x8xf32>, vector<64x8xf32>, vector<64x8xf32>, vector<64x8xf32>, vector<64x8xf32>, vector<64x8xf32>, vector<64x8xf32>, vector<64x8xf32>, vector<64x8xf32> -> vector<64x72xf32>
    %c0_34 = arith.constant 0 : index
    %c0_35 = arith.constant 0 : index
    %24 = vector.load %arg2[%c0_34, %c0_35] : memref<72x8xf32, #tpu.memory_space<vmem>>, vector<72x8xf32>
    %cst_36 = arith.constant dense<0.000000e+00> : vector<64x8xf32>
    %25 = tpu.matmul %23, %24, %cst_36 {dimension_numbers = #tpu.dot_dimension_numbers<[1], [0], [0], [1], [0, 0, 1, 1], [], []>} : vector<64x72xf32>, vector<72x8xf32>, vector<64x8xf32> -> vector<64x8xf32>
    %c0_37 = arith.constant 0 : index
    %c0_38 = arith.constant 0 : index
    %26 = vector.load %arg3[%c0_37, %c0_38] : memref<1x8xf32, #tpu.memory_space<vmem>>, vector<1x8xf32>
    %27 = vector.broadcast %26 : vector<1x8xf32> to vector<64x8xf32>
    %28 = arith.addf %25, %27 : vector<64x8xf32>
    %cst_39 = arith.constant 0.000000e+00 : f32
    %29 = vector.broadcast %cst_39 : f32 to vector<64x8xf32>
    %30 = arith.maximumf %28, %29 : vector<64x8xf32>
    %31 = vector.shape_cast %30 : vector<64x8xf32> to vector<8x8x8xf32>
    %c1_40 = arith.constant 1 : index
    %c1_41 = arith.constant 1 : index
    %c0_42 = arith.constant 0 : index
    %32 = vector.load %arg10[%c1_40, %c1_41, %c0_42] : memref<10x10x8xf32, #tpu.memory_space<vmem>>, vector<8x8x8xf32>
    tpu.vector_store %arg10[%c1_40, %c1_41, %c0_42], %31 {strides = array<i32>} : memref<10x10x8xf32, #tpu.memory_space<vmem>>, vector<8x8x8xf32>,
    %c0_43 = arith.constant 0 : index
    %c0_44 = arith.constant 0 : index
    %c0_45 = arith.constant 0 : index
    %33 = vector.load %arg10[%c0_43, %c0_44, %c0_45] : memref<10x10x8xf32, #tpu.memory_space<vmem>>, vector<8x8x8xf32>
    %34 = vector.shape_cast %33 : vector<8x8x8xf32> to vector<64x8xf32>
    %c0_46 = arith.constant 0 : index
    %c1_47 = arith.constant 1 : index
    %c0_48 = arith.constant 0 : index
    %35 = vector.load %arg10[%c0_46, %c1_47, %c0_48] : memref<10x10x8xf32, #tpu.memory_space<vmem>>, vector<8x8x8xf32>
    %36 = vector.shape_cast %35 : vector<8x8x8xf32> to vector<64x8xf32>
    %c0_49 = arith.constant 0 : index
    %c2_50 = arith.constant 2 : index
    %c0_51 = arith.constant 0 : index
    %37 = vector.load %arg10[%c0_49, %c2_50, %c0_51] : memref<10x10x8xf32, #tpu.memory_space<vmem>>, vector<8x8x8xf32>
    %38 = vector.shape_cast %37 : vector<8x8x8xf32> to vector<64x8xf32>
    %c1_52 = arith.constant 1 : index
    %c0_53 = arith.constant 0 : index
    %c0_54 = arith.constant 0 : index
    %39 = vector.load %arg10[%c1_52, %c0_53, %c0_54] : memref<10x10x8xf32, #tpu.memory_space<vmem>>, vector<8x8x8xf32>
    %40 = vector.shape_cast %39 : vector<8x8x8xf32> to vector<64x8xf32>
    %c1_55 = arith.constant 1 : index
    %c1_56 = arith.constant 1 : index
    %c0_57 = arith.constant 0 : index
    %41 = vector.load %arg10[%c1_55, %c1_56, %c0_57] : memref<10x10x8xf32, #tpu.memory_space<vmem>>, vector<8x8x8xf32>
    %42 = vector.shape_cast %41 : vector<8x8x8xf32> to vector<64x8xf32>
    %c1_58 = arith.constant 1 : index
    %c2_59 = arith.constant 2 : index
    %c0_60 = arith.constant 0 : index
    %43 = vector.load %arg10[%c1_58, %c2_59, %c0_60] : memref<10x10x8xf32, #tpu.memory_space<vmem>>, vector<8x8x8xf32>
    %44 = vector.shape_cast %43 : vector<8x8x8xf32> to vector<64x8xf32>
    %c2_61 = arith.constant 2 : index
    %c0_62 = arith.constant 0 : index
    %c0_63 = arith.constant 0 : index
    %45 = vector.load %arg10[%c2_61, %c0_62, %c0_63] : memref<10x10x8xf32, #tpu.memory_space<vmem>>, vector<8x8x8xf32>
    %46 = vector.shape_cast %45 : vector<8x8x8xf32> to vector<64x8xf32>
    %c2_64 = arith.constant 2 : index
    %c1_65 = arith.constant 1 : index
    %c0_66 = arith.constant 0 : index
    %47 = vector.load %arg10[%c2_64, %c1_65, %c0_66] : memref<10x10x8xf32, #tpu.memory_space<vmem>>, vector<8x8x8xf32>
    %48 = vector.shape_cast %47 : vector<8x8x8xf32> to vector<64x8xf32>
    %c2_67 = arith.constant 2 : index
    %c2_68 = arith.constant 2 : index
    %c0_69 = arith.constant 0 : index
    %49 = vector.load %arg10[%c2_67, %c2_68, %c0_69] : memref<10x10x8xf32, #tpu.memory_space<vmem>>, vector<8x8x8xf32>
    %50 = vector.shape_cast %49 : vector<8x8x8xf32> to vector<64x8xf32>
    %51 = tpu.concatenate %34, %36, %38, %40, %42, %44, %46, %48, %50 in 1 : vector<64x8xf32>, vector<64x8xf32>, vector<64x8xf32>, vector<64x8xf32>, vector<64x8xf32>, vector<64x8xf32>, vector<64x8xf32>, vector<64x8xf32>, vector<64x8xf32> -> vector<64x72xf32>
    %c0_70 = arith.constant 0 : index
    %c0_71 = arith.constant 0 : index
    %52 = vector.load %arg4[%c0_70, %c0_71] : memref<72x8xf32, #tpu.memory_space<vmem>>, vector<72x8xf32>
    %cst_72 = arith.constant dense<0.000000e+00> : vector<64x8xf32>
    %53 = tpu.matmul %51, %52, %cst_72 {dimension_numbers = #tpu.dot_dimension_numbers<[1], [0], [0], [1], [0, 0, 1, 1], [], []>} : vector<64x72xf32>, vector<72x8xf32>, vector<64x8xf32> -> vector<64x8xf32>
    %c0_73 = arith.constant 0 : index
    %c0_74 = arith.constant 0 : index
    %54 = vector.load %arg5[%c0_73, %c0_74] : memref<1x8xf32, #tpu.memory_space<vmem>>, vector<1x8xf32>
    %55 = vector.broadcast %54 : vector<1x8xf32> to vector<64x8xf32>
    %56 = arith.addf %53, %55 : vector<64x8xf32>
    %cst_75 = arith.constant 0.000000e+00 : f32
    %57 = vector.broadcast %cst_75 : f32 to vector<64x8xf32>
    %58 = arith.maximumf %56, %57 : vector<64x8xf32>
    %59 = vector.shape_cast %58 : vector<64x8xf32> to vector<8x8x8xf32>
    %c1_76 = arith.constant 1 : index
    %c1_77 = arith.constant 1 : index
    %c0_78 = arith.constant 0 : index
    %60 = vector.load %arg10[%c1_76, %c1_77, %c0_78] : memref<10x10x8xf32, #tpu.memory_space<vmem>>, vector<8x8x8xf32>
    tpu.vector_store %arg10[%c1_76, %c1_77, %c0_78], %59 {strides = array<i32>} : memref<10x10x8xf32, #tpu.memory_space<vmem>>, vector<8x8x8xf32>,
    %c1_79 = arith.constant 1 : index
    %c1_80 = arith.constant 1 : index
    %c0_81 = arith.constant 0 : index
    %61 = vector.load %arg10[%c1_79, %c1_80, %c0_81] : memref<10x10x8xf32, #tpu.memory_space<vmem>>, vector<8x8x8xf32>
    %62 = vector.shape_cast %61 : vector<8x8x8xf32> to vector<64x8xf32>
    %c1_82 = arith.constant 1 : index
    %c0_83 = arith.constant 0 : index
    %c0_84 = arith.constant 0 : index
    %63 = vector.load %arg10[%c1_82, %c0_83, %c0_84] : memref<10x10x8xf32, #tpu.memory_space<vmem>>, vector<8x8x8xf32>
    %64 = vector.shape_cast %63 : vector<8x8x8xf32> to vector<64x8xf32>
    %c0_85 = arith.constant 0 : index
    %c1_86 = arith.constant 1 : index
    %c0_87 = arith.constant 0 : index
    %65 = vector.load %arg10[%c0_85, %c1_86, %c0_87] : memref<10x10x8xf32, #tpu.memory_space<vmem>>, vector<8x8x8xf32>
    %66 = vector.shape_cast %65 : vector<8x8x8xf32> to vector<64x8xf32>
    %c0_88 = arith.constant 0 : index
    %c0_89 = arith.constant 0 : index
    %c0_90 = arith.constant 0 : index
    %67 = vector.load %arg10[%c0_88, %c0_89, %c0_90] : memref<10x10x8xf32, #tpu.memory_space<vmem>>, vector<8x8x8xf32>
    %68 = vector.shape_cast %67 : vector<8x8x8xf32> to vector<64x8xf32>
    %69 = tpu.concatenate %62, %64, %66, %68 in 1 : vector<64x8xf32>, vector<64x8xf32>, vector<64x8xf32>, vector<64x8xf32> -> vector<64x32xf32>
    %c0_91 = arith.constant 0 : index
    %c0_92 = arith.constant 0 : index
    %c0_93 = arith.constant 0 : index
    %70 = vector.load %arg6[%c0_91, %c0_92, %c0_93] : memref<4x32x4xf32, #tpu.memory_space<vmem>>, vector<1x32x4xf32>
    %71 = vector.shape_cast %70 : vector<1x32x4xf32> to vector<32x4xf32>
    %cst_94 = arith.constant dense<0.000000e+00> : vector<64x4xf32>
    %72 = tpu.matmul %69, %71, %cst_94 {dimension_numbers = #tpu.dot_dimension_numbers<[1], [0], [0], [1], [0, 0, 1, 1], [], []>} : vector<64x32xf32>, vector<32x4xf32>, vector<64x4xf32> -> vector<64x4xf32>
    %73 = tpu.transpose %72, [1, 0] : vector<64x4xf32> -> vector<4x64xf32>
    %c1_95 = arith.constant 1 : index
    %c2_96 = arith.constant 2 : index
    %c0_97 = arith.constant 0 : index
    %74 = vector.load %arg10[%c1_95, %c2_96, %c0_97] : memref<10x10x8xf32, #tpu.memory_space<vmem>>, vector<8x8x8xf32>
    %75 = vector.shape_cast %74 : vector<8x8x8xf32> to vector<64x8xf32>
    %c1_98 = arith.constant 1 : index
    %c1_99 = arith.constant 1 : index
    %c0_100 = arith.constant 0 : index
    %76 = vector.load %arg10[%c1_98, %c1_99, %c0_100] : memref<10x10x8xf32, #tpu.memory_space<vmem>>, vector<8x8x8xf32>
    %77 = vector.shape_cast %76 : vector<8x8x8xf32> to vector<64x8xf32>
    %c0_101 = arith.constant 0 : index
    %c2_102 = arith.constant 2 : index
    %c0_103 = arith.constant 0 : index
    %78 = vector.load %arg10[%c0_101, %c2_102, %c0_103] : memref<10x10x8xf32, #tpu.memory_space<vmem>>, vector<8x8x8xf32>
    %79 = vector.shape_cast %78 : vector<8x8x8xf32> to vector<64x8xf32>
    %c0_104 = arith.constant 0 : index
    %c1_105 = arith.constant 1 : index
    %c0_106 = arith.constant 0 : index
    %80 = vector.load %arg10[%c0_104, %c1_105, %c0_106] : memref<10x10x8xf32, #tpu.memory_space<vmem>>, vector<8x8x8xf32>
    %81 = vector.shape_cast %80 : vector<8x8x8xf32> to vector<64x8xf32>
    %82 = tpu.concatenate %75, %77, %79, %81 in 1 : vector<64x8xf32>, vector<64x8xf32>, vector<64x8xf32>, vector<64x8xf32> -> vector<64x32xf32>
    %c1_107 = arith.constant 1 : index
    %c0_108 = arith.constant 0 : index
    %c0_109 = arith.constant 0 : index
    %83 = vector.load %arg6[%c1_107, %c0_108, %c0_109] : memref<4x32x4xf32, #tpu.memory_space<vmem>>, vector<1x32x4xf32>
    %84 = vector.shape_cast %83 : vector<1x32x4xf32> to vector<32x4xf32>
    %cst_110 = arith.constant dense<0.000000e+00> : vector<64x4xf32>
    %85 = tpu.matmul %82, %84, %cst_110 {dimension_numbers = #tpu.dot_dimension_numbers<[1], [0], [0], [1], [0, 0, 1, 1], [], []>} : vector<64x32xf32>, vector<32x4xf32>, vector<64x4xf32> -> vector<64x4xf32>
    %86 = tpu.transpose %85, [1, 0] : vector<64x4xf32> -> vector<4x64xf32>
    %c2_111 = arith.constant 2 : index
    %c1_112 = arith.constant 1 : index
    %c0_113 = arith.constant 0 : index
    %87 = vector.load %arg10[%c2_111, %c1_112, %c0_113] : memref<10x10x8xf32, #tpu.memory_space<vmem>>, vector<8x8x8xf32>
    %88 = vector.shape_cast %87 : vector<8x8x8xf32> to vector<64x8xf32>
    %c2_114 = arith.constant 2 : index
    %c0_115 = arith.constant 0 : index
    %c0_116 = arith.constant 0 : index
    %89 = vector.load %arg10[%c2_114, %c0_115, %c0_116] : memref<10x10x8xf32, #tpu.memory_space<vmem>>, vector<8x8x8xf32>
    %90 = vector.shape_cast %89 : vector<8x8x8xf32> to vector<64x8xf32>
    %c1_117 = arith.constant 1 : index
    %c1_118 = arith.constant 1 : index
    %c0_119 = arith.constant 0 : index
    %91 = vector.load %arg10[%c1_117, %c1_118, %c0_119] : memref<10x10x8xf32, #tpu.memory_space<vmem>>, vector<8x8x8xf32>
    %92 = vector.shape_cast %91 : vector<8x8x8xf32> to vector<64x8xf32>
    %c1_120 = arith.constant 1 : index
    %c0_121 = arith.constant 0 : index
    %c0_122 = arith.constant 0 : index
    %93 = vector.load %arg10[%c1_120, %c0_121, %c0_122] : memref<10x10x8xf32, #tpu.memory_space<vmem>>, vector<8x8x8xf32>
    %94 = vector.shape_cast %93 : vector<8x8x8xf32> to vector<64x8xf32>
    %95 = tpu.concatenate %88, %90, %92, %94 in 1 : vector<64x8xf32>, vector<64x8xf32>, vector<64x8xf32>, vector<64x8xf32> -> vector<64x32xf32>
    %c2_123 = arith.constant 2 : index
    %c0_124 = arith.constant 0 : index
    %c0_125 = arith.constant 0 : index
    %96 = vector.load %arg6[%c2_123, %c0_124, %c0_125] : memref<4x32x4xf32, #tpu.memory_space<vmem>>, vector<1x32x4xf32>
    %97 = vector.shape_cast %96 : vector<1x32x4xf32> to vector<32x4xf32>
    %cst_126 = arith.constant dense<0.000000e+00> : vector<64x4xf32>
    %98 = tpu.matmul %95, %97, %cst_126 {dimension_numbers = #tpu.dot_dimension_numbers<[1], [0], [0], [1], [0, 0, 1, 1], [], []>} : vector<64x32xf32>, vector<32x4xf32>, vector<64x4xf32> -> vector<64x4xf32>
    %99 = tpu.transpose %98, [1, 0] : vector<64x4xf32> -> vector<4x64xf32>
    %c2_127 = arith.constant 2 : index
    %c2_128 = arith.constant 2 : index
    %c0_129 = arith.constant 0 : index
    %100 = vector.load %arg10[%c2_127, %c2_128, %c0_129] : memref<10x10x8xf32, #tpu.memory_space<vmem>>, vector<8x8x8xf32>
    %101 = vector.shape_cast %100 : vector<8x8x8xf32> to vector<64x8xf32>
    %c2_130 = arith.constant 2 : index
    %c1_131 = arith.constant 1 : index
    %c0_132 = arith.constant 0 : index
    %102 = vector.load %arg10[%c2_130, %c1_131, %c0_132] : memref<10x10x8xf32, #tpu.memory_space<vmem>>, vector<8x8x8xf32>
    %103 = vector.shape_cast %102 : vector<8x8x8xf32> to vector<64x8xf32>
    %c1_133 = arith.constant 1 : index
    %c2_134 = arith.constant 2 : index
    %c0_135 = arith.constant 0 : index
    %104 = vector.load %arg10[%c1_133, %c2_134, %c0_135] : memref<10x10x8xf32, #tpu.memory_space<vmem>>, vector<8x8x8xf32>
    %105 = vector.shape_cast %104 : vector<8x8x8xf32> to vector<64x8xf32>
    %c1_136 = arith.constant 1 : index
    %c1_137 = arith.constant 1 : index
    %c0_138 = arith.constant 0 : index
    %106 = vector.load %arg10[%c1_136, %c1_137, %c0_138] : memref<10x10x8xf32, #tpu.memory_space<vmem>>, vector<8x8x8xf32>
    %107 = vector.shape_cast %106 : vector<8x8x8xf32> to vector<64x8xf32>
    %108 = tpu.concatenate %101, %103, %105, %107 in 1 : vector<64x8xf32>, vector<64x8xf32>, vector<64x8xf32>, vector<64x8xf32> -> vector<64x32xf32>
    %c3 = arith.constant 3 : index
    %c0_139 = arith.constant 0 : index
    %c0_140 = arith.constant 0 : index
    %109 = vector.load %arg6[%c3, %c0_139, %c0_140] : memref<4x32x4xf32, #tpu.memory_space<vmem>>, vector<1x32x4xf32>
    %110 = vector.shape_cast %109 : vector<1x32x4xf32> to vector<32x4xf32>
    %cst_141 = arith.constant dense<0.000000e+00> : vector<64x4xf32>
    %111 = tpu.matmul %108, %110, %cst_141 {dimension_numbers = #tpu.dot_dimension_numbers<[1], [0], [0], [1], [0, 0, 1, 1], [], []>} : vector<64x32xf32>, vector<32x4xf32>, vector<64x4xf32> -> vector<64x4xf32>
    %112 = tpu.transpose %111, [1, 0] : vector<64x4xf32> -> vector<4x64xf32>
    %113 = tpu.concatenate %73, %86, %99, %112 in 1 : vector<4x64xf32>, vector<4x64xf32>, vector<4x64xf32>, vector<4x64xf32> -> vector<4x256xf32>
    %c0_142 = arith.constant 0 : index
    %c0_143 = arith.constant 0 : index
    %114 = vector.load %arg7[%c0_142, %c0_143] : memref<256x1024xf32, #tpu.memory_space<vmem>>, vector<256x1024xf32>
    %cst_144 = arith.constant dense<0.000000e+00> : vector<4x1024xf32>
    %115 = tpu.matmul %113, %114, %cst_144 {dimension_numbers = #tpu.dot_dimension_numbers<[1], [0], [0], [1], [0, 0, 1, 1], [], []>} : vector<4x256xf32>, vector<256x1024xf32>, vector<4x1024xf32> -> vector<4x1024xf32>
    %c0_145 = arith.constant 0 : index
    %c0_146 = arith.constant 0 : index
    %116 = vector.load %arg8[%c0_145, %c0_146] : memref<4x1xf32, #tpu.memory_space<vmem>>, vector<4x1xf32>
    %117 = vector.broadcast %116 : vector<4x1xf32> to vector<4x1024xf32>
    %118 = arith.addf %115, %117 : vector<4x1024xf32>
    %c0_147 = arith.constant 0 : index
    %c0_148 = arith.constant 0 : index
    %c0_149 = arith.constant 0 : index
    %119 = vector.load %arg9[%c0_147, %c0_148, %c0_149] : memref<1x4x1024xf32, #tpu.memory_space<vmem>>, vector<1x4x1024xf32>
    %120 = vector.shape_cast %119 : vector<1x4x1024xf32> to vector<4x1024xf32>
    %121 = vector.shape_cast %118 : vector<4x1024xf32> to vector<1x4x1024xf32>
    tpu.vector_store %arg9[%c0_147, %c0_148, %c0_149], %121 {strides = array<i32>} : memref<1x4x1024xf32, #tpu.memory_space<vmem>>, vector<1x4x1024xf32>,
    return
  }
  func.func @transform_0(%arg0: i32) -> (i32, i32, i32, i32) {
    %c0_i32 = arith.constant 0 : i32
    %c0_i32_0 = arith.constant 0 : i32
    %c0_i32_1 = arith.constant 0 : i32
    %c0_i32_2 = arith.constant 0 : i32
    return %arg0, %c0_i32, %c0_i32_0, %c0_i32_1 : i32, i32, i32, i32
  }
  func.func @transform_1(%arg0: i32) -> (i32, i32) {
    %c0_i32 = arith.constant 0 : i32
    %c0_i32_0 = arith.constant 0 : i32
    %c0_i32_1 = arith.constant 0 : i32
    return %c0_i32, %c0_i32_0 : i32, i32
  }
  func.func @transform_2(%arg0: i32) -> (i32, i32) {
    %c0_i32 = arith.constant 0 : i32
    %c0_i32_0 = arith.constant 0 : i32
    %c0_i32_1 = arith.constant 0 : i32
    return %c0_i32, %c0_i32_0 : i32, i32
  }
  func.func @transform_3(%arg0: i32) -> (i32, i32) {
    %c0_i32 = arith.constant 0 : i32
    %c0_i32_0 = arith.constant 0 : i32
    %c0_i32_1 = arith.constant 0 : i32
    return %c0_i32, %c0_i32_0 : i32, i32
  }
  func.func @transform_4(%arg0: i32) -> (i32, i32) {
    %c0_i32 = arith.constant 0 : i32
    %c0_i32_0 = arith.constant 0 : i32
    %c0_i32_1 = arith.constant 0 : i32
    return %c0_i32, %c0_i32_0 : i32, i32
  }
  func.func @transform_5(%arg0: i32) -> (i32, i32, i32) {
    %c0_i32 = arith.constant 0 : i32
    %c0_i32_0 = arith.constant 0 : i32
    %c0_i32_1 = arith.constant 0 : i32
    %c0_i32_2 = arith.constant 0 : i32
    return %c0_i32, %c0_i32_0, %c0_i32_1 : i32, i32, i32
  }
  func.func @transform_6(%arg0: i32) -> (i32, i32) {
    %c0_i32 = arith.constant 0 : i32
    %c0_i32_0 = arith.constant 0 : i32
    %c0_i32_1 = arith.constant 0 : i32
    return %c0_i32, %c0_i32_0 : i32, i32
  }
  func.func @transform_7(%arg0: i32) -> (i32, i32) {
    %c0_i32 = arith.constant 0 : i32
    %c0_i32_0 = arith.constant 0 : i32
    %c0_i32_1 = arith.constant 0 : i32
    return %c0_i32, %c0_i32_0 : i32, i32
  }
  func.func @transform_8(%arg0: i32) -> (i32, i32, i32) {
    %c0_i32 = arith.constant 0 : i32
    %c0_i32_0 = arith.constant 0 : i32
    %c0_i32_1 = arith.constant 0 : i32
    return %arg0, %c0_i32, %c0_i32_0 : i32, i32, i32
  }
}

</mosaic_0001>

<llo_original>
// kernel: tpu_custom_call.1
$region0: #{tpu_custom_call.1}
  #allocation0 [shape = 'u32[]', space=smem, size = 0x4, offset = 0x4, fixed_abs, tag = 'smem constant byte address 0x4 - core index']
  #allocation1 [shape = 'u32[144,128]{1,0:T(1,128)}', space=vmem, size = 0x12000, scoped, tag = 'internal scratch']
  #allocation2 [shape = 'f32[10,10,8]{2,1,0:T(8,128)}', space=vmem, size = 0x14000, scoped, tag = 'scratch operand']
  %s0 = inlined_call_operand.vmem [shape: f32[2,8,8,8], index: 0, kind: input, shape index: {}]
  %s1 = inlined_call_operand.vmem [shape: f32[72,8], index: 1, kind: input, shape index: {}]
  %s2 = inlined_call_operand.vmem [shape: f32[1,8], index: 2, kind: input, shape index: {}]
  %s3 = inlined_call_operand.vmem [shape: f32[72,8], index: 3, kind: input, shape index: {}]
  %s4 = inlined_call_operand.vmem [shape: f32[1,8], index: 4, kind: input, shape index: {}]
  %s5 = inlined_call_operand.vmem [shape: f32[4,32,4], index: 5, kind: input, shape index: {}]
  %s6 = inlined_call_operand.hbm [shape: f32[256,1024], index: 6, kind: input, shape index: {}]
  %s7 = inlined_call_operand.vmem [shape: f32[4,1], index: 7, kind: input, shape index: {}]
  %s8 = inlined_call_operand.hbm [shape: f32[2,4,1024], index: 8, kind: output, shape index: {}]
  %s9 = sld [smem:[#allocation0]]
  $region69: #{tpu_custom_call.1} parent=0
    _
  %s11 = ssub.s32 1, %s9
  %s12 = scalar_select 0, %s11, %s9
  $region1: #{tpu_custom_call.1} parent=0
    #allocation3 [shape = 'u8[1048576]{0}', space=vmem, size = 0x100000, scoped, tag = 'input window, operand 6, single buffered']
    #allocation4 [shape = 's32[2]{0}', space=sflag, size = 0x8, scoped, tag = 'scoped memory for tpu_custom_call.1']
    #allocation5 [shape = 's32[2]{0}', space=sflag, size = 0x8, scoped, tag = 'scoped memory for tpu_custom_call.1']
    #allocation6 [shape = 'u8[32768]{0}', space=vmem, size = 0x8000, scoped, tag = 'output window, operand 0']
    %13 = vsyncpa [#allocation4], 0
    %14 = vsyncpa [#allocation5], 0
    %s15 = scalar_lea.sflag [#allocation5], 1
    %16 = vsyncpa %s15, 0
    loop: start=0, step=1, limit=4
    $region2: #{tpu_custom_call.1} parent=1 // loop_pre_header
      _
    $region3: #{tpu_custom_call.1} parent=1 // loop_header
      %s18 = sphi 0, %s22
      %p19 = scmp.ge.s32.totalorder %s18, 4
      %s28 = sphi 0, %s30
      %s31 = sphi 0, %s28
      %s32 = sphi 0, %s31
      %s48 = sphi 0, %s32
      %s52 = sphi 0, %s52
      %s54 = sphi 0, %s52
      %s55 = sphi 0, %s54
      %s69 = sphi 0, %s55
      %s73 = sphi 0, %s73
      %s75 = sphi 0, %s73
      %s76 = sphi 0, %s75
      %s90 = sphi 0, %s76
      %s94 = sphi 0, %s94
      %s96 = sphi 0, %s94
      %s97 = sphi 0, %s96
      %s111 = sphi 0, %s97
      %s115 = sphi 0, %s115
      %s117 = sphi 0, %s115
      %s118 = sphi 0, %s117
      %s132 = sphi 0, %s118
      %s136 = sphi 0, %s136
      %s138 = sphi 0, %s136
      %s139 = sphi 0, %s138
      %s153 = sphi 0, %s139
      %s157 = sphi 0, %s157
      %s159 = sphi 0, %s157
      %s160 = sphi 0, %s159
      %s174 = sphi 0, %s160
      %s178 = sphi 0, %s178
      %s180 = sphi 0, %s178
      %s181 = sphi 0, %s180
      %s195 = sphi 0, %s181
      %s201 = sphi 0, %s203
      %s204 = sphi 0, %s201
      %s205 = sphi 0, %s204
      %s221 = sphi 0, %s205
    $region4: #{tpu_custom_call.1} parent=1 // loop_header_branch
      %21 = sbr.rel (%p19) target = $region8
    $region5: #{tpu_custom_call.1} parent=1 // loop_body
      %s23 = ssub.s32 %s18, 1
      %s24 = ssub.s32 %s18, 2
      %s25 = sadd.s32 %s18, 1
      %s26 = ssub.s32 %s18, %s25
      %p27 = scmp.eq.s32.totalorder %s26, 0
      %s29 = sadd.s32 %s28, 1
      %s30 = scalar_select %p27, %s28, %s29
      %p33 = pneg %p27
      %p34 = scmp.eq.s32.totalorder %s18, 1
      %p35 = por %p33, %p34
      %p36 = scmp.ne.s32.totalorder %s28, %s31
      %p37 = scmp.eq.s32.totalorder %s18, 0
      %p38 = por %p36, %p37
      %p39 = scmp.ne.s32.totalorder %s28, %s31
      %p40 = scmp.eq.s32.totalorder %s23, 1
      %p41 = por %p39, %p40
      %p42 = scmp.ne.s32.totalorder %s31, %s32
      %p43 = scmp.eq.s32.totalorder %s23, 0
      %p44 = por %p42, %p43
      %p45 = scmp.ne.s32.totalorder %s31, %s32
      %p46 = scmp.eq.s32.totalorder %s24, 1
      %p47 = por %p45, %p46
      %p49 = scmp.ne.s32.totalorder %s32, %s48
      %p50 = scmp.eq.s32.totalorder %s24, 0
      %p51 = por %p49, %p50
      %s53 = sadd.s32 %s52, 1
      %p56 = scmp.eq.s32.totalorder %s18, 1
      %p57 = scmp.ne.s32.totalorder %s52, %s54
      %p58 = scmp.eq.s32.totalorder %s18, 0
      %p59 = por %p57, %p58
      %p60 = scmp.ne.s32.totalorder %s52, %s54
      %p61 = scmp.eq.s32.totalorder %s23, 1
      %p62 = por %p60, %p61
      %p63 = scmp.ne.s32.totalorder %s54, %s55
      %p64 = scmp.eq.s32.totalorder %s23, 0
      %p65 = por %p63, %p64
      %p66 = scmp.ne.s32.totalorder %s54, %s55
      %p67 = scmp.eq.s32.totalorder %s24, 1
      %p68 = por %p66, %p67
      %p70 = scmp.ne.s32.totalorder %s55, %s69
      %p71 = scmp.eq.s32.totalorder %s24, 0
      %p72 = por %p70, %p71
      %s74 = sadd.s32 %s73, 1
      %p77 = scmp.eq.s32.totalorder %s18, 1
      %p78 = scmp.ne.s32.totalorder %s73, %s75
      %p79 = scmp.eq.s32.totalorder %s18, 0
      %p80 = por %p78, %p79
      %p81 = scmp.ne.s32.totalorder %s73, %s75
      %p82 = scmp.eq.s32.totalorder %s23, 1
      %p83 = por %p81, %p82
      %p84 = scmp.ne.s32.totalorder %s75, %s76
      %p85 = scmp.eq.s32.totalorder %s23, 0
      %p86 = por %p84, %p85
      %p87 = scmp.ne.s32.totalorder %s75, %s76
      %p88 = scmp.eq.s32.totalorder %s24, 1
      %p89 = por %p87, %p88
      %p91 = scmp.ne.s32.totalorder %s76, %s90
      %p92 = scmp.eq.s32.totalorder %s24, 0
      %p93 = por %p91, %p92
      %s95 = sadd.s32 %s94, 1
      %p98 = scmp.eq.s32.totalorder %s18, 1
      %p99 = scmp.ne.s32.totalorder %s94, %s96
      %p100 = scmp.eq.s32.totalorder %s18, 0
      %p101 = por %p99, %p100
      %p102 = scmp.ne.s32.totalorder %s94, %s96
      %p103 = scmp.eq.s32.totalorder %s23, 1
      %p104 = por %p102, %p103
      %p105 = scmp.ne.s32.totalorder %s96, %s97
      %p106 = scmp.eq.s32.totalorder %s23, 0
      %p107 = por %p105, %p106
      %p108 = scmp.ne.s32.totalorder %s96, %s97
      %p109 = scmp.eq.s32.totalorder %s24, 1
      %p110 = por %p108, %p109
      %p112 = scmp.ne.s32.totalorder %s97, %s111
      %p113 = scmp.eq.s32.totalorder %s24, 0
      %p114 = por %p112, %p113
      %s116 = sadd.s32 %s115, 1
      %p119 = scmp.eq.s32.totalorder %s18, 1
      %p120 = scmp.ne.s32.totalorder %s115, %s117
      %p121 = scmp.eq.s32.totalorder %s18, 0
      %p122 = por %p120, %p121
      %p123 = scmp.ne.s32.totalorder %s115, %s117
      %p124 = scmp.eq.s32.totalorder %s23, 1
      %p125 = por %p123, %p124
      %p126 = scmp.ne.s32.totalorder %s117, %s118
      %p127 = scmp.eq.s32.totalorder %s23, 0
      %p128 = por %p126, %p127
      %p129 = scmp.ne.s32.totalorder %s117, %s118
      %p130 = scmp.eq.s32.totalorder %s24, 1
      %p131 = por %p129, %p130
      %p133 = scmp.ne.s32.totalorder %s118, %s132
      %p134 = scmp.eq.s32.totalorder %s24, 0
      %p135 = por %p133, %p134
      %s137 = sadd.s32 %s136, 1
      %p140 = scmp.eq.s32.totalorder %s18, 1
      %p141 = scmp.ne.s32.totalorder %s136, %s138
      %p142 = scmp.eq.s32.totalorder %s18, 0
      %p143 = por %p141, %p142
      %p144 = scmp.ne.s32.totalorder %s136, %s138
      %p145 = scmp.eq.s32.totalorder %s23, 1
      %p146 = por %p144, %p145
      %p147 = scmp.ne.s32.totalorder %s138, %s139
      %p148 = scmp.eq.s32.totalorder %s23, 0
      %p149 = por %p147, %p148
      %p150 = scmp.ne.s32.totalorder %s138, %s139
      %p151 = scmp.eq.s32.totalorder %s24, 1
      %p152 = por %p150, %p151
      %p154 = scmp.ne.s32.totalorder %s139, %s153
      %p155 = scmp.eq.s32.totalorder %s24, 0
      %p156 = por %p154, %p155
      %s158 = sadd.s32 %s157, 1
      %p161 = scmp.eq.s32.totalorder %s18, 1
      %p162 = scmp.ne.s32.totalorder %s157, %s159
      %p163 = scmp.eq.s32.totalorder %s18, 0
      %p164 = por %p162, %p163
      %p165 = scmp.ne.s32.totalorder %s157, %s159
      %p166 = scmp.eq.s32.totalorder %s23, 1
      %p167 = por %p165, %p166
      %p168 = scmp.ne.s32.totalorder %s159, %s160
      %p169 = scmp.eq.s32.totalorder %s23, 0
      %p170 = por %p168, %p169
      %p171 = scmp.ne.s32.totalorder %s159, %s160
      %p172 = scmp.eq.s32.totalorder %s24, 1
      %p173 = por %p171, %p172
      %p175 = scmp.ne.s32.totalorder %s160, %s174
      %p176 = scmp.eq.s32.totalorder %s24, 0
      %p177 = por %p175, %p176
      %s179 = sadd.s32 %s178, 1
      %p182 = scmp.eq.s32.totalorder %s18, 1
      %p183 = scmp.ne.s32.totalorder %s178, %s180
      %p184 = scmp.eq.s32.totalorder %s18, 0
      %p185 = por %p183, %p184
      %p186 = scmp.ne.s32.totalorder %s178, %s180
      %p187 = scmp.eq.s32.totalorder %s23, 1
      %p188 = por %p186, %p187
      %p189 = scmp.ne.s32.totalorder %s180, %s181
      %p190 = scmp.eq.s32.totalorder %s23, 0
      %p191 = por %p189, %p190
      %p192 = scmp.ne.s32.totalorder %s180, %s181
      %p193 = scmp.eq.s32.totalorder %s24, 1
      %p194 = por %p192, %p193
      %p196 = scmp.ne.s32.totalorder %s181, %s195
      %p197 = scmp.eq.s32.totalorder %s24, 0
      %p198 = por %p196, %p197
      %s199 = ssub.s32 %s18, %s25
      %p200 = scmp.eq.s32.totalorder %s199, 0
      %s202 = sadd.s32 %s201, 1
      %s203 = scalar_select %p200, %s201, %s202
      %p206 = pneg %p200
      %p207 = scmp.eq.s32.totalorder %s18, 1
      %p208 = por %p206, %p207
      %p209 = scmp.ne.s32.totalorder %s201, %s204
      %p210 = scmp.eq.s32.totalorder %s18, 0
      %p211 = por %p209, %p210
      %p212 = scmp.ne.s32.totalorder %s201, %s204
      %p213 = scmp.eq.s32.totalorder %s23, 1
      %p214 = por %p212, %p213
      %p215 = scmp.ne.s32.totalorder %s204, %s205
      %p216 = scmp.eq.s32.totalorder %s23, 0
      %p217 = por %p215, %p216
      %p218 = scmp.ne.s32.totalorder %s204, %s205
      %p219 = scmp.eq.s32.totalorder %s24, 1
      %p220 = por %p218, %p219
      %p222 = scmp.ne.s32.totalorder %s205, %s221
      %p223 = scmp.eq.s32.totalorder %s24, 0
      %p224 = por %p222, %p223
      %p225 = scmp.le.s32.totalorder 1, %s18
      %p226 = scmp.lt.s32.totalorder %s18, 3
      %p227 = pnand %p225, %p226
      %p228 = pneg %p227
      // Predicated region
      $region9: #{tpu_custom_call.1} parent=5 // pred_check
        _
      $region10: #{tpu_custom_call.1} parent=5 // pred_check_branch
        %230 = sbr.rel (%p227) target = $region12
      $region11: #{tpu_custom_call.1} parent=5 // pred_region
        %s231 = ssub.s32 %s18, 1
        // Predicated region
        $region13: #{tpu_custom_call.1} parent=11 // pred_check
          %p232 = pneg %p65
        $region14: #{tpu_custom_call.1} parent=11 // pred_check_branch
          %234 = sbr.rel (%p232) target = $region16
        $region15: #{tpu_custom_call.1} parent=11 // pred_region
          _
        $region16: #{tpu_custom_call.1} parent=11 // pred_fallthru
          _
        // Predicated region
        $region17: #{tpu_custom_call.1} parent=11 // pred_check
          %p235 = pneg %p86
        $region18: #{tpu_custom_call.1} parent=11 // pred_check_branch
          %237 = sbr.rel (%p235) target = $region20
        $region19: #{tpu_custom_call.1} parent=11 // pred_region
          _
        $region20: #{tpu_custom_call.1} parent=11 // pred_fallthru
          _
        // Predicated region
        $region21: #{tpu_custom_call.1} parent=11 // pred_check
          %p238 = pneg %p107
        $region22: #{tpu_custom_call.1} parent=11 // pred_check_branch
          %240 = sbr.rel (%p238) target = $region24
        $region23: #{tpu_custom_call.1} parent=11 // pred_region
          _
        $region24: #{tpu_custom_call.1} parent=11 // pred_fallthru
          _
        // Predicated region
        $region25: #{tpu_custom_call.1} parent=11 // pred_check
          %p241 = pneg %p128
        $region26: #{tpu_custom_call.1} parent=11 // pred_check_branch
          %243 = sbr.rel (%p241) target = $region28
        $region27: #{tpu_custom_call.1} parent=11 // pred_region
          _
        $region28: #{tpu_custom_call.1} parent=11 // pred_fallthru
          _
        // Predicated region
        $region29: #{tpu_custom_call.1} parent=11 // pred_check
          %p244 = pneg %p149
        $region30: #{tpu_custom_call.1} parent=11 // pred_check_branch
          %246 = sbr.rel (%p244) target = $region32
        $region31: #{tpu_custom_call.1} parent=11 // pred_region
          _
        $region32: #{tpu_custom_call.1} parent=11 // pred_fallthru
          _
        // Predicated region
        $region33: #{tpu_custom_call.1} parent=11 // pred_check
          %p247 = pneg %p170
        $region34: #{tpu_custom_call.1} parent=11 // pred_check_branch
          %249 = sbr.rel (%p247) target = $region36
        $region35: #{tpu_custom_call.1} parent=11 // pred_region
          %s251 = ssub.s32 32768, 32768
          %252 = vsyncadd [#allocation4], %s251
          %s253 = sshll.u32 [#allocation3], 4
          %s254 = int_to_ptr.vmem [resolvable:$true] %s253
          %259 = dma.hbm_to_vmem [thread:$0]  %s6, 32768, %s254, [#allocation4], 1024, 1024, 64
        $region36: #{tpu_custom_call.1} parent=11 // pred_fallthru
          _
        // Predicated region
        $region37: #{tpu_custom_call.1} parent=11 // pred_check
          %p260 = pneg %p191
        $region38: #{tpu_custom_call.1} parent=11 // pred_check_branch
          %262 = sbr.rel (%p260) target = $region40
        $region39: #{tpu_custom_call.1} parent=11 // pred_region
          _
        $region40: #{tpu_custom_call.1} parent=11 // pred_fallthru
          _
      $region12: #{tpu_custom_call.1} parent=5 // pred_fallthru
        _
      %p263 = scmp.lt.s32.totalorder %s18, 2
      // Predicated region
      $region41: #{tpu_custom_call.1} parent=5 // pred_check
        %p264 = pneg %p263
      $region42: #{tpu_custom_call.1} parent=5 // pred_check_branch
        %266 = sbr.rel (%p264) target = $region44
      $region43: #{tpu_custom_call.1} parent=5 // pred_region
        // Predicated region
        $region45: #{tpu_custom_call.1} parent=43 // pred_check
          %p267 = pneg %p38
        $region46: #{tpu_custom_call.1} parent=43 // pred_check_branch
          %269 = sbr.rel (%p267) target = $region48
        $region47: #{tpu_custom_call.1} parent=43 // pred_region
          %p270 = scmp.lt.s32.totalorder %s18, 1
          %s271 = scalar_select %p270, %s18, 1
          %s272 = smul.addr %s271, 8
          %s273 = smul.addr %s272, 8
          %s274 = scalar_lea.vmem %s0, %s273
        $region48: #{tpu_custom_call.1} parent=43 // pred_fallthru
          _
      $region44: #{tpu_custom_call.1} parent=5 // pred_fallthru
        _
      %p275 = scmp.le.s32.totalorder 1, %s18
      %p276 = scmp.lt.s32.totalorder %s18, 3
      %p277 = pnand %p275, %p276
      %p278 = pneg %p277
      // Predicated region
      $region49: #{tpu_custom_call.1} parent=5 // pred_check
        _
      $region50: #{tpu_custom_call.1} parent=5 // pred_check_branch
        %280 = sbr.rel (%p277) target = $region52
      $region51: #{tpu_custom_call.1} parent=5 // pred_region
        %s281 = ssub.s32 %s18, 1
        // Predicated region
        $region53: #{tpu_custom_call.1} parent=51 // pred_check
          %p282 = pneg %p170
        $region54: #{tpu_custom_call.1} parent=51 // pred_check_branch
          %284 = sbr.rel (%p282) target = $region56
        $region55: #{tpu_custom_call.1} parent=51 // pred_region
          %285 = dma.done [#allocation4], 32768
        $region56: #{tpu_custom_call.1} parent=51 // pred_fallthru
          _
        %p286 = scmp.lt.s32.totalorder %s23, 1
        %s287 = scalar_select %p286, %s23, 1
        %s288 = smul.addr %s287, 8
        %s289 = smul.addr %s288, 8
        %s290 = scalar_lea.vmem %s0, %s289
        %p291 = pneg %p44
        %p292 = pneg %p41
        %p293 = pneg %p65
        %p294 = pneg %p62
        %p295 = pneg %p86
        %p296 = pneg %p83
        %p297 = pneg %p107
        %p298 = pneg %p104
        %p299 = pneg %p128
        %p300 = pneg %p125
        %p301 = pneg %p149
        %p302 = pneg %p146
        %p303 = pneg %p170
        %p304 = pneg %p167
        %p305 = pneg %p191
        %p306 = pneg %p188
        %p307 = pneg %p217
        %p308 = pneg %p214
        %s309 = sand.u32 %s204, 1
        %s310 = scalar_lea.sflag [#allocation5], %s309
        %s311 = sand.u32 %s204, 1
        %s312 = smul.addr %s311, 32
        %s313 = scalar_lea.vmem [#allocation6], %s312
        %p314 = scmp.lt.s32.totalorder %s23, 1
        %s315 = scalar_select %p314, %s23, 1
        %s316 = smul.addr %s315, 8
        %s317 = smul.addr %s316, 8
        %s318 = scalar_lea.vmem %s0, %s317
        %vm319 = vcmask 64512
        %320 = vst.msk [vmem:[#allocation2] sm:$0xff] %vm319, 0.0
        %vm321 = vcmask 58368
        %322 = vst.msk [vmem:[#allocation2 + $0x8] sm:$0x3] %vm321, 0.0
        %323 = vst.msk [vmem:[#allocation2 + $0x10] sm:$0xff] %vm319, 0.0
        %324 = vst.msk [vmem:[#allocation2 + $0x18] sm:$0x3] %vm321, 0.0
        %325 = vst.msk [vmem:[#allocation2 + $0x20] sm:$0xff] %vm319, 0.0
        %326 = vst.msk [vmem:[#allocation2 + $0x28] sm:$0x3] %vm321, 0.0
        %327 = vst.msk [vmem:[#allocation2 + $0x30] sm:$0xff] %vm319, 0.0
        %328 = vst.msk [vmem:[#allocation2 + $0x38] sm:$0x3] %vm321, 0.0
        %329 = vst.msk [vmem:[#allocation2 + $0x40] sm:$0xff] %vm319, 0.0
        %330 = vst.msk [vmem:[#allocation2 + $0x48] sm:$0x3] %vm321, 0.0
        %331 = vst.msk [vmem:[#allocation2 + $0x50] sm:$0xff] %vm319, 0.0
        %332 = vst.msk [vmem:[#allocation2 + $0x58] sm:$0x3] %vm321, 0.0
        %333 = vst.msk [vmem:[#allocation2 + $0x60] sm:$0xff] %vm319, 0.0
        %334 = vst.msk [vmem:[#allocation2 + $0x68] sm:$0x3] %vm321, 0.0
        %335 = vst.msk [vmem:[#allocation2 + $0x70] sm:$0xff] %vm319, 0.0
        %336 = vst.msk [vmem:[#allocation2 + $0x78] sm:$0x3] %vm321, 0.0
        %337 = vst.msk [vmem:[#allocation2 + $0x80] sm:$0xff] %vm319, 0.0
        %338 = vst.msk [vmem:[#allocation2 + $0x88] sm:$0x3] %vm321, 0.0
        %339 = vst.msk [vmem:[#allocation2 + $0x90] sm:$0xff] %vm319, 0.0
        %340 = vst.msk [vmem:[#allocation2 + $0x98] sm:$0x3] %vm321, 0.0
        %v341 = vld [vmem:[%s318] sm:$0xff]
        %v342 = vld [vmem:[%s318 + $0x8] sm:$0xff]
        %v343 = vld [vmem:[%s318 + $0x10] sm:$0xff]
        %v344 = vld [vmem:[%s318 + $0x18] sm:$0xff]
        %v345 = vld [vmem:[%s318 + $0x20] sm:$0xff]
        %v346 = vld [vmem:[%s318 + $0x28] sm:$0xff]
        %v347 = vld [vmem:[%s318 + $0x30] sm:$0xff]
        %v348 = vld [vmem:[%s318 + $0x38] sm:$0xff]
        %s349 = scalar_lea.vmem [#allocation2], 16
        %350 = vst.msk [vmem:[%s349 + $0x1] sm:$0xff] %vm319, %v341
        %351 = vst.msk [vmem:[%s349 + $0x11] sm:$0xff] %vm319, %v342
        %352 = vst.msk [vmem:[%s349 + $0x21] sm:$0xff] %vm319, %v343
        %353 = vst.msk [vmem:[%s349 + $0x31] sm:$0xff] %vm319, %v344
        %354 = vst.msk [vmem:[%s349 + $0x41] sm:$0xff] %vm319, %v345
        %355 = vst.msk [vmem:[%s349 + $0x51] sm:$0xff] %vm319, %v346
        %356 = vst.msk [vmem:[%s349 + $0x61] sm:$0xff] %vm319, %v347
        %357 = vst.msk [vmem:[%s349 + $0x71] sm:$0xff] %vm319, %v348
        %v358 = vld [vmem:[#allocation2] sm:$0xff]
        %v359 = vld [vmem:[#allocation2 + $0x10] sm:$0xff]
        %v360 = vld [vmem:[#allocation2 + $0x20] sm:$0xff]
        %v361 = vld [vmem:[#allocation2 + $0x30] sm:$0xff]
        %v362 = vld [vmem:[#allocation2 + $0x40] sm:$0xff]
        %v363 = vld [vmem:[#allocation2 + $0x50] sm:$0xff]
        %v364 = vld [vmem:[#allocation2 + $0x60] sm:$0xff]
        %v365 = vld [vmem:[#allocation2 + $0x70] sm:$0xff]
        %v366 = vld [vmem:[#allocation2 + $0x1] sm:$0xff]
        %v367 = vld [vmem:[#allocation2 + $0x11] sm:$0xff]
        %v368 = vld [vmem:[#allocation2 + $0x21] sm:$0xff]
        %v369 = vld [vmem:[#allocation2 + $0x31] sm:$0xff]
        %v370 = vld [vmem:[#allocation2 + $0x41] sm:$0xff]
        %v371 = vld [vmem:[#allocation2 + $0x51] sm:$0xff]
        %v372 = vld [vmem:[#allocation2 + $0x61] sm:$0xff]
        %v373 = vld [vmem:[#allocation2 + $0x71] sm:$0xff]
        %v374 = vld [vmem:[#allocation2 + $0x2] sm:$0xff]
        %v375 = vld [vmem:[#allocation2 + $0x12] sm:$0xff]
        %v376 = vld [vmem:[#allocation2 + $0x22] sm:$0xff]
        %v377 = vld [vmem:[#allocation2 + $0x32] sm:$0xff]
        %v378 = vld [vmem:[#allocation2 + $0x42] sm:$0xff]
        %v379 = vld [vmem:[#allocation2 + $0x52] sm:$0xff]
        %v380 = vld [vmem:[#allocation2 + $0x62] sm:$0xff]
        %v381 = vld [vmem:[#allocation2 + $0x72] sm:$0xff]
        %v382 = vld [vmem:[%s349] sm:$0xff]
        %v383 = vld [vmem:[%s349 + $0x10] sm:$0xff]
        %v384 = vld [vmem:[%s349 + $0x20] sm:$0xff]
        %v385 = vld [vmem:[%s349 + $0x30] sm:$0xff]
        %v386 = vld [vmem:[%s349 + $0x40] sm:$0xff]
        %v387 = vld [vmem:[%s349 + $0x50] sm:$0xff]
        %v388 = vld [vmem:[%s349 + $0x60] sm:$0xff]
        %v389 = vld [vmem:[%s349 + $0x70] sm:$0xff]
        %v390 = vld [vmem:[%s349 + $0x1] sm:$0xff]
        %v391 = vld [vmem:[%s349 + $0x11] sm:$0xff]
        %v392 = vld [vmem:[%s349 + $0x21] sm:$0xff]
        %v393 = vld [vmem:[%s349 + $0x31] sm:$0xff]
        %v394 = vld [vmem:[%s349 + $0x41] sm:$0xff]
        %v395 = vld [vmem:[%s349 + $0x51] sm:$0xff]
        %v396 = vld [vmem:[%s349 + $0x61] sm:$0xff]
        %v397 = vld [vmem:[%s349 + $0x71] sm:$0xff]
        %v398 = vld [vmem:[%s349 + $0x2] sm:$0xff]
        %v399 = vld [vmem:[%s349 + $0x12] sm:$0xff]
        %v400 = vld [vmem:[%s349 + $0x22] sm:$0xff]
        %v401 = vld [vmem:[%s349 + $0x32] sm:$0xff]
        %v402 = vld [vmem:[%s349 + $0x42] sm:$0xff]
        %v403 = vld [vmem:[%s349 + $0x52] sm:$0xff]
        %v404 = vld [vmem:[%s349 + $0x62] sm:$0xff]
        %v405 = vld [vmem:[%s349 + $0x72] sm:$0xff]
        %s406 = scalar_lea.vmem [#allocation2], 32
        %v407 = vld [vmem:[%s406] sm:$0xff]
        %v408 = vld [vmem:[%s406 + $0x10] sm:$0xff]
        %v409 = vld [vmem:[%s406 + $0x20] sm:$0xff]
        %v410 = vld [vmem:[%s406 + $0x30] sm:$0xff]
        %v411 = vld [vmem:[%s406 + $0x40] sm:$0xff]
        %v412 = vld [vmem:[%s406 + $0x50] sm:$0xff]
        %v413 = vld [vmem:[%s406 + $0x60] sm:$0xff]
        %v414 = vld [vmem:[%s406 + $0x70] sm:$0xff]
        %v415 = vld [vmem:[%s406 + $0x1] sm:$0xff]
        %v416 = vld [vmem:[%s406 + $0x11] sm:$0xff]
        %v417 = vld [vmem:[%s406 + $0x21] sm:$0xff]
        %v418 = vld [vmem:[%s406 + $0x31] sm:$0xff]
        %v419 = vld [vmem:[%s406 + $0x41] sm:$0xff]
        %v420 = vld [vmem:[%s406 + $0x51] sm:$0xff]
        %v421 = vld [vmem:[%s406 + $0x61] sm:$0xff]
        %v422 = vld [vmem:[%s406 + $0x71] sm:$0xff]
        %v423 = vld [vmem:[%s406 + $0x2] sm:$0xff]
        %v424 = vld [vmem:[%s406 + $0x12] sm:$0xff]
        %v425 = vld [vmem:[%s406 + $0x22] sm:$0xff]
        %v426 = vld [vmem:[%s406 + $0x32] sm:$0xff]
        %v427 = vld [vmem:[%s406 + $0x42] sm:$0xff]
        %v428 = vld [vmem:[%s406 + $0x52] sm:$0xff]
        %v429 = vld [vmem:[%s406 + $0x62] sm:$0xff]
        %v430 = vld [vmem:[%s406 + $0x72] sm:$0xff]
        %439 = vrot.lane.b32.xlu0 %v366, 8
        %v440 = vpop.permute.xlu0 %439
        %441 = vrot.lane.b32.xlu0 %v367, 8
        %v442 = vpop.permute.xlu0 %441
        %443 = vrot.lane.b32.xlu0 %v368, 8
        %v444 = vpop.permute.xlu0 %443
        %445 = vrot.lane.b32.xlu0 %v369, 8
        %v446 = vpop.permute.xlu0 %445
        %447 = vrot.lane.b32.xlu0 %v370, 8
        %v448 = vpop.permute.xlu0 %447
        %449 = vrot.lane.b32.xlu0 %v371, 8
        %v450 = vpop.permute.xlu0 %449
        %451 = vrot.lane.b32.xlu0 %v372, 8
        %v452 = vpop.permute.xlu0 %451
        %453 = vrot.lane.b32.xlu0 %v373, 8
        %v454 = vpop.permute.xlu0 %453
        %471 = vrot.lane.b32.xlu0 %v374, 16
        %v472 = vpop.permute.xlu0 %471
        %473 = vrot.lane.b32.xlu0 %v375, 16
        %v474 = vpop.permute.xlu0 %473
        %475 = vrot.lane.b32.xlu0 %v376, 16
        %v476 = vpop.permute.xlu0 %475
        %477 = vrot.lane.b32.xlu0 %v377, 16
        %v478 = vpop.permute.xlu0 %477
        %479 = vrot.lane.b32.xlu0 %v378, 16
        %v480 = vpop.permute.xlu0 %479
        %481 = vrot.lane.b32.xlu0 %v379, 16
        %v482 = vpop.permute.xlu0 %481
        %483 = vrot.lane.b32.xlu0 %v380, 16
        %v484 = vpop.permute.xlu0 %483
        %485 = vrot.lane.b32.xlu0 %v381, 16
        %v486 = vpop.permute.xlu0 %485
        %503 = vrot.lane.b32.xlu0 %v382, 24
        %v504 = vpop.permute.xlu0 %503
        %505 = vrot.lane.b32.xlu0 %v383, 24
        %v506 = vpop.permute.xlu0 %505
        %507 = vrot.lane.b32.xlu0 %v384, 24
        %v508 = vpop.permute.xlu0 %507
        %509 = vrot.lane.b32.xlu0 %v385, 24
        %v510 = vpop.permute.xlu0 %509
        %511 = vrot.lane.b32.xlu0 %v386, 24
        %v512 = vpop.permute.xlu0 %511
        %513 = vrot.lane.b32.xlu0 %v387, 24
        %v514 = vpop.permute.xlu0 %513
        %515 = vrot.lane.b32.xlu0 %v388, 24
        %v516 = vpop.permute.xlu0 %515
        %517 = vrot.lane.b32.xlu0 %v389, 24
        %v518 = vpop.permute.xlu0 %517
        %535 = vrot.lane.b32.xlu0 %v390, 32
        %v536 = vpop.permute.xlu0 %535
        %537 = vrot.lane.b32.xlu0 %v391, 32
        %v538 = vpop.permute.xlu0 %537
        %539 = vrot.lane.b32.xlu0 %v392, 32
        %v540 = vpop.permute.xlu0 %539
        %541 = vrot.lane.b32.xlu0 %v393, 32
        %v542 = vpop.permute.xlu0 %541
        %543 = vrot.lane.b32.xlu0 %v394, 32
        %v544 = vpop.permute.xlu0 %543
        %545 = vrot.lane.b32.xlu0 %v395, 32
        %v546 = vpop.permute.xlu0 %545
        %547 = vrot.lane.b32.xlu0 %v396, 32
        %v548 = vpop.permute.xlu0 %547
        %549 = vrot.lane.b32.xlu0 %v397, 32
        %v550 = vpop.permute.xlu0 %549
        %567 = vrot.lane.b32.xlu0 %v398, 40
        %v568 = vpop.permute.xlu0 %567
        %569 = vrot.lane.b32.xlu0 %v399, 40
        %v570 = vpop.permute.xlu0 %569
        %571 = vrot.lane.b32.xlu0 %v400, 40
        %v572 = vpop.permute.xlu0 %571
        %573 = vrot.lane.b32.xlu0 %v401, 40
        %v574 = vpop.permute.xlu0 %573
        %575 = vrot.lane.b32.xlu0 %v402, 40
        %v576 = vpop.permute.xlu0 %575
        %577 = vrot.lane.b32.xlu0 %v403, 40
        %v578 = vpop.permute.xlu0 %577
        %579 = vrot.lane.b32.xlu0 %v404, 40
        %v580 = vpop.permute.xlu0 %579
        %581 = vrot.lane.b32.xlu0 %v405, 40
        %v582 = vpop.permute.xlu0 %581
        %599 = vrot.lane.b32.xlu0 %v407, 48
        %v600 = vpop.permute.xlu0 %599
        %601 = vrot.lane.b32.xlu0 %v408, 48
        %v602 = vpop.permute.xlu0 %601
        %603 = vrot.lane.b32.xlu0 %v409, 48
        %v604 = vpop.permute.xlu0 %603
        %605 = vrot.lane.b32.xlu0 %v410, 48
        %v606 = vpop.permute.xlu0 %605
        %607 = vrot.lane.b32.xlu0 %v411, 48
        %v608 = vpop.permute.xlu0 %607
        %609 = vrot.lane.b32.xlu0 %v412, 48
        %v610 = vpop.permute.xlu0 %609
        %611 = vrot.lane.b32.xlu0 %v413, 48
        %v612 = vpop.permute.xlu0 %611
        %613 = vrot.lane.b32.xlu0 %v414, 48
        %v614 = vpop.permute.xlu0 %613
        %631 = vrot.lane.b32.xlu0 %v415, 56
        %v632 = vpop.permute.xlu0 %631
        %633 = vrot.lane.b32.xlu0 %v416, 56
        %v634 = vpop.permute.xlu0 %633
        %635 = vrot.lane.b32.xlu0 %v417, 56
        %v636 = vpop.permute.xlu0 %635
        %637 = vrot.lane.b32.xlu0 %v418, 56
        %v638 = vpop.permute.xlu0 %637
        %639 = vrot.lane.b32.xlu0 %v419, 56
        %v640 = vpop.permute.xlu0 %639
        %641 = vrot.lane.b32.xlu0 %v420, 56
        %v642 = vpop.permute.xlu0 %641
        %643 = vrot.lane.b32.xlu0 %v421, 56
        %v644 = vpop.permute.xlu0 %643
        %645 = vrot.lane.b32.xlu0 %v422, 56
        %v646 = vpop.permute.xlu0 %645
        %663 = vrot.lane.b32.xlu0 %v423, 64
        %v664 = vpop.permute.xlu0 %663
        %665 = vrot.lane.b32.xlu0 %v424, 64
        %v666 = vpop.permute.xlu0 %665
        %667 = vrot.lane.b32.xlu0 %v425, 64
        %v668 = vpop.permute.xlu0 %667
        %669 = vrot.lane.b32.xlu0 %v426, 64
        %v670 = vpop.permute.xlu0 %669
        %671 = vrot.lane.b32.xlu0 %v427, 64
        %v672 = vpop.permute.xlu0 %671
        %673 = vrot.lane.b32.xlu0 %v428, 64
        %v674 = vpop.permute.xlu0 %673
        %675 = vrot.lane.b32.xlu0 %v429, 64
        %v676 = vpop.permute.xlu0 %675
        %677 = vrot.lane.b32.xlu0 %v430, 64
        %v678 = vpop.permute.xlu0 %677
        %v687 = vsel %vm319, %v358, %v440
        %v688 = vsel %vm319, %v359, %v442
        %v689 = vsel %vm319, %v360, %v444
        %v690 = vsel %vm319, %v361, %v446
        %v691 = vsel %vm319, %v362, %v448
        %v692 = vsel %vm319, %v363, %v450
        %v693 = vsel %vm319, %v364, %v452
        %v694 = vsel %vm319, %v365, %v454
        %vm695 = vcmask 130048
        %v696 = vsel %vm695, %v687, %v472
        %v697 = vsel %vm695, %v688, %v474
        %v698 = vsel %vm695, %v689, %v476
        %v699 = vsel %vm695, %v690, %v478
        %v700 = vsel %vm695, %v691, %v480
        %v701 = vsel %vm695, %v692, %v482
        %v702 = vsel %vm695, %v693, %v484
        %v703 = vsel %vm695, %v694, %v486
        %vm704 = vcmask 195584
        %v705 = vsel %vm704, %v696, %v504
        %v706 = vsel %vm704, %v697, %v506
        %v707 = vsel %vm704, %v698, %v508
        %v708 = vsel %vm704, %v699, %v510
        %v709 = vsel %vm704, %v700, %v512
        %v710 = vsel %vm704, %v701, %v514
        %v711 = vsel %vm704, %v702, %v516
        %v712 = vsel %vm704, %v703, %v518
        %vm713 = vcmask 261120
        %v714 = vsel %vm713, %v705, %v536
        %v715 = vsel %vm713, %v706, %v538
        %v716 = vsel %vm713, %v707, %v540
        %v717 = vsel %vm713, %v708, %v542
        %v718 = vsel %vm713, %v709, %v544
        %v719 = vsel %vm713, %v710, %v546
        %v720 = vsel %vm713, %v711, %v548
        %v721 = vsel %vm713, %v712, %v550
        %vm722 = vcmask 326656
        %v723 = vsel %vm722, %v714, %v568
        %v724 = vsel %vm722, %v715, %v570
        %v725 = vsel %vm722, %v716, %v572
        %v726 = vsel %vm722, %v717, %v574
        %v727 = vsel %vm722, %v718, %v576
        %v728 = vsel %vm722, %v719, %v578
        %v729 = vsel %vm722, %v720, %v580
        %v730 = vsel %vm722, %v721, %v582
        %vm731 = vcmask 392192
        %v732 = vsel %vm731, %v723, %v600
        %v733 = vsel %vm731, %v724, %v602
        %v734 = vsel %vm731, %v725, %v604
        %v735 = vsel %vm731, %v726, %v606
        %v736 = vsel %vm731, %v727, %v608
        %v737 = vsel %vm731, %v728, %v610
        %v738 = vsel %vm731, %v729, %v612
        %v739 = vsel %vm731, %v730, %v614
        %vm740 = vcmask 457728
        %v741 = vsel %vm740, %v732, %v632
        %v742 = vsel %vm740, %v733, %v634
        %v743 = vsel %vm740, %v734, %v636
        %v744 = vsel %vm740, %v735, %v638
        %v745 = vsel %vm740, %v736, %v640
        %v746 = vsel %vm740, %v737, %v642
        %v747 = vsel %vm740, %v738, %v644
        %v748 = vsel %vm740, %v739, %v646
        %vm749 = vcmask 523264
        %v750 = vsel %vm749, %v741, %v664
        %v751 = vsel %vm749, %v742, %v666
        %v752 = vsel %vm749, %v743, %v668
        %v753 = vsel %vm749, %v744, %v670
        %v754 = vsel %vm749, %v745, %v672
        %v755 = vsel %vm749, %v746, %v674
        %v756 = vsel %vm749, %v747, %v676
        %v757 = vsel %vm749, %v748, %v678
        %v758 = vld [vmem:[%s1] sm:$0xff]
        %v759 = vld [vmem:[%s1 + $0x8] sm:$0xff]
        %v760 = vld [vmem:[%s1 + $0x10] sm:$0xff]
        %v761 = vld [vmem:[%s1 + $0x18] sm:$0xff]
        %v762 = vld [vmem:[%s1 + $0x20] sm:$0xff]
        %v763 = vld [vmem:[%s1 + $0x28] sm:$0xff]
        %v764 = vld [vmem:[%s1 + $0x30] sm:$0xff]
        %v765 = vld [vmem:[%s1 + $0x38] sm:$0xff]
        %v766 = vld [vmem:[%s1 + $0x40] sm:$0xff]
        %v767 = vld [vmem:[%s2] sm:$0x1]
        %v769 = vlaneseq
        %v770 = vshrl.u32 %v769, 7
        %v771 = vsub.s32 0, %v770
        %v772 = vrot.slane %v767, %v771
        %vm774 = vcmask 588800
        %v776 = vsel %vm774, %v750, 0
        %v779 = vsel %vm774, %v751, 0
        %v782 = vsel %vm774, %v752, 0
        %v785 = vsel %vm774, %v753, 0
        %v788 = vsel %vm774, %v754, 0
        %v791 = vsel %vm774, %v755, 0
        %v794 = vsel %vm774, %v756, 0
        %v797 = vsel %vm774, %v757, 0
        %799 = vmatprep.subr.mxu0 0.0
        %800 = vmatpush1.msra.mxu0 %v758
        %801 = vmatprep.subr.mxu0 0.0
        %802 = vmatpush1.msra.mxu0 %v759
        %803 = vmatprep.subr.mxu0 0.0
        %804 = vmatpush1.msra.mxu0 %v760
        %805 = vmatprep.subr.mxu0 0.0
        %806 = vmatpush1.msra.mxu0 %v761
        %807 = vmatprep.subr.mxu0 0.0
        %808 = vmatpush1.msra.mxu0 %v762
        %809 = vmatprep.subr.mxu0 0.0
        %810 = vmatpush1.msra.mxu0 %v763
        %811 = vmatprep.subr.mxu0 0.0
        %812 = vmatpush1.msra.mxu0 %v764
        %813 = vmatprep.subr.mxu0 0.0
        %814 = vmatpush1.msra.mxu0 %v765
        %815 = vmatprep.subr.mxu0 0.0
        %816 = vmatpush1.msra.mxu0 %v766
        %817 = vmatprep.subr.mxu0 0.0
        %818 = vmatpush1.msra.mxu0 0.0
        %819 = vmatprep.subr.mxu0 0.0
        %820 = vmatpush1.msra.mxu0 0.0
        %821 = vmatprep.subr.mxu0 0.0
        %822 = vmatpush1.msra.mxu0 0.0
        %823 = vmatprep.subr.mxu0 0.0
        %824 = vmatpush1.msra.mxu0 0.0
        %825 = vmatprep.subr.mxu0 0.0
        %826 = vmatpush1.msra.mxu0 0.0
        %827 = vmatprep.subr.mxu0 0.0
        %828 = vmatpush1.msra.mxu0 0.0
        %829 = vmatprep.subr.mxu0 0.0
        %830 = vmatpush1.msra.mxu0 0.0
        %831 = vmatprep.subr.mxu0 0.0
        %832 = vmatpush1.msra.mxu0 0.0
        %833 = vmatprep.subr.mxu0 0.0
        %834 = vmatpush1.msra.mxu0 0.0
        %835 = vmatprep.subr.mxu0 0.0
        %836 = vmatpush1.msra.mxu0 0.0
        %837 = vmatprep.subr.mxu0 0.0
        %838 = vmatpush1.msra.mxu0 0.0
        %839 = vmatprep.subr.mxu0 0.0
        %840 = vmatpush1.msra.mxu0 0.0
        %841 = vmatprep.subr.mxu0 0.0
        %842 = vmatpush1.msra.mxu0 0.0
        %843 = vmatprep.subr.mxu0 0.0
        %844 = vmatpush1.msra.mxu0 0.0
        %845 = vmatprep.subr.mxu0 0.0
        %846 = vmatpush1.msra.mxu0 0.0
        %847 = vmatprep.subr.mxu0 0.0
        %848 = vmatpush1.msra.mxu0 0.0
        %849 = vmatprep.subr.mxu0 0.0
        %850 = vmatpush1.msra.mxu0 0.0
        %851 = vmatprep.subr.mxu0 0.0
        %852 = vmatpush1.msra.mxu0 0.0
        %853 = vmatprep.subr.mxu0 0.0
        %854 = vmatpush1.msra.mxu0 0.0
        %855 = vmatprep.subr.mxu0 0.0
        %856 = vmatpush1.msra.mxu0 0.0
        %857 = vmatprep.subr.mxu0 0.0
        %858 = vmatpush1.msra.mxu0 0.0
        %859 = vmatprep.subr.mxu0 0.0
        %860 = vmatpush1.msra.mxu0 0.0
        %861 = vmatprep.subr.mxu0 0.0
        %862 = vmatpush1.msra.mxu0 0.0
        %863 = vmatprep.mubr.f32.mxu0 0.0
        %864 = vmatmul.mubr.f32.gmra.mrb[0].mxu0 %v776
        %v865 = vpop.f32.mrb[0].mxu0
        %v866 = vadd.f32 %v772, %v865
        %v867 = vpop.f32.mrb[0].mxu0
        %868 = vmatprep.mubr.f32.mxu0 0.0
        %869 = vmatmul.mubr.f32.gmra.mrb[0].mxu0 %v779
        %v870 = vpop.f32.mrb[0].mxu0
        %v871 = vadd.f32 %v772, %v870
        %v872 = vpop.f32.mrb[0].mxu0
        %873 = vmatprep.mubr.f32.mxu0 0.0
        %874 = vmatmul.mubr.f32.gmra.mrb[0].mxu0 %v782
        %v875 = vpop.f32.mrb[0].mxu0
        %v876 = vadd.f32 %v772, %v875
        %v877 = vpop.f32.mrb[0].mxu0
        %878 = vmatprep.mubr.f32.mxu0 0.0
        %879 = vmatmul.mubr.f32.gmra.mrb[0].mxu0 %v785
        %v880 = vpop.f32.mrb[0].mxu0
        %v881 = vadd.f32 %v772, %v880
        %v882 = vpop.f32.mrb[0].mxu0
        %883 = vmatprep.mubr.f32.mxu0 0.0
        %884 = vmatmul.mubr.f32.gmra.mrb[0].mxu0 %v788
        %v885 = vpop.f32.mrb[0].mxu0
        %v886 = vadd.f32 %v772, %v885
        %v887 = vpop.f32.mrb[0].mxu0
        %888 = vmatprep.mubr.f32.mxu0 0.0
        %889 = vmatmul.mubr.f32.gmra.mrb[0].mxu0 %v791
        %v890 = vpop.f32.mrb[0].mxu0
        %v891 = vadd.f32 %v772, %v890
        %v892 = vpop.f32.mrb[0].mxu0
        %893 = vmatprep.mubr.f32.mxu0 0.0
        %894 = vmatmul.mubr.f32.gmra.mrb[0].mxu0 %v794
        %v895 = vpop.f32.mrb[0].mxu0
        %v896 = vadd.f32 %v772, %v895
        %v897 = vpop.f32.mrb[0].mxu0
        %898 = vmatprep.mubr.f32.mxu0 0.0
        %899 = vmatmul.mubr.f32.gmra.mrb[0].mxu0 %v797
        %v900 = vpop.f32.mrb[0].mxu0
        %v901 = vadd.f32 %v772, %v900
        %v902 = vpop.f32.mrb[0].mxu0
        %903 = vdwg.mxu0
        %v904 = vmax.f32 %v866, 0.0
        %v905 = vmax.f32 %v871, 0.0
        %v906 = vmax.f32 %v876, 0.0
        %v907 = vmax.f32 %v881, 0.0
        %v908 = vmax.f32 %v886, 0.0
        %v909 = vmax.f32 %v891, 0.0
        %v910 = vmax.f32 %v896, 0.0
        %v911 = vmax.f32 %v901, 0.0
        %912 = vst.msk [vmem:[%s349 + $0x1] sm:$0xff] %vm319, %v904
        %913 = vst.msk [vmem:[%s349 + $0x11] sm:$0xff] %vm319, %v905
        %914 = vst.msk [vmem:[%s349 + $0x21] sm:$0xff] %vm319, %v906
        %915 = vst.msk [vmem:[%s349 + $0x31] sm:$0xff] %vm319, %v907
        %916 = vst.msk [vmem:[%s349 + $0x41] sm:$0xff] %vm319, %v908
        %917 = vst.msk [vmem:[%s349 + $0x51] sm:$0xff] %vm319, %v909
        %918 = vst.msk [vmem:[%s349 + $0x61] sm:$0xff] %vm319, %v910
        %919 = vst.msk [vmem:[%s349 + $0x71] sm:$0xff] %vm319, %v911
        %v920 = vld [vmem:[#allocation2] sm:$0xff]
        %v921 = vld [vmem:[#allocation2 + $0x10] sm:$0xff]
        %v922 = vld [vmem:[#allocation2 + $0x20] sm:$0xff]
        %v923 = vld [vmem:[#allocation2 + $0x30] sm:$0xff]
        %v924 = vld [vmem:[#allocation2 + $0x40] sm:$0xff]
        %v925 = vld [vmem:[#allocation2 + $0x50] sm:$0xff]
        %v926 = vld [vmem:[#allocation2 + $0x60] sm:$0xff]
        %v927 = vld [vmem:[#allocation2 + $0x70] sm:$0xff]
        %v928 = vld [vmem:[#allocation2 + $0x1] sm:$0xff]
        %v929 = vld [vmem:[#allocation2 + $0x11] sm:$0xff]
        %v930 = vld [vmem:[#allocation2 + $0x21] sm:$0xff]
        %v931 = vld [vmem:[#allocation2 + $0x31] sm:$0xff]
        %v932 = vld [vmem:[#allocation2 + $0x41] sm:$0xff]
        %v933 = vld [vmem:[#allocation2 + $0x51] sm:$0xff]
        %v934 = vld [vmem:[#allocation2 + $0x61] sm:$0xff]
        %v935 = vld [vmem:[#allocation2 + $0x71] sm:$0xff]
        %v936 = vld [vmem:[#allocation2 + $0x2] sm:$0xff]
        %v937 = vld [vmem:[#allocation2 + $0x12] sm:$0xff]
        %v938 = vld [vmem:[#allocation2 + $0x22] sm:$0xff]
        %v939 = vld [vmem:[#allocation2 + $0x32] sm:$0xff]
        %v940 = vld [vmem:[#allocation2 + $0x42] sm:$0xff]
        %v941 = vld [vmem:[#allocation2 + $0x52] sm:$0xff]
        %v942 = vld [vmem:[#allocation2 + $0x62] sm:$0xff]
        %v943 = vld [vmem:[#allocation2 + $0x72] sm:$0xff]
        %v944 = vld [vmem:[%s349] sm:$0xff]
        %v945 = vld [vmem:[%s349 + $0x10] sm:$0xff]
        %v946 = vld [vmem:[%s349 + $0x20] sm:$0xff]
        %v947 = vld [vmem:[%s349 + $0x30] sm:$0xff]
        %v948 = vld [vmem:[%s349 + $0x40] sm:$0xff]
        %v949 = vld [vmem:[%s349 + $0x50] sm:$0xff]
        %v950 = vld [vmem:[%s349 + $0x60] sm:$0xff]
        %v951 = vld [vmem:[%s349 + $0x70] sm:$0xff]
        %v952 = vld [vmem:[%s349 + $0x1] sm:$0xff]
        %v953 = vld [vmem:[%s349 + $0x11] sm:$0xff]
        %v954 = vld [vmem:[%s349 + $0x21] sm:$0xff]
        %v955 = vld [vmem:[%s349 + $0x31] sm:$0xff]
        %v956 = vld [vmem:[%s349 + $0x41] sm:$0xff]
        %v957 = vld [vmem:[%s349 + $0x51] sm:$0xff]
        %v958 = vld [vmem:[%s349 + $0x61] sm:$0xff]
        %v959 = vld [vmem:[%s349 + $0x71] sm:$0xff]
        %v960 = vld [vmem:[%s349 + $0x2] sm:$0xff]
        %v961 = vld [vmem:[%s349 + $0x12] sm:$0xff]
        %v962 = vld [vmem:[%s349 + $0x22] sm:$0xff]
        %v963 = vld [vmem:[%s349 + $0x32] sm:$0xff]
        %v964 = vld [vmem:[%s349 + $0x42] sm:$0xff]
        %v965 = vld [vmem:[%s349 + $0x52] sm:$0xff]
        %v966 = vld [vmem:[%s349 + $0x62] sm:$0xff]
        %v967 = vld [vmem:[%s349 + $0x72] sm:$0xff]
        %v968 = vld [vmem:[%s406] sm:$0xff]
        %v969 = vld [vmem:[%s406 + $0x10] sm:$0xff]
        %v970 = vld [vmem:[%s406 + $0x20] sm:$0xff]
        %v971 = vld [vmem:[%s406 + $0x30] sm:$0xff]
        %v972 = vld [vmem:[%s406 + $0x40] sm:$0xff]
        %v973 = vld [vmem:[%s406 + $0x50] sm:$0xff]
        %v974 = vld [vmem:[%s406 + $0x60] sm:$0xff]
        %v975 = vld [vmem:[%s406 + $0x70] sm:$0xff]
        %v976 = vld [vmem:[%s406 + $0x1] sm:$0xff]
        %v977 = vld [vmem:[%s406 + $0x11] sm:$0xff]
        %v978 = vld [vmem:[%s406 + $0x21] sm:$0xff]
        %v979 = vld [vmem:[%s406 + $0x31] sm:$0xff]
        %v980 = vld [vmem:[%s406 + $0x41] sm:$0xff]
        %v981 = vld [vmem:[%s406 + $0x51] sm:$0xff]
        %v982 = vld [vmem:[%s406 + $0x61] sm:$0xff]
        %v983 = vld [vmem:[%s406 + $0x71] sm:$0xff]
        %v984 = vld [vmem:[%s406 + $0x2] sm:$0xff]
        %v985 = vld [vmem:[%s406 + $0x12] sm:$0xff]
        %v986 = vld [vmem:[%s406 + $0x22] sm:$0xff]
        %v987 = vld [vmem:[%s406 + $0x32] sm:$0xff]
        %v988 = vld [vmem:[%s406 + $0x42] sm:$0xff]
        %v989 = vld [vmem:[%s406 + $0x52] sm:$0xff]
        %v990 = vld [vmem:[%s406 + $0x62] sm:$0xff]
        %v991 = vld [vmem:[%s406 + $0x72] sm:$0xff]
        %1000 = vrot.lane.b32.xlu0 %v928, 8
        %v1001 = vpop.permute.xlu0 %1000
        %1002 = vrot.lane.b32.xlu0 %v929, 8
        %v1003 = vpop.permute.xlu0 %1002
        %1004 = vrot.lane.b32.xlu0 %v930, 8
        %v1005 = vpop.permute.xlu0 %1004
        %1006 = vrot.lane.b32.xlu0 %v931, 8
        %v1007 = vpop.permute.xlu0 %1006
        %1008 = vrot.lane.b32.xlu0 %v932, 8
        %v1009 = vpop.permute.xlu0 %1008
        %1010 = vrot.lane.b32.xlu0 %v933, 8
        %v1011 = vpop.permute.xlu0 %1010
        %1012 = vrot.lane.b32.xlu0 %v934, 8
        %v1013 = vpop.permute.xlu0 %1012
        %1014 = vrot.lane.b32.xlu0 %v935, 8
        %v1015 = vpop.permute.xlu0 %1014
        %1032 = vrot.lane.b32.xlu0 %v936, 16
        %v1033 = vpop.permute.xlu0 %1032
        %1034 = vrot.lane.b32.xlu0 %v937, 16
        %v1035 = vpop.permute.xlu0 %1034
        %1036 = vrot.lane.b32.xlu0 %v938, 16
        %v1037 = vpop.permute.xlu0 %1036
        %1038 = vrot.lane.b32.xlu0 %v939, 16
        %v1039 = vpop.permute.xlu0 %1038
        %1040 = vrot.lane.b32.xlu0 %v940, 16
        %v1041 = vpop.permute.xlu0 %1040
        %1042 = vrot.lane.b32.xlu0 %v941, 16
        %v1043 = vpop.permute.xlu0 %1042
        %1044 = vrot.lane.b32.xlu0 %v942, 16
        %v1045 = vpop.permute.xlu0 %1044
        %1046 = vrot.lane.b32.xlu0 %v943, 16
        %v1047 = vpop.permute.xlu0 %1046
        %1064 = vrot.lane.b32.xlu0 %v944, 24
        %v1065 = vpop.permute.xlu0 %1064
        %1066 = vrot.lane.b32.xlu0 %v945, 24
        %v1067 = vpop.permute.xlu0 %1066
        %1068 = vrot.lane.b32.xlu0 %v946, 24
        %v1069 = vpop.permute.xlu0 %1068
        %1070 = vrot.lane.b32.xlu0 %v947, 24
        %v1071 = vpop.permute.xlu0 %1070
        %1072 = vrot.lane.b32.xlu0 %v948, 24
        %v1073 = vpop.permute.xlu0 %1072
        %1074 = vrot.lane.b32.xlu0 %v949, 24
        %v1075 = vpop.permute.xlu0 %1074
        %1076 = vrot.lane.b32.xlu0 %v950, 24
        %v1077 = vpop.permute.xlu0 %1076
        %1078 = vrot.lane.b32.xlu0 %v951, 24
        %v1079 = vpop.permute.xlu0 %1078
        %1096 = vrot.lane.b32.xlu0 %v952, 32
        %v1097 = vpop.permute.xlu0 %1096
        %1098 = vrot.lane.b32.xlu0 %v953, 32
        %v1099 = vpop.permute.xlu0 %1098
        %1100 = vrot.lane.b32.xlu0 %v954, 32
        %v1101 = vpop.permute.xlu0 %1100
        %1102 = vrot.lane.b32.xlu0 %v955, 32
        %v1103 = vpop.permute.xlu0 %1102
        %1104 = vrot.lane.b32.xlu0 %v956, 32
        %v1105 = vpop.permute.xlu0 %1104
        %1106 = vrot.lane.b32.xlu0 %v957, 32
        %v1107 = vpop.permute.xlu0 %1106
        %1108 = vrot.lane.b32.xlu0 %v958, 32
        %v1109 = vpop.permute.xlu0 %1108
        %1110 = vrot.lane.b32.xlu0 %v959, 32
        %v1111 = vpop.permute.xlu0 %1110
        %1128 = vrot.lane.b32.xlu0 %v960, 40
        %v1129 = vpop.permute.xlu0 %1128
        %1130 = vrot.lane.b32.xlu0 %v961, 40
        %v1131 = vpop.permute.xlu0 %1130
        %1132 = vrot.lane.b32.xlu0 %v962, 40
        %v1133 = vpop.permute.xlu0 %1132
        %1134 = vrot.lane.b32.xlu0 %v963, 40
        %v1135 = vpop.permute.xlu0 %1134
        %1136 = vrot.lane.b32.xlu0 %v964, 40
        %v1137 = vpop.permute.xlu0 %1136
        %1138 = vrot.lane.b32.xlu0 %v965, 40
        %v1139 = vpop.permute.xlu0 %1138
        %1140 = vrot.lane.b32.xlu0 %v966, 40
        %v1141 = vpop.permute.xlu0 %1140
        %1142 = vrot.lane.b32.xlu0 %v967, 40
        %v1143 = vpop.permute.xlu0 %1142
        %1160 = vrot.lane.b32.xlu0 %v968, 48
        %v1161 = vpop.permute.xlu0 %1160
        %1162 = vrot.lane.b32.xlu0 %v969, 48
        %v1163 = vpop.permute.xlu0 %1162
        %1164 = vrot.lane.b32.xlu0 %v970, 48
        %v1165 = vpop.permute.xlu0 %1164
        %1166 = vrot.lane.b32.xlu0 %v971, 48
        %v1167 = vpop.permute.xlu0 %1166
        %1168 = vrot.lane.b32.xlu0 %v972, 48
        %v1169 = vpop.permute.xlu0 %1168
        %1170 = vrot.lane.b32.xlu0 %v973, 48
        %v1171 = vpop.permute.xlu0 %1170
        %1172 = vrot.lane.b32.xlu0 %v974, 48
        %v1173 = vpop.permute.xlu0 %1172
        %1174 = vrot.lane.b32.xlu0 %v975, 48
        %v1175 = vpop.permute.xlu0 %1174
        %1192 = vrot.lane.b32.xlu0 %v976, 56
        %v1193 = vpop.permute.xlu0 %1192
        %1194 = vrot.lane.b32.xlu0 %v977, 56
        %v1195 = vpop.permute.xlu0 %1194
        %1196 = vrot.lane.b32.xlu0 %v978, 56
        %v1197 = vpop.permute.xlu0 %1196
        %1198 = vrot.lane.b32.xlu0 %v979, 56
        %v1199 = vpop.permute.xlu0 %1198
        %1200 = vrot.lane.b32.xlu0 %v980, 56
        %v1201 = vpop.permute.xlu0 %1200
        %1202 = vrot.lane.b32.xlu0 %v981, 56
        %v1203 = vpop.permute.xlu0 %1202
        %1204 = vrot.lane.b32.xlu0 %v982, 56
        %v1205 = vpop.permute.xlu0 %1204
        %1206 = vrot.lane.b32.xlu0 %v983, 56
        %v1207 = vpop.permute.xlu0 %1206
        %1224 = vrot.lane.b32.xlu0 %v984, 64
        %v1225 = vpop.permute.xlu0 %1224
        %1226 = vrot.lane.b32.xlu0 %v985, 64
        %v1227 = vpop.permute.xlu0 %1226
        %1228 = vrot.lane.b32.xlu0 %v986, 64
        %v1229 = vpop.permute.xlu0 %1228
        %1230 = vrot.lane.b32.xlu0 %v987, 64
        %v1231 = vpop.permute.xlu0 %1230
        %1232 = vrot.lane.b32.xlu0 %v988, 64
        %v1233 = vpop.permute.xlu0 %1232
        %1234 = vrot.lane.b32.xlu0 %v989, 64
        %v1235 = vpop.permute.xlu0 %1234
        %1236 = vrot.lane.b32.xlu0 %v990, 64
        %v1237 = vpop.permute.xlu0 %1236
        %1238 = vrot.lane.b32.xlu0 %v991, 64
        %v1239 = vpop.permute.xlu0 %1238
        %v1248 = vsel %vm319, %v920, %v1001
        %v1249 = vsel %vm319, %v921, %v1003
        %v1250 = vsel %vm319, %v922, %v1005
        %v1251 = vsel %vm319, %v923, %v1007
        %v1252 = vsel %vm319, %v924, %v1009
        %v1253 = vsel %vm319, %v925, %v1011
        %v1254 = vsel %vm319, %v926, %v1013
        %v1255 = vsel %vm319, %v927, %v1015
        %v1256 = vsel %vm695, %v1248, %v1033
        %v1257 = vsel %vm695, %v1249, %v1035
        %v1258 = vsel %vm695, %v1250, %v1037
        %v1259 = vsel %vm695, %v1251, %v1039
        %v1260 = vsel %vm695, %v1252, %v1041
        %v1261 = vsel %vm695, %v1253, %v1043
        %v1262 = vsel %vm695, %v1254, %v1045
        %v1263 = vsel %vm695, %v1255, %v1047
        %v1264 = vsel %vm704, %v1256, %v1065
        %v1265 = vsel %vm704, %v1257, %v1067
        %v1266 = vsel %vm704, %v1258, %v1069
        %v1267 = vsel %vm704, %v1259, %v1071
        %v1268 = vsel %vm704, %v1260, %v1073
        %v1269 = vsel %vm704, %v1261, %v1075
        %v1270 = vsel %vm704, %v1262, %v1077
        %v1271 = vsel %vm704, %v1263, %v1079
        %v1272 = vsel %vm713, %v1264, %v1097
        %v1273 = vsel %vm713, %v1265, %v1099
        %v1274 = vsel %vm713, %v1266, %v1101
        %v1275 = vsel %vm713, %v1267, %v1103
        %v1276 = vsel %vm713, %v1268, %v1105
        %v1277 = vsel %vm713, %v1269, %v1107
        %v1278 = vsel %vm713, %v1270, %v1109
        %v1279 = vsel %vm713, %v1271, %v1111
        %v1280 = vsel %vm722, %v1272, %v1129
        %v1281 = vsel %vm722, %v1273, %v1131
        %v1282 = vsel %vm722, %v1274, %v1133
        %v1283 = vsel %vm722, %v1275, %v1135
        %v1284 = vsel %vm722, %v1276, %v1137
        %v1285 = vsel %vm722, %v1277, %v1139
        %v1286 = vsel %vm722, %v1278, %v1141
        %v1287 = vsel %vm722, %v1279, %v1143
        %v1288 = vsel %vm731, %v1280, %v1161
        %v1289 = vsel %vm731, %v1281, %v1163
        %v1290 = vsel %vm731, %v1282, %v1165
        %v1291 = vsel %vm731, %v1283, %v1167
        %v1292 = vsel %vm731, %v1284, %v1169
        %v1293 = vsel %vm731, %v1285, %v1171
        %v1294 = vsel %vm731, %v1286, %v1173
        %v1295 = vsel %vm731, %v1287, %v1175
        %v1296 = vsel %vm740, %v1288, %v1193
        %v1297 = vsel %vm740, %v1289, %v1195
        %v1298 = vsel %vm740, %v1290, %v1197
        %v1299 = vsel %vm740, %v1291, %v1199
        %v1300 = vsel %vm740, %v1292, %v1201
        %v1301 = vsel %vm740, %v1293, %v1203
        %v1302 = vsel %vm740, %v1294, %v1205
        %v1303 = vsel %vm740, %v1295, %v1207
        %v1304 = vsel %vm749, %v1296, %v1225
        %v1305 = vsel %vm749, %v1297, %v1227
        %v1306 = vsel %vm749, %v1298, %v1229
        %v1307 = vsel %vm749, %v1299, %v1231
        %v1308 = vsel %vm749, %v1300, %v1233
        %v1309 = vsel %vm749, %v1301, %v1235
        %v1310 = vsel %vm749, %v1302, %v1237
        %v1311 = vsel %vm749, %v1303, %v1239
        %v1312 = vld [vmem:[%s3] sm:$0xff]
        %v1313 = vld [vmem:[%s3 + $0x8] sm:$0xff]
        %v1314 = vld [vmem:[%s3 + $0x10] sm:$0xff]
        %v1315 = vld [vmem:[%s3 + $0x18] sm:$0xff]
        %v1316 = vld [vmem:[%s3 + $0x20] sm:$0xff]
        %v1317 = vld [vmem:[%s3 + $0x28] sm:$0xff]
        %v1318 = vld [vmem:[%s3 + $0x30] sm:$0xff]
        %v1319 = vld [vmem:[%s3 + $0x38] sm:$0xff]
        %v1320 = vld [vmem:[%s3 + $0x40] sm:$0xff]
        %v1321 = vld [vmem:[%s4] sm:$0x1]
        %v1323 = vlaneseq
        %v1324 = vshrl.u32 %v1323, 7
        %v1325 = vsub.s32 0, %v1324
        %v1326 = vrot.slane %v1321, %v1325
        %v1329 = vsel %vm774, %v1304, 0
        %v1332 = vsel %vm774, %v1305, 0
        %v1335 = vsel %vm774, %v1306, 0
        %v1338 = vsel %vm774, %v1307, 0
        %v1341 = vsel %vm774, %v1308, 0
        %v1344 = vsel %vm774, %v1309, 0
        %v1347 = vsel %vm774, %v1310, 0
        %v1350 = vsel %vm774, %v1311, 0
        %1352 = vmatprep.subr.mxu0 0.0
        %1353 = vmatpush1.msra.mxu0 %v1312
        %1354 = vmatprep.subr.mxu0 0.0
        %1355 = vmatpush1.msra.mxu0 %v1313
        %1356 = vmatprep.subr.mxu0 0.0
        %1357 = vmatpush1.msra.mxu0 %v1314
        %1358 = vmatprep.subr.mxu0 0.0
        %1359 = vmatpush1.msra.mxu0 %v1315
        %1360 = vmatprep.subr.mxu0 0.0
        %1361 = vmatpush1.msra.mxu0 %v1316
        %1362 = vmatprep.subr.mxu0 0.0
        %1363 = vmatpush1.msra.mxu0 %v1317
        %1364 = vmatprep.subr.mxu0 0.0
        %1365 = vmatpush1.msra.mxu0 %v1318
        %1366 = vmatprep.subr.mxu0 0.0
        %1367 = vmatpush1.msra.mxu0 %v1319
        %1368 = vmatprep.subr.mxu0 0.0
        %1369 = vmatpush1.msra.mxu0 %v1320
        %1370 = vmatprep.subr.mxu0 0.0
        %1371 = vmatpush1.msra.mxu0 0.0
        %1372 = vmatprep.subr.mxu0 0.0
        %1373 = vmatpush1.msra.mxu0 0.0
        %1374 = vmatprep.subr.mxu0 0.0
        %1375 = vmatpush1.msra.mxu0 0.0
        %1376 = vmatprep.subr.mxu0 0.0
        %1377 = vmatpush1.msra.mxu0 0.0
        %1378 = vmatprep.subr.mxu0 0.0
        %1379 = vmatpush1.msra.mxu0 0.0
        %1380 = vmatprep.subr.mxu0 0.0
        %1381 = vmatpush1.msra.mxu0 0.0
        %1382 = vmatprep.subr.mxu0 0.0
        %1383 = vmatpush1.msra.mxu0 0.0
        %1384 = vmatprep.subr.mxu0 0.0
        %1385 = vmatpush1.msra.mxu0 0.0
        %1386 = vmatprep.subr.mxu0 0.0
        %1387 = vmatpush1.msra.mxu0 0.0
        %1388 = vmatprep.subr.mxu0 0.0
        %1389 = vmatpush1.msra.mxu0 0.0
        %1390 = vmatprep.subr.mxu0 0.0
        %1391 = vmatpush1.msra.mxu0 0.0
        %1392 = vmatprep.subr.mxu0 0.0
        %1393 = vmatpush1.msra.mxu0 0.0
        %1394 = vmatprep.subr.mxu0 0.0
        %1395 = vmatpush1.msra.mxu0 0.0
        %1396 = vmatprep.subr.mxu0 0.0
        %1397 = vmatpush1.msra.mxu0 0.0
        %1398 = vmatprep.subr.mxu0 0.0
        %1399 = vmatpush1.msra.mxu0 0.0
        %1400 = vmatprep.subr.mxu0 0.0
        %1401 = vmatpush1.msra.mxu0 0.0
        %1402 = vmatprep.subr.mxu0 0.0
        %1403 = vmatpush1.msra.mxu0 0.0
        %1404 = vmatprep.subr.mxu0 0.0
        %1405 = vmatpush1.msra.mxu0 0.0
        %1406 = vmatprep.subr.mxu0 0.0
        %1407 = vmatpush1.msra.mxu0 0.0
        %1408 = vmatprep.subr.mxu0 0.0
        %1409 = vmatpush1.msra.mxu0 0.0
        %1410 = vmatprep.subr.mxu0 0.0
        %1411 = vmatpush1.msra.mxu0 0.0
        %1412 = vmatprep.subr.mxu0 0.0
        %1413 = vmatpush1.msra.mxu0 0.0
        %1414 = vmatprep.subr.mxu0 0.0
        %1415 = vmatpush1.msra.mxu0 0.0
        %1416 = vmatprep.mubr.f32.mxu0 0.0
        %1417 = vmatmul.mubr.f32.gmra.mrb[0].mxu0 %v1329
        %v1418 = vpop.f32.mrb[0].mxu0
        %v1419 = vadd.f32 %v1326, %v1418
        %v1420 = vpop.f32.mrb[0].mxu0
        %1421 = vmatprep.mubr.f32.mxu0 0.0
        %1422 = vmatmul.mubr.f32.gmra.mrb[0].mxu0 %v1332
        %v1423 = vpop.f32.mrb[0].mxu0
        %v1424 = vadd.f32 %v1326, %v1423
        %v1425 = vpop.f32.mrb[0].mxu0
        %1426 = vmatprep.mubr.f32.mxu0 0.0
        %1427 = vmatmul.mubr.f32.gmra.mrb[0].mxu0 %v1335
        %v1428 = vpop.f32.mrb[0].mxu0
        %v1429 = vadd.f32 %v1326, %v1428
        %v1430 = vpop.f32.mrb[0].mxu0
        %1431 = vmatprep.mubr.f32.mxu0 0.0
        %1432 = vmatmul.mubr.f32.gmra.mrb[0].mxu0 %v1338
        %v1433 = vpop.f32.mrb[0].mxu0
        %v1434 = vadd.f32 %v1326, %v1433
        %v1435 = vpop.f32.mrb[0].mxu0
        %1436 = vmatprep.mubr.f32.mxu0 0.0
        %1437 = vmatmul.mubr.f32.gmra.mrb[0].mxu0 %v1341
        %v1438 = vpop.f32.mrb[0].mxu0
        %v1439 = vadd.f32 %v1326, %v1438
        %v1440 = vpop.f32.mrb[0].mxu0
        %1441 = vmatprep.mubr.f32.mxu0 0.0
        %1442 = vmatmul.mubr.f32.gmra.mrb[0].mxu0 %v1344
        %v1443 = vpop.f32.mrb[0].mxu0
        %v1444 = vadd.f32 %v1326, %v1443
        %v1445 = vpop.f32.mrb[0].mxu0
        %1446 = vmatprep.mubr.f32.mxu0 0.0
        %1447 = vmatmul.mubr.f32.gmra.mrb[0].mxu0 %v1347
        %v1448 = vpop.f32.mrb[0].mxu0
        %v1449 = vadd.f32 %v1326, %v1448
        %v1450 = vpop.f32.mrb[0].mxu0
        %1451 = vmatprep.mubr.f32.mxu0 0.0
        %1452 = vmatmul.mubr.f32.gmra.mrb[0].mxu0 %v1350
        %v1453 = vpop.f32.mrb[0].mxu0
        %v1454 = vadd.f32 %v1326, %v1453
        %v1455 = vpop.f32.mrb[0].mxu0
        %1456 = vdwg.mxu0
        %v1457 = vmax.f32 %v1419, 0.0
        %v1458 = vmax.f32 %v1424, 0.0
        %v1459 = vmax.f32 %v1429, 0.0
        %v1460 = vmax.f32 %v1434, 0.0
        %v1461 = vmax.f32 %v1439, 0.0
        %v1462 = vmax.f32 %v1444, 0.0
        %v1463 = vmax.f32 %v1449, 0.0
        %v1464 = vmax.f32 %v1454, 0.0
        %1465 = vst.msk [vmem:[%s349 + $0x1] sm:$0xff] %vm319, %v1457
        %1466 = vst.msk [vmem:[%s349 + $0x11] sm:$0xff] %vm319, %v1458
        %1467 = vst.msk [vmem:[%s349 + $0x21] sm:$0xff] %vm319, %v1459
        %1468 = vst.msk [vmem:[%s349 + $0x31] sm:$0xff] %vm319, %v1460
        %1469 = vst.msk [vmem:[%s349 + $0x41] sm:$0xff] %vm319, %v1461
        %1470 = vst.msk [vmem:[%s349 + $0x51] sm:$0xff] %vm319, %v1462
        %1471 = vst.msk [vmem:[%s349 + $0x61] sm:$0xff] %vm319, %v1463
        %1472 = vst.msk [vmem:[%s349 + $0x71] sm:$0xff] %vm319, %v1464
        %v1473 = vld [vmem:[%s349 + $0x1] sm:$0xff]
        %v1474 = vld [vmem:[%s349 + $0x11] sm:$0xff]
        %v1475 = vld [vmem:[%s349 + $0x21] sm:$0xff]
        %v1476 = vld [vmem:[%s349 + $0x31] sm:$0xff]
        %v1477 = vld [vmem:[%s349 + $0x41] sm:$0xff]
        %v1478 = vld [vmem:[%s349 + $0x51] sm:$0xff]
        %v1479 = vld [vmem:[%s349 + $0x61] sm:$0xff]
        %v1480 = vld [vmem:[%s349 + $0x71] sm:$0xff]
        %v1481 = vld [vmem:[%s349] sm:$0xff]
        %v1482 = vld [vmem:[%s349 + $0x10] sm:$0xff]
        %v1483 = vld [vmem:[%s349 + $0x20] sm:$0xff]
        %v1484 = vld [vmem:[%s349 + $0x30] sm:$0xff]
        %v1485 = vld [vmem:[%s349 + $0x40] sm:$0xff]
        %v1486 = vld [vmem:[%s349 + $0x50] sm:$0xff]
        %v1487 = vld [vmem:[%s349 + $0x60] sm:$0xff]
        %v1488 = vld [vmem:[%s349 + $0x70] sm:$0xff]
        %v1489 = vld [vmem:[#allocation2 + $0x1] sm:$0xff]
        %v1490 = vld [vmem:[#allocation2 + $0x11] sm:$0xff]
        %v1491 = vld [vmem:[#allocation2 + $0x21] sm:$0xff]
        %v1492 = vld [vmem:[#allocation2 + $0x31] sm:$0xff]
        %v1493 = vld [vmem:[#allocation2 + $0x41] sm:$0xff]
        %v1494 = vld [vmem:[#allocation2 + $0x51] sm:$0xff]
        %v1495 = vld [vmem:[#allocation2 + $0x61] sm:$0xff]
        %v1496 = vld [vmem:[#allocation2 + $0x71] sm:$0xff]
        %v1497 = vld [vmem:[#allocation2] sm:$0xff]
        %v1498 = vld [vmem:[#allocation2 + $0x10] sm:$0xff]
        %v1499 = vld [vmem:[#allocation2 + $0x20] sm:$0xff]
        %v1500 = vld [vmem:[#allocation2 + $0x30] sm:$0xff]
        %v1501 = vld [vmem:[#allocation2 + $0x40] sm:$0xff]
        %v1502 = vld [vmem:[#allocation2 + $0x50] sm:$0xff]
        %v1503 = vld [vmem:[#allocation2 + $0x60] sm:$0xff]
        %v1504 = vld [vmem:[#allocation2 + $0x70] sm:$0xff]
        %1513 = vrot.lane.b32.xlu0 %v1481, 8
        %v1514 = vpop.permute.xlu0 %1513
        %1515 = vrot.lane.b32.xlu0 %v1482, 8
        %v1516 = vpop.permute.xlu0 %1515
        %1517 = vrot.lane.b32.xlu0 %v1483, 8
        %v1518 = vpop.permute.xlu0 %1517
        %1519 = vrot.lane.b32.xlu0 %v1484, 8
        %v1520 = vpop.permute.xlu0 %1519
        %1521 = vrot.lane.b32.xlu0 %v1485, 8
        %v1522 = vpop.permute.xlu0 %1521
        %1523 = vrot.lane.b32.xlu0 %v1486, 8
        %v1524 = vpop.permute.xlu0 %1523
        %1525 = vrot.lane.b32.xlu0 %v1487, 8
        %v1526 = vpop.permute.xlu0 %1525
        %1527 = vrot.lane.b32.xlu0 %v1488, 8
        %v1528 = vpop.permute.xlu0 %1527
        %1545 = vrot.lane.b32.xlu0 %v1489, 16
        %v1546 = vpop.permute.xlu0 %1545
        %1547 = vrot.lane.b32.xlu0 %v1490, 16
        %v1548 = vpop.permute.xlu0 %1547
        %1549 = vrot.lane.b32.xlu0 %v1491, 16
        %v1550 = vpop.permute.xlu0 %1549
        %1551 = vrot.lane.b32.xlu0 %v1492, 16
        %v1552 = vpop.permute.xlu0 %1551
        %1553 = vrot.lane.b32.xlu0 %v1493, 16
        %v1554 = vpop.permute.xlu0 %1553
        %1555 = vrot.lane.b32.xlu0 %v1494, 16
        %v1556 = vpop.permute.xlu0 %1555
        %1557 = vrot.lane.b32.xlu0 %v1495, 16
        %v1558 = vpop.permute.xlu0 %1557
        %1559 = vrot.lane.b32.xlu0 %v1496, 16
        %v1560 = vpop.permute.xlu0 %1559
        %1577 = vrot.lane.b32.xlu0 %v1497, 24
        %v1578 = vpop.permute.xlu0 %1577
        %1579 = vrot.lane.b32.xlu0 %v1498, 24
        %v1580 = vpop.permute.xlu0 %1579
        %1581 = vrot.lane.b32.xlu0 %v1499, 24
        %v1582 = vpop.permute.xlu0 %1581
        %1583 = vrot.lane.b32.xlu0 %v1500, 24
        %v1584 = vpop.permute.xlu0 %1583
        %1585 = vrot.lane.b32.xlu0 %v1501, 24
        %v1586 = vpop.permute.xlu0 %1585
        %1587 = vrot.lane.b32.xlu0 %v1502, 24
        %v1588 = vpop.permute.xlu0 %1587
        %1589 = vrot.lane.b32.xlu0 %v1503, 24
        %v1590 = vpop.permute.xlu0 %1589
        %1591 = vrot.lane.b32.xlu0 %v1504, 24
        %v1592 = vpop.permute.xlu0 %1591
        %v1601 = vsel %vm319, %v1473, %v1514
        %v1602 = vsel %vm319, %v1474, %v1516
        %v1603 = vsel %vm319, %v1475, %v1518
        %v1604 = vsel %vm319, %v1476, %v1520
        %v1605 = vsel %vm319, %v1477, %v1522
        %v1606 = vsel %vm319, %v1478, %v1524
        %v1607 = vsel %vm319, %v1479, %v1526
        %v1608 = vsel %vm319, %v1480, %v1528
        %v1609 = vsel %vm695, %v1601, %v1546
        %v1610 = vsel %vm695, %v1602, %v1548
        %v1611 = vsel %vm695, %v1603, %v1550
        %v1612 = vsel %vm695, %v1604, %v1552
        %v1613 = vsel %vm695, %v1605, %v1554
        %v1614 = vsel %vm695, %v1606, %v1556
        %v1615 = vsel %vm695, %v1607, %v1558
        %v1616 = vsel %vm695, %v1608, %v1560
        %v1617 = vsel %vm704, %v1609, %v1578
        %v1618 = vsel %vm704, %v1610, %v1580
        %v1619 = vsel %vm704, %v1611, %v1582
        %v1620 = vsel %vm704, %v1612, %v1584
        %v1621 = vsel %vm704, %v1613, %v1586
        %v1622 = vsel %vm704, %v1614, %v1588
        %v1623 = vsel %vm704, %v1615, %v1590
        %v1624 = vsel %vm704, %v1616, %v1592
        %v1625 = vld [vmem:[%s5] sm:$0xff]
        %v1626 = vld [vmem:[%s5 + $0x8] sm:$0xff]
        %v1627 = vld [vmem:[%s5 + $0x10] sm:$0xff]
        %v1628 = vld [vmem:[%s5 + $0x18] sm:$0xff]
        %v1630 = vsel %vm713, %v1617, 0
        %v1633 = vsel %vm713, %v1618, 0
        %v1636 = vsel %vm713, %v1619, 0
        %v1639 = vsel %vm713, %v1620, 0
        %v1642 = vsel %vm713, %v1621, 0
        %v1645 = vsel %vm713, %v1622, 0
        %v1648 = vsel %vm713, %v1623, 0
        %v1651 = vsel %vm713, %v1624, 0
        %1653 = vmatprep.subr.mxu0 0.0
        %1654 = vmatpush1.msra.mxu0 %v1625
        %1655 = vmatprep.subr.mxu0 0.0
        %1656 = vmatpush1.msra.mxu0 %v1626
        %1657 = vmatprep.subr.mxu0 0.0
        %1658 = vmatpush1.msra.mxu0 %v1627
        %1659 = vmatprep.subr.mxu0 0.0
        %1660 = vmatpush1.msra.mxu0 %v1628
        %1661 = vmatprep.subr.mxu0 0.0
        %1662 = vmatpush1.msra.mxu0 0.0
        %1663 = vmatprep.subr.mxu0 0.0
        %1664 = vmatpush1.msra.mxu0 0.0
        %1665 = vmatprep.subr.mxu0 0.0
        %1666 = vmatpush1.msra.mxu0 0.0
        %1667 = vmatprep.subr.mxu0 0.0
        %1668 = vmatpush1.msra.mxu0 0.0
        %1669 = vmatprep.subr.mxu0 0.0
        %1670 = vmatpush1.msra.mxu0 0.0
        %1671 = vmatprep.subr.mxu0 0.0
        %1672 = vmatpush1.msra.mxu0 0.0
        %1673 = vmatprep.subr.mxu0 0.0
        %1674 = vmatpush1.msra.mxu0 0.0
        %1675 = vmatprep.subr.mxu0 0.0
        %1676 = vmatpush1.msra.mxu0 0.0
        %1677 = vmatprep.subr.mxu0 0.0
        %1678 = vmatpush1.msra.mxu0 0.0
        %1679 = vmatprep.subr.mxu0 0.0
        %1680 = vmatpush1.msra.mxu0 0.0
        %1681 = vmatprep.subr.mxu0 0.0
        %1682 = vmatpush1.msra.mxu0 0.0
        %1683 = vmatprep.subr.mxu0 0.0
        %1684 = vmatpush1.msra.mxu0 0.0
        %1685 = vmatprep.subr.mxu0 0.0
        %1686 = vmatpush1.msra.mxu0 0.0
        %1687 = vmatprep.subr.mxu0 0.0
        %1688 = vmatpush1.msra.mxu0 0.0
        %1689 = vmatprep.subr.mxu0 0.0
        %1690 = vmatpush1.msra.mxu0 0.0
        %1691 = vmatprep.subr.mxu0 0.0
        %1692 = vmatpush1.msra.mxu0 0.0
        %1693 = vmatprep.subr.mxu0 0.0
        %1694 = vmatpush1.msra.mxu0 0.0
        %1695 = vmatprep.subr.mxu0 0.0
        %1696 = vmatpush1.msra.mxu0 0.0
        %1697 = vmatprep.subr.mxu0 0.0
        %1698 = vmatpush1.msra.mxu0 0.0
        %1699 = vmatprep.subr.mxu0 0.0
        %1700 = vmatpush1.msra.mxu0 0.0
        %1701 = vmatprep.subr.mxu0 0.0
        %1702 = vmatpush1.msra.mxu0 0.0
        %1703 = vmatprep.subr.mxu0 0.0
        %1704 = vmatpush1.msra.mxu0 0.0
        %1705 = vmatprep.subr.mxu0 0.0
        %1706 = vmatpush1.msra.mxu0 0.0
        %1707 = vmatprep.subr.mxu0 0.0
        %1708 = vmatpush1.msra.mxu0 0.0
        %1709 = vmatprep.subr.mxu0 0.0
        %1710 = vmatpush1.msra.mxu0 0.0
        %1711 = vmatprep.subr.mxu0 0.0
        %1712 = vmatpush1.msra.mxu0 0.0
        %1713 = vmatprep.subr.mxu0 0.0
        %1714 = vmatpush1.msra.mxu0 0.0
        %1715 = vmatprep.subr.mxu0 0.0
        %1716 = vmatpush1.msra.mxu0 0.0
        %1717 = vmatprep.mubr.f32.mxu0 0.0
        %1718 = vmatmul.mubr.f32.gmra.mrb[0].mxu0 %v1630
        %v1719 = vpop.f32.mrb[0].mxu0
        %v1720 = vadd.f32 0.0, %v1719
        %v1721 = vpop.f32.mrb[0].mxu0
        %1722 = vmatprep.mubr.f32.mxu0 0.0
        %1723 = vmatmul.mubr.f32.gmra.mrb[0].mxu0 %v1633
        %v1724 = vpop.f32.mrb[0].mxu0
        %v1725 = vadd.f32 0.0, %v1724
        %v1726 = vpop.f32.mrb[0].mxu0
        %1727 = vmatprep.mubr.f32.mxu0 0.0
        %1728 = vmatmul.mubr.f32.gmra.mrb[0].mxu0 %v1636
        %v1729 = vpop.f32.mrb[0].mxu0
        %v1730 = vadd.f32 0.0, %v1729
        %v1731 = vpop.f32.mrb[0].mxu0
        %1732 = vmatprep.mubr.f32.mxu0 0.0
        %1733 = vmatmul.mubr.f32.gmra.mrb[0].mxu0 %v1639
        %v1734 = vpop.f32.mrb[0].mxu0
        %v1735 = vadd.f32 0.0, %v1734
        %v1736 = vpop.f32.mrb[0].mxu0
        %1737 = vmatprep.mubr.f32.mxu0 0.0
        %1738 = vmatmul.mubr.f32.gmra.mrb[0].mxu0 %v1642
        %v1739 = vpop.f32.mrb[0].mxu0
        %v1740 = vadd.f32 0.0, %v1739
        %v1741 = vpop.f32.mrb[0].mxu0
        %1742 = vmatprep.mubr.f32.mxu0 0.0
        %1743 = vmatmul.mubr.f32.gmra.mrb[0].mxu0 %v1645
        %v1744 = vpop.f32.mrb[0].mxu0
        %v1745 = vadd.f32 0.0, %v1744
        %v1746 = vpop.f32.mrb[0].mxu0
        %1747 = vmatprep.mubr.f32.mxu0 0.0
        %1748 = vmatmul.mubr.f32.gmra.mrb[0].mxu0 %v1648
        %v1749 = vpop.f32.mrb[0].mxu0
        %v1750 = vadd.f32 0.0, %v1749
        %v1751 = vpop.f32.mrb[0].mxu0
        %1752 = vmatprep.mubr.f32.mxu0 0.0
        %1753 = vmatmul.mubr.f32.gmra.mrb[0].mxu0 %v1651
        %v1754 = vpop.f32.mrb[0].mxu0
        %v1755 = vadd.f32 0.0, %v1754
        %v1756 = vpop.f32.mrb[0].mxu0
        %1757 = vdwg.mxu0
        %1758 = vxpose.xlu0.b32.start [1/16] %v1720, 128
        %1759 = vxpose.xlu0.b32.cont [2/16] %v1725, 128
        %1760 = vxpose.xlu0.b32.cont [3/16] %v1730, 128
        %1761 = vxpose.xlu0.b32.cont [4/16] %v1735, 128
        %1762 = vxpose.xlu0.b32.cont [5/16] %v1740, 128
        %1763 = vxpose.xlu0.b32.cont [6/16] %v1745, 128
        %1764 = vxpose.xlu0.b32.cont [7/16] %v1750, 128
        %1765 = vxpose.xlu0.b32.cont [8/16] %v1755, 128
        %1766 = vxpose.xlu0.b32.cont [9/16] 0.0, 128
        %1767 = vxpose.xlu0.b32.cont [10/16] 0.0, 128
        %1768 = vxpose.xlu0.b32.cont [11/16] 0.0, 128
        %1769 = vxpose.xlu0.b32.cont [12/16] 0.0, 128
        %1770 = vxpose.xlu0.b32.cont [13/16] 0.0, 128
        %1771 = vxpose.xlu0.b32.cont [14/16] 0.0, 128
        %1772 = vxpose.xlu0.b32.cont [15/16] 0.0, 128
        %1773 = vxpose.xlu0.b32.end [16/16] 0.0, 128
        %v1774 = vpop.trf.xlu0
        %v1775 = vpop.trf.xlu0
        %v1776 = vpop.trf.xlu0
        %v1777 = vpop.trf.xlu0
        %v1778 = vpop.trf.xlu0
        %v1779 = vpop.trf.xlu0
        %v1780 = vpop.trf.xlu0
        %v1781 = vpop.trf.xlu0
        %v1782 = vpop.trf.xlu0
        %v1783 = vpop.trf.xlu0
        %v1784 = vpop.trf.xlu0
        %v1785 = vpop.trf.xlu0
        %v1786 = vpop.trf.xlu0
        %v1787 = vpop.trf.xlu0
        %v1788 = vpop.trf.xlu0
        %v1789 = vpop.trf.xlu0
        %v1790 = vld [vmem:[%s349 + $0x2] sm:$0xff]
        %v1791 = vld [vmem:[%s349 + $0x12] sm:$0xff]
        %v1792 = vld [vmem:[%s349 + $0x22] sm:$0xff]
        %v1793 = vld [vmem:[%s349 + $0x32] sm:$0xff]
        %v1794 = vld [vmem:[%s349 + $0x42] sm:$0xff]
        %v1795 = vld [vmem:[%s349 + $0x52] sm:$0xff]
        %v1796 = vld [vmem:[%s349 + $0x62] sm:$0xff]
        %v1797 = vld [vmem:[%s349 + $0x72] sm:$0xff]
        %v1798 = vld [vmem:[#allocation2 + $0x2] sm:$0xff]
        %v1799 = vld [vmem:[#allocation2 + $0x12] sm:$0xff]
        %v1800 = vld [vmem:[#allocation2 + $0x22] sm:$0xff]
        %v1801 = vld [vmem:[#allocation2 + $0x32] sm:$0xff]
        %v1802 = vld [vmem:[#allocation2 + $0x42] sm:$0xff]
        %v1803 = vld [vmem:[#allocation2 + $0x52] sm:$0xff]
        %v1804 = vld [vmem:[#allocation2 + $0x62] sm:$0xff]
        %v1805 = vld [vmem:[#allocation2 + $0x72] sm:$0xff]
        %1814 = vrot.lane.b32.xlu0 %v1473, 8
        %v1815 = vpop.permute.xlu0 %1814
        %1816 = vrot.lane.b32.xlu0 %v1474, 8
        %v1817 = vpop.permute.xlu0 %1816
        %1818 = vrot.lane.b32.xlu0 %v1475, 8
        %v1819 = vpop.permute.xlu0 %1818
        %1820 = vrot.lane.b32.xlu0 %v1476, 8
        %v1821 = vpop.permute.xlu0 %1820
        %1822 = vrot.lane.b32.xlu0 %v1477, 8
        %v1823 = vpop.permute.xlu0 %1822
        %1824 = vrot.lane.b32.xlu0 %v1478, 8
        %v1825 = vpop.permute.xlu0 %1824
        %1826 = vrot.lane.b32.xlu0 %v1479, 8
        %v1827 = vpop.permute.xlu0 %1826
        %1828 = vrot.lane.b32.xlu0 %v1480, 8
        %v1829 = vpop.permute.xlu0 %1828
        %1846 = vrot.lane.b32.xlu0 %v1798, 16
        %v1847 = vpop.permute.xlu0 %1846
        %1848 = vrot.lane.b32.xlu0 %v1799, 16
        %v1849 = vpop.permute.xlu0 %1848
        %1850 = vrot.lane.b32.xlu0 %v1800, 16
        %v1851 = vpop.permute.xlu0 %1850
        %1852 = vrot.lane.b32.xlu0 %v1801, 16
        %v1853 = vpop.permute.xlu0 %1852
        %1854 = vrot.lane.b32.xlu0 %v1802, 16
        %v1855 = vpop.permute.xlu0 %1854
        %1856 = vrot.lane.b32.xlu0 %v1803, 16
        %v1857 = vpop.permute.xlu0 %1856
        %1858 = vrot.lane.b32.xlu0 %v1804, 16
        %v1859 = vpop.permute.xlu0 %1858
        %1860 = vrot.lane.b32.xlu0 %v1805, 16
        %v1861 = vpop.permute.xlu0 %1860
        %1870 = vrot.lane.b32.xlu0 %v1489, 24
        %v1871 = vpop.permute.xlu0 %1870
        %1872 = vrot.lane.b32.xlu0 %v1490, 24
        %v1873 = vpop.permute.xlu0 %1872
        %1874 = vrot.lane.b32.xlu0 %v1491, 24
        %v1875 = vpop.permute.xlu0 %1874
        %1876 = vrot.lane.b32.xlu0 %v1492, 24
        %v1877 = vpop.permute.xlu0 %1876
        %1878 = vrot.lane.b32.xlu0 %v1493, 24
        %v1879 = vpop.permute.xlu0 %1878
        %1880 = vrot.lane.b32.xlu0 %v1494, 24
        %v1881 = vpop.permute.xlu0 %1880
        %1882 = vrot.lane.b32.xlu0 %v1495, 24
        %v1883 = vpop.permute.xlu0 %1882
        %1884 = vrot.lane.b32.xlu0 %v1496, 24
        %v1885 = vpop.permute.xlu0 %1884
        %v1894 = vsel %vm319, %v1790, %v1815
        %v1895 = vsel %vm319, %v1791, %v1817
        %v1896 = vsel %vm319, %v1792, %v1819
        %v1897 = vsel %vm319, %v1793, %v1821
        %v1898 = vsel %vm319, %v1794, %v1823
        %v1899 = vsel %vm319, %v1795, %v1825
        %v1900 = vsel %vm319, %v1796, %v1827
        %v1901 = vsel %vm319, %v1797, %v1829
        %v1902 = vsel %vm695, %v1894, %v1847
        %v1903 = vsel %vm695, %v1895, %v1849
        %v1904 = vsel %vm695, %v1896, %v1851
        %v1905 = vsel %vm695, %v1897, %v1853
        %v1906 = vsel %vm695, %v1898, %v1855
        %v1907 = vsel %vm695, %v1899, %v1857
        %v1908 = vsel %vm695, %v1900, %v1859
        %v1909 = vsel %vm695, %v1901, %v1861
        %v1910 = vsel %vm704, %v1902, %v1871
        %v1911 = vsel %vm704, %v1903, %v1873
        %v1912 = vsel %vm704, %v1904, %v1875
        %v1913 = vsel %vm704, %v1905, %v1877
        %v1914 = vsel %vm704, %v1906, %v1879
        %v1915 = vsel %vm704, %v1907, %v1881
        %v1916 = vsel %vm704, %v1908, %v1883
        %v1917 = vsel %vm704, %v1909, %v1885
        %s1918 = scalar_lea.vmem %s5, 32
        %v1919 = vld [vmem:[%s1918] sm:$0xff]
        %v1920 = vld [vmem:[%s1918 + $0x8] sm:$0xff]
        %v1921 = vld [vmem:[%s1918 + $0x10] sm:$0xff]
        %v1922 = vld [vmem:[%s1918 + $0x18] sm:$0xff]
        %v1924 = vsel %vm713, %v1910, 0
        %v1927 = vsel %vm713, %v1911, 0
        %v1930 = vsel %vm713, %v1912, 0
        %v1933 = vsel %vm713, %v1913, 0
        %v1936 = vsel %vm713, %v1914, 0
        %v1939 = vsel %vm713, %v1915, 0
        %v1942 = vsel %vm713, %v1916, 0
        %v1945 = vsel %vm713, %v1917, 0
        %1947 = vmatprep.subr.mxu0 0.0
        %1948 = vmatpush1.msra.mxu0 %v1919
        %1949 = vmatprep.subr.mxu0 0.0
        %1950 = vmatpush1.msra.mxu0 %v1920
        %1951 = vmatprep.subr.mxu0 0.0
        %1952 = vmatpush1.msra.mxu0 %v1921
        %1953 = vmatprep.subr.mxu0 0.0
        %1954 = vmatpush1.msra.mxu0 %v1922
        %1955 = vmatprep.subr.mxu0 0.0
        %1956 = vmatpush1.msra.mxu0 0.0
        %1957 = vmatprep.subr.mxu0 0.0
        %1958 = vmatpush1.msra.mxu0 0.0
        %1959 = vmatprep.subr.mxu0 0.0
        %1960 = vmatpush1.msra.mxu0 0.0
        %1961 = vmatprep.subr.mxu0 0.0
        %1962 = vmatpush1.msra.mxu0 0.0
        %1963 = vmatprep.subr.mxu0 0.0
        %1964 = vmatpush1.msra.mxu0 0.0
        %1965 = vmatprep.subr.mxu0 0.0
        %1966 = vmatpush1.msra.mxu0 0.0
        %1967 = vmatprep.subr.mxu0 0.0
        %1968 = vmatpush1.msra.mxu0 0.0
        %1969 = vmatprep.subr.mxu0 0.0
        %1970 = vmatpush1.msra.mxu0 0.0
        %1971 = vmatprep.subr.mxu0 0.0
        %1972 = vmatpush1.msra.mxu0 0.0
        %1973 = vmatprep.subr.mxu0 0.0
        %1974 = vmatpush1.msra.mxu0 0.0
        %1975 = vmatprep.subr.mxu0 0.0
        %1976 = vmatpush1.msra.mxu0 0.0
        %1977 = vmatprep.subr.mxu0 0.0
        %1978 = vmatpush1.msra.mxu0 0.0
        %1979 = vmatprep.subr.mxu0 0.0
        %1980 = vmatpush1.msra.mxu0 0.0
        %1981 = vmatprep.subr.mxu0 0.0
        %1982 = vmatpush1.msra.mxu0 0.0
        %1983 = vmatprep.subr.mxu0 0.0
        %1984 = vmatpush1.msra.mxu0 0.0
        %1985 = vmatprep.subr.mxu0 0.0
        %1986 = vmatpush1.msra.mxu0 0.0
        %1987 = vmatprep.subr.mxu0 0.0
        %1988 = vmatpush1.msra.mxu0 0.0
        %1989 = vmatprep.subr.mxu0 0.0
        %1990 = vmatpush1.msra.mxu0 0.0
        %1991 = vmatprep.subr.mxu0 0.0
        %1992 = vmatpush1.msra.mxu0 0.0
        %1993 = vmatprep.subr.mxu0 0.0
        %1994 = vmatpush1.msra.mxu0 0.0
        %1995 = vmatprep.subr.mxu0 0.0
        %1996 = vmatpush1.msra.mxu0 0.0
        %1997 = vmatprep.subr.mxu0 0.0
        %1998 = vmatpush1.msra.mxu0 0.0
        %1999 = vmatprep.subr.mxu0 0.0
        %2000 = vmatpush1.msra.mxu0 0.0
        %2001 = vmatprep.subr.mxu0 0.0
        %2002 = vmatpush1.msra.mxu0 0.0
        %2003 = vmatprep.subr.mxu0 0.0
        %2004 = vmatpush1.msra.mxu0 0.0
        %2005 = vmatprep.subr.mxu0 0.0
        %2006 = vmatpush1.msra.mxu0 0.0
        %2007 = vmatprep.subr.mxu0 0.0
        %2008 = vmatpush1.msra.mxu0 0.0
        %2009 = vmatprep.subr.mxu0 0.0
        %2010 = vmatpush1.msra.mxu0 0.0
        %2011 = vmatprep.mubr.f32.mxu0 0.0
        %2012 = vmatmul.mubr.f32.gmra.mrb[0].mxu0 %v1924
        %v2013 = vpop.f32.mrb[0].mxu0
        %v2014 = vadd.f32 0.0, %v2013
        %v2015 = vpop.f32.mrb[0].mxu0
        %2016 = vmatprep.mubr.f32.mxu0 0.0
        %2017 = vmatmul.mubr.f32.gmra.mrb[0].mxu0 %v1927
        %v2018 = vpop.f32.mrb[0].mxu0
        %v2019 = vadd.f32 0.0, %v2018
        %v2020 = vpop.f32.mrb[0].mxu0
        %2021 = vmatprep.mubr.f32.mxu0 0.0
        %2022 = vmatmul.mubr.f32.gmra.mrb[0].mxu0 %v1930
        %v2023 = vpop.f32.mrb[0].mxu0
        %v2024 = vadd.f32 0.0, %v2023
        %v2025 = vpop.f32.mrb[0].mxu0
        %2026 = vmatprep.mubr.f32.mxu0 0.0
        %2027 = vmatmul.mubr.f32.gmra.mrb[0].mxu0 %v1933
        %v2028 = vpop.f32.mrb[0].mxu0
        %v2029 = vadd.f32 0.0, %v2028
        %v2030 = vpop.f32.mrb[0].mxu0
        %2031 = vmatprep.mubr.f32.mxu0 0.0
        %2032 = vmatmul.mubr.f32.gmra.mrb[0].mxu0 %v1936
        %v2033 = vpop.f32.mrb[0].mxu0
        %v2034 = vadd.f32 0.0, %v2033
        %v2035 = vpop.f32.mrb[0].mxu0
        %2036 = vmatprep.mubr.f32.mxu0 0.0
        %2037 = vmatmul.mubr.f32.gmra.mrb[0].mxu0 %v1939
        %v2038 = vpop.f32.mrb[0].mxu0
        %v2039 = vadd.f32 0.0, %v2038
        %v2040 = vpop.f32.mrb[0].mxu0
        %2041 = vmatprep.mubr.f32.mxu0 0.0
        %2042 = vmatmul.mubr.f32.gmra.mrb[0].mxu0 %v1942
        %v2043 = vpop.f32.mrb[0].mxu0
        %v2044 = vadd.f32 0.0, %v2043
        %v2045 = vpop.f32.mrb[0].mxu0
        %2046 = vmatprep.mubr.f32.mxu0 0.0
        %2047 = vmatmul.mubr.f32.gmra.mrb[0].mxu0 %v1945
        %v2048 = vpop.f32.mrb[0].mxu0
        %v2049 = vadd.f32 0.0, %v2048
        %v2050 = vpop.f32.mrb[0].mxu0
        %2051 = vdwg.mxu0
        %2052 = vxpose.xlu0.b32.start [1/16] %v2014, 128
        %2053 = vxpose.xlu0.b32.cont [2/16] %v2019, 128
        %2054 = vxpose.xlu0.b32.cont [3/16] %v2024, 128
        %2055 = vxpose.xlu0.b32.cont [4/16] %v2029, 128
        %2056 = vxpose.xlu0.b32.cont [5/16] %v2034, 128
        %2057 = vxpose.xlu0.b32.cont [6/16] %v2039, 128
        %2058 = vxpose.xlu0.b32.cont [7/16] %v2044, 128
        %2059 = vxpose.xlu0.b32.cont [8/16] %v2049, 128
        %2060 = vxpose.xlu0.b32.cont [9/16] 0.0, 128
        %2061 = vxpose.xlu0.b32.cont [10/16] 0.0, 128
        %2062 = vxpose.xlu0.b32.cont [11/16] 0.0, 128
        %2063 = vxpose.xlu0.b32.cont [12/16] 0.0, 128
        %2064 = vxpose.xlu0.b32.cont [13/16] 0.0, 128
        %2065 = vxpose.xlu0.b32.cont [14/16] 0.0, 128
        %2066 = vxpose.xlu0.b32.cont [15/16] 0.0, 128
        %2067 = vxpose.xlu0.b32.end [16/16] 0.0, 128
        %v2068 = vpop.trf.xlu0
        %v2069 = vpop.trf.xlu0
        %v2070 = vpop.trf.xlu0
        %v2071 = vpop.trf.xlu0
        %v2072 = vpop.trf.xlu0
        %v2073 = vpop.trf.xlu0
        %v2074 = vpop.trf.xlu0
        %v2075 = vpop.trf.xlu0
        %v2076 = vpop.trf.xlu0
        %v2077 = vpop.trf.xlu0
        %v2078 = vpop.trf.xlu0
        %v2079 = vpop.trf.xlu0
        %v2080 = vpop.trf.xlu0
        %v2081 = vpop.trf.xlu0
        %v2082 = vpop.trf.xlu0
        %v2083 = vpop.trf.xlu0
        %v2084 = vld [vmem:[%s406 + $0x1] sm:$0xff]
        %v2085 = vld [vmem:[%s406 + $0x11] sm:$0xff]
        %v2086 = vld [vmem:[%s406 + $0x21] sm:$0xff]
        %v2087 = vld [vmem:[%s406 + $0x31] sm:$0xff]
        %v2088 = vld [vmem:[%s406 + $0x41] sm:$0xff]
        %v2089 = vld [vmem:[%s406 + $0x51] sm:$0xff]
        %v2090 = vld [vmem:[%s406 + $0x61] sm:$0xff]
        %v2091 = vld [vmem:[%s406 + $0x71] sm:$0xff]
        %v2092 = vld [vmem:[%s406] sm:$0xff]
        %v2093 = vld [vmem:[%s406 + $0x10] sm:$0xff]
        %v2094 = vld [vmem:[%s406 + $0x20] sm:$0xff]
        %v2095 = vld [vmem:[%s406 + $0x30] sm:$0xff]
        %v2096 = vld [vmem:[%s406 + $0x40] sm:$0xff]
        %v2097 = vld [vmem:[%s406 + $0x50] sm:$0xff]
        %v2098 = vld [vmem:[%s406 + $0x60] sm:$0xff]
        %v2099 = vld [vmem:[%s406 + $0x70] sm:$0xff]
        %2108 = vrot.lane.b32.xlu0 %v2092, 8
        %v2109 = vpop.permute.xlu0 %2108
        %2110 = vrot.lane.b32.xlu0 %v2093, 8
        %v2111 = vpop.permute.xlu0 %2110
        %2112 = vrot.lane.b32.xlu0 %v2094, 8
        %v2113 = vpop.permute.xlu0 %2112
        %2114 = vrot.lane.b32.xlu0 %v2095, 8
        %v2115 = vpop.permute.xlu0 %2114
        %2116 = vrot.lane.b32.xlu0 %v2096, 8
        %v2117 = vpop.permute.xlu0 %2116
        %2118 = vrot.lane.b32.xlu0 %v2097, 8
        %v2119 = vpop.permute.xlu0 %2118
        %2120 = vrot.lane.b32.xlu0 %v2098, 8
        %v2121 = vpop.permute.xlu0 %2120
        %2122 = vrot.lane.b32.xlu0 %v2099, 8
        %v2123 = vpop.permute.xlu0 %2122
        %2132 = vrot.lane.b32.xlu0 %v1473, 16
        %v2133 = vpop.permute.xlu0 %2132
        %2134 = vrot.lane.b32.xlu0 %v1474, 16
        %v2135 = vpop.permute.xlu0 %2134
        %2136 = vrot.lane.b32.xlu0 %v1475, 16
        %v2137 = vpop.permute.xlu0 %2136
        %2138 = vrot.lane.b32.xlu0 %v1476, 16
        %v2139 = vpop.permute.xlu0 %2138
        %2140 = vrot.lane.b32.xlu0 %v1477, 16
        %v2141 = vpop.permute.xlu0 %2140
        %2142 = vrot.lane.b32.xlu0 %v1478, 16
        %v2143 = vpop.permute.xlu0 %2142
        %2144 = vrot.lane.b32.xlu0 %v1479, 16
        %v2145 = vpop.permute.xlu0 %2144
        %2146 = vrot.lane.b32.xlu0 %v1480, 16
        %v2147 = vpop.permute.xlu0 %2146
        %2156 = vrot.lane.b32.xlu0 %v1481, 24
        %v2157 = vpop.permute.xlu0 %2156
        %2158 = vrot.lane.b32.xlu0 %v1482, 24
        %v2159 = vpop.permute.xlu0 %2158
        %2160 = vrot.lane.b32.xlu0 %v1483, 24
        %v2161 = vpop.permute.xlu0 %2160
        %2162 = vrot.lane.b32.xlu0 %v1484, 24
        %v2163 = vpop.permute.xlu0 %2162
        %2164 = vrot.lane.b32.xlu0 %v1485, 24
        %v2165 = vpop.permute.xlu0 %2164
        %2166 = vrot.lane.b32.xlu0 %v1486, 24
        %v2167 = vpop.permute.xlu0 %2166
        %2168 = vrot.lane.b32.xlu0 %v1487, 24
        %v2169 = vpop.permute.xlu0 %2168
        %2170 = vrot.lane.b32.xlu0 %v1488, 24
        %v2171 = vpop.permute.xlu0 %2170
        %v2180 = vsel %vm319, %v2084, %v2109
        %v2181 = vsel %vm319, %v2085, %v2111
        %v2182 = vsel %vm319, %v2086, %v2113
        %v2183 = vsel %vm319, %v2087, %v2115
        %v2184 = vsel %vm319, %v2088, %v2117
        %v2185 = vsel %vm319, %v2089, %v2119
        %v2186 = vsel %vm319, %v2090, %v2121
        %v2187 = vsel %vm319, %v2091, %v2123
        %v2188 = vsel %vm695, %v2180, %v2133
        %v2189 = vsel %vm695, %v2181, %v2135
        %v2190 = vsel %vm695, %v2182, %v2137
        %v2191 = vsel %vm695, %v2183, %v2139
        %v2192 = vsel %vm695, %v2184, %v2141
        %v2193 = vsel %vm695, %v2185, %v2143
        %v2194 = vsel %vm695, %v2186, %v2145
        %v2195 = vsel %vm695, %v2187, %v2147
        %v2196 = vsel %vm704, %v2188, %v2157
        %v2197 = vsel %vm704, %v2189, %v2159
        %v2198 = vsel %vm704, %v2190, %v2161
        %v2199 = vsel %vm704, %v2191, %v2163
        %v2200 = vsel %vm704, %v2192, %v2165
        %v2201 = vsel %vm704, %v2193, %v2167
        %v2202 = vsel %vm704, %v2194, %v2169
        %v2203 = vsel %vm704, %v2195, %v2171
        %s2204 = scalar_lea.vmem %s5, 64
        %v2205 = vld [vmem:[%s2204] sm:$0xff]
        %v2206 = vld [vmem:[%s2204 + $0x8] sm:$0xff]
        %v2207 = vld [vmem:[%s2204 + $0x10] sm:$0xff]
        %v2208 = vld [vmem:[%s2204 + $0x18] sm:$0xff]
        %v2210 = vsel %vm713, %v2196, 0
        %v2213 = vsel %vm713, %v2197, 0
        %v2216 = vsel %vm713, %v2198, 0
        %v2219 = vsel %vm713, %v2199, 0
        %v2222 = vsel %vm713, %v2200, 0
        %v2225 = vsel %vm713, %v2201, 0
        %v2228 = vsel %vm713, %v2202, 0
        %v2231 = vsel %vm713, %v2203, 0
        %2233 = vmatprep.subr.mxu0 0.0
        %2234 = vmatpush1.msra.mxu0 %v2205
        %2235 = vmatprep.subr.mxu0 0.0
        %2236 = vmatpush1.msra.mxu0 %v2206
        %2237 = vmatprep.subr.mxu0 0.0
        %2238 = vmatpush1.msra.mxu0 %v2207
        %2239 = vmatprep.subr.mxu0 0.0
        %2240 = vmatpush1.msra.mxu0 %v2208
        %2241 = vmatprep.subr.mxu0 0.0
        %2242 = vmatpush1.msra.mxu0 0.0
        %2243 = vmatprep.subr.mxu0 0.0
        %2244 = vmatpush1.msra.mxu0 0.0
        %2245 = vmatprep.subr.mxu0 0.0
        %2246 = vmatpush1.msra.mxu0 0.0
        %2247 = vmatprep.subr.mxu0 0.0
        %2248 = vmatpush1.msra.mxu0 0.0
        %2249 = vmatprep.subr.mxu0 0.0
        %2250 = vmatpush1.msra.mxu0 0.0
        %2251 = vmatprep.subr.mxu0 0.0
        %2252 = vmatpush1.msra.mxu0 0.0
        %2253 = vmatprep.subr.mxu0 0.0
        %2254 = vmatpush1.msra.mxu0 0.0
        %2255 = vmatprep.subr.mxu0 0.0
        %2256 = vmatpush1.msra.mxu0 0.0
        %2257 = vmatprep.subr.mxu0 0.0
        %2258 = vmatpush1.msra.mxu0 0.0
        %2259 = vmatprep.subr.mxu0 0.0
        %2260 = vmatpush1.msra.mxu0 0.0
        %2261 = vmatprep.subr.mxu0 0.0
        %2262 = vmatpush1.msra.mxu0 0.0
        %2263 = vmatprep.subr.mxu0 0.0
        %2264 = vmatpush1.msra.mxu0 0.0
        %2265 = vmatprep.subr.mxu0 0.0
        %2266 = vmatpush1.msra.mxu0 0.0
        %2267 = vmatprep.subr.mxu0 0.0
        %2268 = vmatpush1.msra.mxu0 0.0
        %2269 = vmatprep.subr.mxu0 0.0
        %2270 = vmatpush1.msra.mxu0 0.0
        %2271 = vmatprep.subr.mxu0 0.0
        %2272 = vmatpush1.msra.mxu0 0.0
        %2273 = vmatprep.subr.mxu0 0.0
        %2274 = vmatpush1.msra.mxu0 0.0
        %2275 = vmatprep.subr.mxu0 0.0
        %2276 = vmatpush1.msra.mxu0 0.0
        %2277 = vmatprep.subr.mxu0 0.0
        %2278 = vmatpush1.msra.mxu0 0.0
        %2279 = vmatprep.subr.mxu0 0.0
        %2280 = vmatpush1.msra.mxu0 0.0
        %2281 = vmatprep.subr.mxu0 0.0
        %2282 = vmatpush1.msra.mxu0 0.0
        %2283 = vmatprep.subr.mxu0 0.0
        %2284 = vmatpush1.msra.mxu0 0.0
        %2285 = vmatprep.subr.mxu0 0.0
        %2286 = vmatpush1.msra.mxu0 0.0
        %2287 = vmatprep.subr.mxu0 0.0
        %2288 = vmatpush1.msra.mxu0 0.0
        %2289 = vmatprep.subr.mxu0 0.0
        %2290 = vmatpush1.msra.mxu0 0.0
        %2291 = vmatprep.subr.mxu0 0.0
        %2292 = vmatpush1.msra.mxu0 0.0
        %2293 = vmatprep.subr.mxu0 0.0
        %2294 = vmatpush1.msra.mxu0 0.0
        %2295 = vmatprep.subr.mxu0 0.0
        %2296 = vmatpush1.msra.mxu0 0.0
        %2297 = vmatprep.mubr.f32.mxu0 0.0
        %2298 = vmatmul.mubr.f32.gmra.mrb[0].mxu0 %v2210
        %v2299 = vpop.f32.mrb[0].mxu0
        %v2300 = vadd.f32 0.0, %v2299
        %v2301 = vpop.f32.mrb[0].mxu0
        %2302 = vmatprep.mubr.f32.mxu0 0.0
        %2303 = vmatmul.mubr.f32.gmra.mrb[0].mxu0 %v2213
        %v2304 = vpop.f32.mrb[0].mxu0
        %v2305 = vadd.f32 0.0, %v2304
        %v2306 = vpop.f32.mrb[0].mxu0
        %2307 = vmatprep.mubr.f32.mxu0 0.0
        %2308 = vmatmul.mubr.f32.gmra.mrb[0].mxu0 %v2216
        %v2309 = vpop.f32.mrb[0].mxu0
        %v2310 = vadd.f32 0.0, %v2309
        %v2311 = vpop.f32.mrb[0].mxu0
        %2312 = vmatprep.mubr.f32.mxu0 0.0
        %2313 = vmatmul.mubr.f32.gmra.mrb[0].mxu0 %v2219
        %v2314 = vpop.f32.mrb[0].mxu0
        %v2315 = vadd.f32 0.0, %v2314
        %v2316 = vpop.f32.mrb[0].mxu0
        %2317 = vmatprep.mubr.f32.mxu0 0.0
        %2318 = vmatmul.mubr.f32.gmra.mrb[0].mxu0 %v2222
        %v2319 = vpop.f32.mrb[0].mxu0
        %v2320 = vadd.f32 0.0, %v2319
        %v2321 = vpop.f32.mrb[0].mxu0
        %2322 = vmatprep.mubr.f32.mxu0 0.0
        %2323 = vmatmul.mubr.f32.gmra.mrb[0].mxu0 %v2225
        %v2324 = vpop.f32.mrb[0].mxu0
        %v2325 = vadd.f32 0.0, %v2324
        %v2326 = vpop.f32.mrb[0].mxu0
        %2327 = vmatprep.mubr.f32.mxu0 0.0
        %2328 = vmatmul.mubr.f32.gmra.mrb[0].mxu0 %v2228
        %v2329 = vpop.f32.mrb[0].mxu0
        %v2330 = vadd.f32 0.0, %v2329
        %v2331 = vpop.f32.mrb[0].mxu0
        %2332 = vmatprep.mubr.f32.mxu0 0.0
        %2333 = vmatmul.mubr.f32.gmra.mrb[0].mxu0 %v2231
        %v2334 = vpop.f32.mrb[0].mxu0
        %v2335 = vadd.f32 0.0, %v2334
        %v2336 = vpop.f32.mrb[0].mxu0
        %2337 = vdwg.mxu0
        %2338 = vxpose.xlu0.b32.start [1/16] %v2300, 128
        %2339 = vxpose.xlu0.b32.cont [2/16] %v2305, 128
        %2340 = vxpose.xlu0.b32.cont [3/16] %v2310, 128
        %2341 = vxpose.xlu0.b32.cont [4/16] %v2315, 128
        %2342 = vxpose.xlu0.b32.cont [5/16] %v2320, 128
        %2343 = vxpose.xlu0.b32.cont [6/16] %v2325, 128
        %2344 = vxpose.xlu0.b32.cont [7/16] %v2330, 128
        %2345 = vxpose.xlu0.b32.cont [8/16] %v2335, 128
        %2346 = vxpose.xlu0.b32.cont [9/16] 0.0, 128
        %2347 = vxpose.xlu0.b32.cont [10/16] 0.0, 128
        %2348 = vxpose.xlu0.b32.cont [11/16] 0.0, 128
        %2349 = vxpose.xlu0.b32.cont [12/16] 0.0, 128
        %2350 = vxpose.xlu0.b32.cont [13/16] 0.0, 128
        %2351 = vxpose.xlu0.b32.cont [14/16] 0.0, 128
        %2352 = vxpose.xlu0.b32.cont [15/16] 0.0, 128
        %2353 = vxpose.xlu0.b32.end [16/16] 0.0, 128
        %v2354 = vpop.trf.xlu0
        %v2355 = vpop.trf.xlu0
        %v2356 = vpop.trf.xlu0
        %v2357 = vpop.trf.xlu0
        %v2358 = vpop.trf.xlu0
        %v2359 = vpop.trf.xlu0
        %v2360 = vpop.trf.xlu0
        %v2361 = vpop.trf.xlu0
        %v2362 = vpop.trf.xlu0
        %v2363 = vpop.trf.xlu0
        %v2364 = vpop.trf.xlu0
        %v2365 = vpop.trf.xlu0
        %v2366 = vpop.trf.xlu0
        %v2367 = vpop.trf.xlu0
        %v2368 = vpop.trf.xlu0
        %v2369 = vpop.trf.xlu0
        %v2370 = vld [vmem:[%s406 + $0x2] sm:$0xff]
        %v2371 = vld [vmem:[%s406 + $0x12] sm:$0xff]
        %v2372 = vld [vmem:[%s406 + $0x22] sm:$0xff]
        %v2373 = vld [vmem:[%s406 + $0x32] sm:$0xff]
        %v2374 = vld [vmem:[%s406 + $0x42] sm:$0xff]
        %v2375 = vld [vmem:[%s406 + $0x52] sm:$0xff]
        %v2376 = vld [vmem:[%s406 + $0x62] sm:$0xff]
        %v2377 = vld [vmem:[%s406 + $0x72] sm:$0xff]
        %2386 = vrot.lane.b32.xlu0 %v2084, 8
        %v2387 = vpop.permute.xlu0 %2386
        %2388 = vrot.lane.b32.xlu0 %v2085, 8
        %v2389 = vpop.permute.xlu0 %2388
        %2390 = vrot.lane.b32.xlu0 %v2086, 8
        %v2391 = vpop.permute.xlu0 %2390
        %2392 = vrot.lane.b32.xlu0 %v2087, 8
        %v2393 = vpop.permute.xlu0 %2392
        %2394 = vrot.lane.b32.xlu0 %v2088, 8
        %v2395 = vpop.permute.xlu0 %2394
        %2396 = vrot.lane.b32.xlu0 %v2089, 8
        %v2397 = vpop.permute.xlu0 %2396
        %2398 = vrot.lane.b32.xlu0 %v2090, 8
        %v2399 = vpop.permute.xlu0 %2398
        %2400 = vrot.lane.b32.xlu0 %v2091, 8
        %v2401 = vpop.permute.xlu0 %2400
        %2418 = vrot.lane.b32.xlu0 %v1790, 16
        %v2419 = vpop.permute.xlu0 %2418
        %2420 = vrot.lane.b32.xlu0 %v1791, 16
        %v2421 = vpop.permute.xlu0 %2420
        %2422 = vrot.lane.b32.xlu0 %v1792, 16
        %v2423 = vpop.permute.xlu0 %2422
        %2424 = vrot.lane.b32.xlu0 %v1793, 16
        %v2425 = vpop.permute.xlu0 %2424
        %2426 = vrot.lane.b32.xlu0 %v1794, 16
        %v2427 = vpop.permute.xlu0 %2426
        %2428 = vrot.lane.b32.xlu0 %v1795, 16
        %v2429 = vpop.permute.xlu0 %2428
        %2430 = vrot.lane.b32.xlu0 %v1796, 16
        %v2431 = vpop.permute.xlu0 %2430
        %2432 = vrot.lane.b32.xlu0 %v1797, 16
        %v2433 = vpop.permute.xlu0 %2432
        %2442 = vrot.lane.b32.xlu0 %v1473, 24
        %v2443 = vpop.permute.xlu0 %2442
        %2444 = vrot.lane.b32.xlu0 %v1474, 24
        %v2445 = vpop.permute.xlu0 %2444
        %2446 = vrot.lane.b32.xlu0 %v1475, 24
        %v2447 = vpop.permute.xlu0 %2446
        %2448 = vrot.lane.b32.xlu0 %v1476, 24
        %v2449 = vpop.permute.xlu0 %2448
        %2450 = vrot.lane.b32.xlu0 %v1477, 24
        %v2451 = vpop.permute.xlu0 %2450
        %2452 = vrot.lane.b32.xlu0 %v1478, 24
        %v2453 = vpop.permute.xlu0 %2452
        %2454 = vrot.lane.b32.xlu0 %v1479, 24
        %v2455 = vpop.permute.xlu0 %2454
        %2456 = vrot.lane.b32.xlu0 %v1480, 24
        %v2457 = vpop.permute.xlu0 %2456
        %v2466 = vsel %vm319, %v2370, %v2387
        %v2467 = vsel %vm319, %v2371, %v2389
        %v2468 = vsel %vm319, %v2372, %v2391
        %v2469 = vsel %vm319, %v2373, %v2393
        %v2470 = vsel %vm319, %v2374, %v2395
        %v2471 = vsel %vm319, %v2375, %v2397
        %v2472 = vsel %vm319, %v2376, %v2399
        %v2473 = vsel %vm319, %v2377, %v2401
        %v2474 = vsel %vm695, %v2466, %v2419
        %v2475 = vsel %vm695, %v2467, %v2421
        %v2476 = vsel %vm695, %v2468, %v2423
        %v2477 = vsel %vm695, %v2469, %v2425
        %v2478 = vsel %vm695, %v2470, %v2427
        %v2479 = vsel %vm695, %v2471, %v2429
        %v2480 = vsel %vm695, %v2472, %v2431
        %v2481 = vsel %vm695, %v2473, %v2433
        %v2482 = vsel %vm704, %v2474, %v2443
        %v2483 = vsel %vm704, %v2475, %v2445
        %v2484 = vsel %vm704, %v2476, %v2447
        %v2485 = vsel %vm704, %v2477, %v2449
        %v2486 = vsel %vm704, %v2478, %v2451
        %v2487 = vsel %vm704, %v2479, %v2453
        %v2488 = vsel %vm704, %v2480, %v2455
        %v2489 = vsel %vm704, %v2481, %v2457
        %s2490 = scalar_lea.vmem %s5, 96
        %v2491 = vld [vmem:[%s2490] sm:$0xff]
        %v2492 = vld [vmem:[%s2490 + $0x8] sm:$0xff]
        %v2493 = vld [vmem:[%s2490 + $0x10] sm:$0xff]
        %v2494 = vld [vmem:[%s2490 + $0x18] sm:$0xff]
        %v2496 = vsel %vm713, %v2482, 0
        %v2499 = vsel %vm713, %v2483, 0
        %v2502 = vsel %vm713, %v2484, 0
        %v2505 = vsel %vm713, %v2485, 0
        %v2508 = vsel %vm713, %v2486, 0
        %v2511 = vsel %vm713, %v2487, 0
        %v2514 = vsel %vm713, %v2488, 0
        %v2517 = vsel %vm713, %v2489, 0
        %2519 = vmatprep.subr.mxu0 0.0
        %2520 = vmatpush1.msra.mxu0 %v2491
        %2521 = vmatprep.subr.mxu0 0.0
        %2522 = vmatpush1.msra.mxu0 %v2492
        %2523 = vmatprep.subr.mxu0 0.0
        %2524 = vmatpush1.msra.mxu0 %v2493
        %2525 = vmatprep.subr.mxu0 0.0
        %2526 = vmatpush1.msra.mxu0 %v2494
        %2527 = vmatprep.subr.mxu0 0.0
        %2528 = vmatpush1.msra.mxu0 0.0
        %2529 = vmatprep.subr.mxu0 0.0
        %2530 = vmatpush1.msra.mxu0 0.0
        %2531 = vmatprep.subr.mxu0 0.0
        %2532 = vmatpush1.msra.mxu0 0.0
        %2533 = vmatprep.subr.mxu0 0.0
        %2534 = vmatpush1.msra.mxu0 0.0
        %2535 = vmatprep.subr.mxu0 0.0
        %2536 = vmatpush1.msra.mxu0 0.0
        %2537 = vmatprep.subr.mxu0 0.0
        %2538 = vmatpush1.msra.mxu0 0.0
        %2539 = vmatprep.subr.mxu0 0.0
        %2540 = vmatpush1.msra.mxu0 0.0
        %2541 = vmatprep.subr.mxu0 0.0
        %2542 = vmatpush1.msra.mxu0 0.0
        %2543 = vmatprep.subr.mxu0 0.0
        %2544 = vmatpush1.msra.mxu0 0.0
        %2545 = vmatprep.subr.mxu0 0.0
        %2546 = vmatpush1.msra.mxu0 0.0
        %2547 = vmatprep.subr.mxu0 0.0
        %2548 = vmatpush1.msra.mxu0 0.0
        %2549 = vmatprep.subr.mxu0 0.0
        %2550 = vmatpush1.msra.mxu0 0.0
        %2551 = vmatprep.subr.mxu0 0.0
        %2552 = vmatpush1.msra.mxu0 0.0
        %2553 = vmatprep.subr.mxu0 0.0
        %2554 = vmatpush1.msra.mxu0 0.0
        %2555 = vmatprep.subr.mxu0 0.0
        %2556 = vmatpush1.msra.mxu0 0.0
        %2557 = vmatprep.subr.mxu0 0.0
        %2558 = vmatpush1.msra.mxu0 0.0
        %2559 = vmatprep.subr.mxu0 0.0
        %2560 = vmatpush1.msra.mxu0 0.0
        %2561 = vmatprep.subr.mxu0 0.0
        %2562 = vmatpush1.msra.mxu0 0.0
        %2563 = vmatprep.subr.mxu0 0.0
        %2564 = vmatpush1.msra.mxu0 0.0
        %2565 = vmatprep.subr.mxu0 0.0
        %2566 = vmatpush1.msra.mxu0 0.0
        %2567 = vmatprep.subr.mxu0 0.0
        %2568 = vmatpush1.msra.mxu0 0.0
        %2569 = vmatprep.subr.mxu0 0.0
        %2570 = vmatpush1.msra.mxu0 0.0
        %2571 = vmatprep.subr.mxu0 0.0
        %2572 = vmatpush1.msra.mxu0 0.0
        %2573 = vmatprep.subr.mxu0 0.0
        %2574 = vmatpush1.msra.mxu0 0.0
        %2575 = vmatprep.subr.mxu0 0.0
        %2576 = vmatpush1.msra.mxu0 0.0
        %2577 = vmatprep.subr.mxu0 0.0
        %2578 = vmatpush1.msra.mxu0 0.0
        %2579 = vmatprep.subr.mxu0 0.0
        %2580 = vmatpush1.msra.mxu0 0.0
        %2581 = vmatprep.subr.mxu0 0.0
        %2582 = vmatpush1.msra.mxu0 0.0
        %2583 = vmatprep.mubr.f32.mxu0 0.0
        %2584 = vmatmul.mubr.f32.gmra.mrb[0].mxu0 %v2496
        %v2585 = vpop.f32.mrb[0].mxu0
        %v2586 = vadd.f32 0.0, %v2585
        %v2587 = vpop.f32.mrb[0].mxu0
        %2588 = vmatprep.mubr.f32.mxu0 0.0
        %2589 = vmatmul.mubr.f32.gmra.mrb[0].mxu0 %v2499
        %v2590 = vpop.f32.mrb[0].mxu0
        %v2591 = vadd.f32 0.0, %v2590
        %v2592 = vpop.f32.mrb[0].mxu0
        %2593 = vmatprep.mubr.f32.mxu0 0.0
        %2594 = vmatmul.mubr.f32.gmra.mrb[0].mxu0 %v2502
        %v2595 = vpop.f32.mrb[0].mxu0
        %v2596 = vadd.f32 0.0, %v2595
        %v2597 = vpop.f32.mrb[0].mxu0
        %2598 = vmatprep.mubr.f32.mxu0 0.0
        %2599 = vmatmul.mubr.f32.gmra.mrb[0].mxu0 %v2505
        %v2600 = vpop.f32.mrb[0].mxu0
        %v2601 = vadd.f32 0.0, %v2600
        %v2602 = vpop.f32.mrb[0].mxu0
        %2603 = vmatprep.mubr.f32.mxu0 0.0
        %2604 = vmatmul.mubr.f32.gmra.mrb[0].mxu0 %v2508
        %v2605 = vpop.f32.mrb[0].mxu0
        %v2606 = vadd.f32 0.0, %v2605
        %v2607 = vpop.f32.mrb[0].mxu0
        %2608 = vmatprep.mubr.f32.mxu0 0.0
        %2609 = vmatmul.mubr.f32.gmra.mrb[0].mxu0 %v2511
        %v2610 = vpop.f32.mrb[0].mxu0
        %v2611 = vadd.f32 0.0, %v2610
        %v2612 = vpop.f32.mrb[0].mxu0
        %2613 = vmatprep.mubr.f32.mxu0 0.0
        %2614 = vmatmul.mubr.f32.gmra.mrb[0].mxu0 %v2514
        %v2615 = vpop.f32.mrb[0].mxu0
        %v2616 = vadd.f32 0.0, %v2615
        %v2617 = vpop.f32.mrb[0].mxu0
        %2618 = vmatprep.mubr.f32.mxu0 0.0
        %2619 = vmatmul.mubr.f32.gmra.mrb[0].mxu0 %v2517
        %v2620 = vpop.f32.mrb[0].mxu0
        %v2621 = vadd.f32 0.0, %v2620
        %v2622 = vpop.f32.mrb[0].mxu0
        %2623 = vdwg.mxu0
        %2624 = vxpose.xlu0.b32.start [1/16] %v2586, 128
        %2625 = vxpose.xlu0.b32.cont [2/16] %v2591, 128
        %2626 = vxpose.xlu0.b32.cont [3/16] %v2596, 128
        %2627 = vxpose.xlu0.b32.cont [4/16] %v2601, 128
        %2628 = vxpose.xlu0.b32.cont [5/16] %v2606, 128
        %2629 = vxpose.xlu0.b32.cont [6/16] %v2611, 128
        %2630 = vxpose.xlu0.b32.cont [7/16] %v2616, 128
        %2631 = vxpose.xlu0.b32.cont [8/16] %v2621, 128
        %2632 = vxpose.xlu0.b32.cont [9/16] 0.0, 128
        %2633 = vxpose.xlu0.b32.cont [10/16] 0.0, 128
        %2634 = vxpose.xlu0.b32.cont [11/16] 0.0, 128
        %2635 = vxpose.xlu0.b32.cont [12/16] 0.0, 128
        %2636 = vxpose.xlu0.b32.cont [13/16] 0.0, 128
        %2637 = vxpose.xlu0.b32.cont [14/16] 0.0, 128
        %2638 = vxpose.xlu0.b32.cont [15/16] 0.0, 128
        %2639 = vxpose.xlu0.b32.end [16/16] 0.0, 128
        %v2640 = vpop.trf.xlu0
        %v2641 = vpop.trf.xlu0
        %v2642 = vpop.trf.xlu0
        %v2643 = vpop.trf.xlu0
        %v2644 = vpop.trf.xlu0
        %v2645 = vpop.trf.xlu0
        %v2646 = vpop.trf.xlu0
        %v2647 = vpop.trf.xlu0
        %v2648 = vpop.trf.xlu0
        %v2649 = vpop.trf.xlu0
        %v2650 = vpop.trf.xlu0
        %v2651 = vpop.trf.xlu0
        %v2652 = vpop.trf.xlu0
        %v2653 = vpop.trf.xlu0
        %v2654 = vpop.trf.xlu0
        %v2655 = vpop.trf.xlu0
        %2657 = vrot.lane.b32.xlu0 %v2068, 64
        %v2658 = vpop.permute.xlu0 %2657
        %2661 = vrot.lane.b32.xlu0 %v2640, 64
        %v2662 = vpop.permute.xlu0 %2661
        %v2664 = vsel %vm749, %v1774, %v2658
        %v2665 = vsel %vm749, %v2354, %v2662
        %v2666 = vld [vmem:[#allocation3] sm:$0xff]
        %v2667 = vld [vmem:[#allocation3 + $0x8] sm:$0xff]
        %v2668 = vld [vmem:[#allocation3 + $0x10] sm:$0xff]
        %v2669 = vld [vmem:[#allocation3 + $0x18] sm:$0xff]
        %v2670 = vld [vmem:[#allocation3 + $0x20] sm:$0xff]
        %v2671 = vld [vmem:[#allocation3 + $0x28] sm:$0xff]
        %v2672 = vld [vmem:[#allocation3 + $0x30] sm:$0xff]
        %v2673 = vld [vmem:[#allocation3 + $0x38] sm:$0xff]
        %v2674 = vld [vmem:[#allocation3 + $0x40] sm:$0xff]
        %v2675 = vld [vmem:[#allocation3 + $0x48] sm:$0xff]
        %v2676 = vld [vmem:[#allocation3 + $0x50] sm:$0xff]
        %v2677 = vld [vmem:[#allocation3 + $0x58] sm:$0xff]
        %v2678 = vld [vmem:[#allocation3 + $0x60] sm:$0xff]
        %v2679 = vld [vmem:[#allocation3 + $0x68] sm:$0xff]
        %v2680 = vld [vmem:[#allocation3 + $0x70] sm:$0xff]
        %v2681 = vld [vmem:[#allocation3 + $0x78] sm:$0xff]
        %v2682 = vld [vmem:[#allocation3 + $0x80] sm:$0xff]
        %v2683 = vld [vmem:[#allocation3 + $0x88] sm:$0xff]
        %v2684 = vld [vmem:[#allocation3 + $0x90] sm:$0xff]
        %v2685 = vld [vmem:[#allocation3 + $0x98] sm:$0xff]
        %v2686 = vld [vmem:[#allocation3 + $0xa0] sm:$0xff]
        %v2687 = vld [vmem:[#allocation3 + $0xa8] sm:$0xff]
        %v2688 = vld [vmem:[#allocation3 + $0xb0] sm:$0xff]
        %v2689 = vld [vmem:[#allocation3 + $0xb8] sm:$0xff]
        %v2690 = vld [vmem:[#allocation3 + $0xc0] sm:$0xff]
        %v2691 = vld [vmem:[#allocation3 + $0xc8] sm:$0xff]
        %v2692 = vld [vmem:[#allocation3 + $0xd0] sm:$0xff]
        %v2693 = vld [vmem:[#allocation3 + $0xd8] sm:$0xff]
        %v2694 = vld [vmem:[#allocation3 + $0xe0] sm:$0xff]
        %v2695 = vld [vmem:[#allocation3 + $0xe8] sm:$0xff]
        %v2696 = vld [vmem:[#allocation3 + $0xf0] sm:$0xff]
        %v2697 = vld [vmem:[#allocation3 + $0xf8] sm:$0xff]
        %v2698 = vld [vmem:[#allocation3 + $0x100] sm:$0xff]
        %v2699 = vld [vmem:[#allocation3 + $0x108] sm:$0xff]
        %v2700 = vld [vmem:[#allocation3 + $0x110] sm:$0xff]
        %v2701 = vld [vmem:[#allocation3 + $0x118] sm:$0xff]
        %v2702 = vld [vmem:[#allocation3 + $0x120] sm:$0xff]
        %v2703 = vld [vmem:[#allocation3 + $0x128] sm:$0xff]
        %v2704 = vld [vmem:[#allocation3 + $0x130] sm:$0xff]
        %v2705 = vld [vmem:[#allocation3 + $0x138] sm:$0xff]
        %v2706 = vld [vmem:[#allocation3 + $0x140] sm:$0xff]
        %v2707 = vld [vmem:[#allocation3 + $0x148] sm:$0xff]
        %v2708 = vld [vmem:[#allocation3 + $0x150] sm:$0xff]
        %v2709 = vld [vmem:[#allocation3 + $0x158] sm:$0xff]
        %v2710 = vld [vmem:[#allocation3 + $0x160] sm:$0xff]
        %v2711 = vld [vmem:[#allocation3 + $0x168] sm:$0xff]
        %v2712 = vld [vmem:[#allocation3 + $0x170] sm:$0xff]
        %v2713 = vld [vmem:[#allocation3 + $0x178] sm:$0xff]
        %v2714 = vld [vmem:[#allocation3 + $0x180] sm:$0xff]
        %v2715 = vld [vmem:[#allocation3 + $0x188] sm:$0xff]
        %v2716 = vld [vmem:[#allocation3 + $0x190] sm:$0xff]
        %v2717 = vld [vmem:[#allocation3 + $0x198] sm:$0xff]
        %v2718 = vld [vmem:[#allocation3 + $0x1a0] sm:$0xff]
        %v2719 = vld [vmem:[#allocation3 + $0x1a8] sm:$0xff]
        %v2720 = vld [vmem:[#allocation3 + $0x1b0] sm:$0xff]
        %v2721 = vld [vmem:[#allocation3 + $0x1b8] sm:$0xff]
        %v2722 = vld [vmem:[#allocation3 + $0x1c0] sm:$0xff]
        %v2723 = vld [vmem:[#allocation3 + $0x1c8] sm:$0xff]
        %v2724 = vld [vmem:[#allocation3 + $0x1d0] sm:$0xff]
        %v2725 = vld [vmem:[#allocation3 + $0x1d8] sm:$0xff]
        %v2726 = vld [vmem:[#allocation3 + $0x1e0] sm:$0xff]
        %v2727 = vld [vmem:[#allocation3 + $0x1e8] sm:$0xff]
        %v2728 = vld [vmem:[#allocation3 + $0x1f0] sm:$0xff]
        %v2729 = vld [vmem:[#allocation3 + $0x1f8] sm:$0xff]
        %v2730 = vld [vmem:[#allocation3 + $0x200] sm:$0xff]
        %v2731 = vld [vmem:[#allocation3 + $0x208] sm:$0xff]
        %v2732 = vld [vmem:[#allocation3 + $0x210] sm:$0xff]
        %v2733 = vld [vmem:[#allocation3 + $0x218] sm:$0xff]
        %v2734 = vld [vmem:[#allocation3 + $0x220] sm:$0xff]
        %v2735 = vld [vmem:[#allocation3 + $0x228] sm:$0xff]
        %v2736 = vld [vmem:[#allocation3 + $0x230] sm:$0xff]
        %v2737 = vld [vmem:[#allocation3 + $0x238] sm:$0xff]
        %v2738 = vld [vmem:[#allocation3 + $0x240] sm:$0xff]
        %v2739 = vld [vmem:[#allocation3 + $0x248] sm:$0xff]
        %v2740 = vld [vmem:[#allocation3 + $0x250] sm:$0xff]
        %v2741 = vld [vmem:[#allocation3 + $0x258] sm:$0xff]
        %v2742 = vld [vmem:[#allocation3 + $0x260] sm:$0xff]
        %v2743 = vld [vmem:[#allocation3 + $0x268] sm:$0xff]
        %v2744 = vld [vmem:[#allocation3 + $0x270] sm:$0xff]
        %v2745 = vld [vmem:[#allocation3 + $0x278] sm:$0xff]
        %v2746 = vld [vmem:[#allocation3 + $0x280] sm:$0xff]
        %v2747 = vld [vmem:[#allocation3 + $0x288] sm:$0xff]
        %v2748 = vld [vmem:[#allocation3 + $0x290] sm:$0xff]
        %v2749 = vld [vmem:[#allocation3 + $0x298] sm:$0xff]
        %v2750 = vld [vmem:[#allocation3 + $0x2a0] sm:$0xff]
        %v2751 = vld [vmem:[#allocation3 + $0x2a8] sm:$0xff]
        %v2752 = vld [vmem:[#allocation3 + $0x2b0] sm:$0xff]
        %v2753 = vld [vmem:[#allocation3 + $0x2b8] sm:$0xff]
        %v2754 = vld [vmem:[#allocation3 + $0x2c0] sm:$0xff]
        %v2755 = vld [vmem:[#allocation3 + $0x2c8] sm:$0xff]
        %v2756 = vld [vmem:[#allocation3 + $0x2d0] sm:$0xff]
        %v2757 = vld [vmem:[#allocation3 + $0x2d8] sm:$0xff]
        %v2758 = vld [vmem:[#allocation3 + $0x2e0] sm:$0xff]
        %v2759 = vld [vmem:[#allocation3 + $0x2e8] sm:$0xff]
        %v2760 = vld [vmem:[#allocation3 + $0x2f0] sm:$0xff]
        %v2761 = vld [vmem:[#allocation3 + $0x2f8] sm:$0xff]
        %v2762 = vld [vmem:[#allocation3 + $0x300] sm:$0xff]
        %v2763 = vld [vmem:[#allocation3 + $0x308] sm:$0xff]
        %v2764 = vld [vmem:[#allocation3 + $0x310] sm:$0xff]
        %v2765 = vld [vmem:[#allocation3 + $0x318] sm:$0xff]
        %v2766 = vld [vmem:[#allocation3 + $0x320] sm:$0xff]
        %v2767 = vld [vmem:[#allocation3 + $0x328] sm:$0xff]
        %v2768 = vld [vmem:[#allocation3 + $0x330] sm:$0xff]
        %v2769 = vld [vmem:[#allocation3 + $0x338] sm:$0xff]
        %v2770 = vld [vmem:[#allocation3 + $0x340] sm:$0xff]
        %v2771 = vld [vmem:[#allocation3 + $0x348] sm:$0xff]
        %v2772 = vld [vmem:[#allocation3 + $0x350] sm:$0xff]
        %v2773 = vld [vmem:[#allocation3 + $0x358] sm:$0xff]
        %v2774 = vld [vmem:[#allocation3 + $0x360] sm:$0xff]
        %v2775 = vld [vmem:[#allocation3 + $0x368] sm:$0xff]
        %v2776 = vld [vmem:[#allocation3 + $0x370] sm:$0xff]
        %v2777 = vld [vmem:[#allocation3 + $0x378] sm:$0xff]
        %v2778 = vld [vmem:[#allocation3 + $0x380] sm:$0xff]
        %v2779 = vld [vmem:[#allocation3 + $0x388] sm:$0xff]
        %v2780 = vld [vmem:[#allocation3 + $0x390] sm:$0xff]
        %v2781 = vld [vmem:[#allocation3 + $0x398] sm:$0xff]
        %v2782 = vld [vmem:[#allocation3 + $0x3a0] sm:$0xff]
        %v2783 = vld [vmem:[#allocation3 + $0x3a8] sm:$0xff]
        %v2784 = vld [vmem:[#allocation3 + $0x3b0] sm:$0xff]
        %v2785 = vld [vmem:[#allocation3 + $0x3b8] sm:$0xff]
        %v2786 = vld [vmem:[#allocation3 + $0x3c0] sm:$0xff]
        %v2787 = vld [vmem:[#allocation3 + $0x3c8] sm:$0xff]
        %v2788 = vld [vmem:[#allocation3 + $0x3d0] sm:$0xff]
        %v2789 = vld [vmem:[#allocation3 + $0x3d8] sm:$0xff]
        %v2790 = vld [vmem:[#allocation3 + $0x3e0] sm:$0xff]
        %v2791 = vld [vmem:[#allocation3 + $0x3e8] sm:$0xff]
        %v2792 = vld [vmem:[#allocation3 + $0x3f0] sm:$0xff]
        %v2793 = vld [vmem:[#allocation3 + $0x3f8] sm:$0xff]
        %v2794 = vld [vmem:[#allocation3 + $0x400] sm:$0xff]
        %v2795 = vld [vmem:[#allocation3 + $0x408] sm:$0xff]
        %v2796 = vld [vmem:[#allocation3 + $0x410] sm:$0xff]
        %v2797 = vld [vmem:[#allocation3 + $0x418] sm:$0xff]
        %v2798 = vld [vmem:[#allocation3 + $0x420] sm:$0xff]
        %v2799 = vld [vmem:[#allocation3 + $0x428] sm:$0xff]
        %v2800 = vld [vmem:[#allocation3 + $0x430] sm:$0xff]
        %v2801 = vld [vmem:[#allocation3 + $0x438] sm:$0xff]
        %v2802 = vld [vmem:[#allocation3 + $0x440] sm:$0xff]
        %v2803 = vld [vmem:[#allocation3 + $0x448] sm:$0xff]
        %v2804 = vld [vmem:[#allocation3 + $0x450] sm:$0xff]
        %v2805 = vld [vmem:[#allocation3 + $0x458] sm:$0xff]
        %v2806 = vld [vmem:[#allocation3 + $0x460] sm:$0xff]
        %v2807 = vld [vmem:[#allocation3 + $0x468] sm:$0xff]
        %v2808 = vld [vmem:[#allocation3 + $0x470] sm:$0xff]
        %v2809 = vld [vmem:[#allocation3 + $0x478] sm:$0xff]
        %v2810 = vld [vmem:[#allocation3 + $0x480] sm:$0xff]
        %v2811 = vld [vmem:[#allocation3 + $0x488] sm:$0xff]
        %v2812 = vld [vmem:[#allocation3 + $0x490] sm:$0xff]
        %v2813 = vld [vmem:[#allocation3 + $0x498] sm:$0xff]
        %v2814 = vld [vmem:[#allocation3 + $0x4a0] sm:$0xff]
        %v2815 = vld [vmem:[#allocation3 + $0x4a8] sm:$0xff]
        %v2816 = vld [vmem:[#allocation3 + $0x4b0] sm:$0xff]
        %v2817 = vld [vmem:[#allocation3 + $0x4b8] sm:$0xff]
        %v2818 = vld [vmem:[#allocation3 + $0x4c0] sm:$0xff]
        %v2819 = vld [vmem:[#allocation3 + $0x4c8] sm:$0xff]
        %v2820 = vld [vmem:[#allocation3 + $0x4d0] sm:$0xff]
        %v2821 = vld [vmem:[#allocation3 + $0x4d8] sm:$0xff]
        %v2822 = vld [vmem:[#allocation3 + $0x4e0] sm:$0xff]
        %v2823 = vld [vmem:[#allocation3 + $0x4e8] sm:$0xff]
        %v2824 = vld [vmem:[#allocation3 + $0x4f0] sm:$0xff]
        %v2825 = vld [vmem:[#allocation3 + $0x4f8] sm:$0xff]
        %v2826 = vld [vmem:[#allocation3 + $0x500] sm:$0xff]
        %v2827 = vld [vmem:[#allocation3 + $0x508] sm:$0xff]
        %v2828 = vld [vmem:[#allocation3 + $0x510] sm:$0xff]
        %v2829 = vld [vmem:[#allocation3 + $0x518] sm:$0xff]
        %v2830 = vld [vmem:[#allocation3 + $0x520] sm:$0xff]
        %v2831 = vld [vmem:[#allocation3 + $0x528] sm:$0xff]
        %v2832 = vld [vmem:[#allocation3 + $0x530] sm:$0xff]
        %v2833 = vld [vmem:[#allocation3 + $0x538] sm:$0xff]
        %v2834 = vld [vmem:[#allocation3 + $0x540] sm:$0xff]
        %v2835 = vld [vmem:[#allocation3 + $0x548] sm:$0xff]
        %v2836 = vld [vmem:[#allocation3 + $0x550] sm:$0xff]
        %v2837 = vld [vmem:[#allocation3 + $0x558] sm:$0xff]
        %v2838 = vld [vmem:[#allocation3 + $0x560] sm:$0xff]
        %v2839 = vld [vmem:[#allocation3 + $0x568] sm:$0xff]
        %v2840 = vld [vmem:[#allocation3 + $0x570] sm:$0xff]
        %v2841 = vld [vmem:[#allocation3 + $0x578] sm:$0xff]
        %v2842 = vld [vmem:[#allocation3 + $0x580] sm:$0xff]
        %v2843 = vld [vmem:[#allocation3 + $0x588] sm:$0xff]
        %v2844 = vld [vmem:[#allocation3 + $0x590] sm:$0xff]
        %v2845 = vld [vmem:[#allocation3 + $0x598] sm:$0xff]
        %v2846 = vld [vmem:[#allocation3 + $0x5a0] sm:$0xff]
        %v2847 = vld [vmem:[#allocation3 + $0x5a8] sm:$0xff]
        %v2848 = vld [vmem:[#allocation3 + $0x5b0] sm:$0xff]
        %v2849 = vld [vmem:[#allocation3 + $0x5b8] sm:$0xff]
        %v2850 = vld [vmem:[#allocation3 + $0x5c0] sm:$0xff]
        %v2851 = vld [vmem:[#allocation3 + $0x5c8] sm:$0xff]
        %v2852 = vld [vmem:[#allocation3 + $0x5d0] sm:$0xff]
        %v2853 = vld [vmem:[#allocation3 + $0x5d8] sm:$0xff]
        %v2854 = vld [vmem:[#allocation3 + $0x5e0] sm:$0xff]
        %v2855 = vld [vmem:[#allocation3 + $0x5e8] sm:$0xff]
        %v2856 = vld [vmem:[#allocation3 + $0x5f0] sm:$0xff]
        %v2857 = vld [vmem:[#allocation3 + $0x5f8] sm:$0xff]
        %v2858 = vld [vmem:[#allocation3 + $0x600] sm:$0xff]
        %v2859 = vld [vmem:[#allocation3 + $0x608] sm:$0xff]
        %v2860 = vld [vmem:[#allocation3 + $0x610] sm:$0xff]
        %v2861 = vld [vmem:[#allocation3 + $0x618] sm:$0xff]
        %v2862 = vld [vmem:[#allocation3 + $0x620] sm:$0xff]
        %v2863 = vld [vmem:[#allocation3 + $0x628] sm:$0xff]
        %v2864 = vld [vmem:[#allocation3 + $0x630] sm:$0xff]
        %v2865 = vld [vmem:[#allocation3 + $0x638] sm:$0xff]
        %v2866 = vld [vmem:[#allocation3 + $0x640] sm:$0xff]
        %v2867 = vld [vmem:[#allocation3 + $0x648] sm:$0xff]
        %v2868 = vld [vmem:[#allocation3 + $0x650] sm:$0xff]
        %v2869 = vld [vmem:[#allocation3 + $0x658] sm:$0xff]
        %v2870 = vld [vmem:[#allocation3 + $0x660] sm:$0xff]
        %v2871 = vld [vmem:[#allocation3 + $0x668] sm:$0xff]
        %v2872 = vld [vmem:[#allocation3 + $0x670] sm:$0xff]
        %v2873 = vld [vmem:[#allocation3 + $0x678] sm:$0xff]
        %v2874 = vld [vmem:[#allocation3 + $0x680] sm:$0xff]
        %v2875 = vld [vmem:[#allocation3 + $0x688] sm:$0xff]
        %v2876 = vld [vmem:[#allocation3 + $0x690] sm:$0xff]
        %v2877 = vld [vmem:[#allocation3 + $0x698] sm:$0xff]
        %v2878 = vld [vmem:[#allocation3 + $0x6a0] sm:$0xff]
        %v2879 = vld [vmem:[#allocation3 + $0x6a8] sm:$0xff]
        %v2880 = vld [vmem:[#allocation3 + $0x6b0] sm:$0xff]
        %v2881 = vld [vmem:[#allocation3 + $0x6b8] sm:$0xff]
        %v2882 = vld [vmem:[#allocation3 + $0x6c0] sm:$0xff]
        %v2883 = vld [vmem:[#allocation3 + $0x6c8] sm:$0xff]
        %v2884 = vld [vmem:[#allocation3 + $0x6d0] sm:$0xff]
        %v2885 = vld [vmem:[#allocation3 + $0x6d8] sm:$0xff]
        %v2886 = vld [vmem:[#allocation3 + $0x6e0] sm:$0xff]
        %v2887 = vld [vmem:[#allocation3 + $0x6e8] sm:$0xff]
        %v2888 = vld [vmem:[#allocation3 + $0x6f0] sm:$0xff]
        %v2889 = vld [vmem:[#allocation3 + $0x6f8] sm:$0xff]
        %v2890 = vld [vmem:[#allocation3 + $0x700] sm:$0xff]
        %v2891 = vld [vmem:[#allocation3 + $0x708] sm:$0xff]
        %v2892 = vld [vmem:[#allocation3 + $0x710] sm:$0xff]
        %v2893 = vld [vmem:[#allocation3 + $0x718] sm:$0xff]
        %v2894 = vld [vmem:[#allocation3 + $0x720] sm:$0xff]
        %v2895 = vld [vmem:[#allocation3 + $0x728] sm:$0xff]
        %v2896 = vld [vmem:[#allocation3 + $0x730] sm:$0xff]
        %v2897 = vld [vmem:[#allocation3 + $0x738] sm:$0xff]
        %v2898 = vld [vmem:[#allocation3 + $0x740] sm:$0xff]
        %v2899 = vld [vmem:[#allocation3 + $0x748] sm:$0xff]
        %v2900 = vld [vmem:[#allocation3 + $0x750] sm:$0xff]
        %v2901 = vld [vmem:[#allocation3 + $0x758] sm:$0xff]
        %v2902 = vld [vmem:[#allocation3 + $0x760] sm:$0xff]
        %v2903 = vld [vmem:[#allocation3 + $0x768] sm:$0xff]
        %v2904 = vld [vmem:[#allocation3 + $0x770] sm:$0xff]
        %v2905 = vld [vmem:[#allocation3 + $0x778] sm:$0xff]
        %v2906 = vld [vmem:[#allocation3 + $0x780] sm:$0xff]
        %v2907 = vld [vmem:[#allocation3 + $0x788] sm:$0xff]
        %v2908 = vld [vmem:[#allocation3 + $0x790] sm:$0xff]
        %v2909 = vld [vmem:[#allocation3 + $0x798] sm:$0xff]
        %v2910 = vld [vmem:[#allocation3 + $0x7a0] sm:$0xff]
        %v2911 = vld [vmem:[#allocation3 + $0x7a8] sm:$0xff]
        %v2912 = vld [vmem:[#allocation3 + $0x7b0] sm:$0xff]
        %v2913 = vld [vmem:[#allocation3 + $0x7b8] sm:$0xff]
        %v2914 = vld [vmem:[#allocation3 + $0x7c0] sm:$0xff]
        %v2915 = vld [vmem:[#allocation3 + $0x7c8] sm:$0xff]
        %v2916 = vld [vmem:[#allocation3 + $0x7d0] sm:$0xff]
        %v2917 = vld [vmem:[#allocation3 + $0x7d8] sm:$0xff]
        %v2918 = vld [vmem:[#allocation3 + $0x7e0] sm:$0xff]
        %v2919 = vld [vmem:[#allocation3 + $0x7e8] sm:$0xff]
        %v2920 = vld [vmem:[#allocation3 + $0x7f0] sm:$0xff]
        %v2921 = vld [vmem:[#allocation3 + $0x7f8] sm:$0xff]
        %v2922 = vld [vmem:[%s7] sm:$0xf]
        %2924 = vset.pattern.permute.xlu0 0
        %2925 = vperm.xlu0 %2924, %v2922
        %v2926 = vpop.permute.xlu0 %2925
        %2928 = vmatprep.subr.mxu0 %v2667
        %2929 = vmatpush1.msra.mxu0 %v2666
        %2930 = vmatprep.subr.mxu0 %v2675
        %2931 = vmatpush1.msra.mxu0 %v2674
        %2932 = vmatprep.subr.mxu0 %v2683
        %2933 = vmatpush1.msra.mxu0 %v2682
        %2934 = vmatprep.subr.mxu0 %v2691
        %2935 = vmatpush1.msra.mxu0 %v2690
        %2936 = vmatprep.subr.mxu0 %v2699
        %2937 = vmatpush1.msra.mxu0 %v2698
        %2938 = vmatprep.subr.mxu0 %v2707
        %2939 = vmatpush1.msra.mxu0 %v2706
        %2940 = vmatprep.subr.mxu0 %v2715
        %2941 = vmatpush1.msra.mxu0 %v2714
        %2942 = vmatprep.subr.mxu0 %v2723
        %2943 = vmatpush1.msra.mxu0 %v2722
        %2944 = vmatprep.subr.mxu0 %v2731
        %2945 = vmatpush1.msra.mxu0 %v2730
        %2946 = vmatprep.subr.mxu0 %v2739
        %2947 = vmatpush1.msra.mxu0 %v2738
        %2948 = vmatprep.subr.mxu0 %v2747
        %2949 = vmatpush1.msra.mxu0 %v2746
        %2950 = vmatprep.subr.mxu0 %v2755
        %2951 = vmatpush1.msra.mxu0 %v2754
        %2952 = vmatprep.subr.mxu0 %v2763
        %2953 = vmatpush1.msra.mxu0 %v2762
        %2954 = vmatprep.subr.mxu0 %v2771
        %2955 = vmatpush1.msra.mxu0 %v2770
        %2956 = vmatprep.subr.mxu0 %v2779
        %2957 = vmatpush1.msra.mxu0 %v2778
        %2958 = vmatprep.subr.mxu0 %v2787
        %2959 = vmatpush1.msra.mxu0 %v2786
        %2960 = vmatprep.subr.mxu0 %v2795
        %2961 = vmatpush1.msra.mxu0 %v2794
        %2962 = vmatprep.subr.mxu0 %v2803
        %2963 = vmatpush1.msra.mxu0 %v2802
        %2964 = vmatprep.subr.mxu0 %v2811
        %2965 = vmatpush1.msra.mxu0 %v2810
        %2966 = vmatprep.subr.mxu0 %v2819
        %2967 = vmatpush1.msra.mxu0 %v2818
        %2968 = vmatprep.subr.mxu0 %v2827
        %2969 = vmatpush1.msra.mxu0 %v2826
        %2970 = vmatprep.subr.mxu0 %v2835
        %2971 = vmatpush1.msra.mxu0 %v2834
        %2972 = vmatprep.subr.mxu0 %v2843
        %2973 = vmatpush1.msra.mxu0 %v2842
        %2974 = vmatprep.subr.mxu0 %v2851
        %2975 = vmatpush1.msra.mxu0 %v2850
        %2976 = vmatprep.subr.mxu0 %v2859
        %2977 = vmatpush1.msra.mxu0 %v2858
        %2978 = vmatprep.subr.mxu0 %v2867
        %2979 = vmatpush1.msra.mxu0 %v2866
        %2980 = vmatprep.subr.mxu0 %v2875
        %2981 = vmatpush1.msra.mxu0 %v2874
        %2982 = vmatprep.subr.mxu0 %v2883
        %2983 = vmatpush1.msra.mxu0 %v2882
        %2984 = vmatprep.subr.mxu0 %v2891
        %2985 = vmatpush1.msra.mxu0 %v2890
        %2986 = vmatprep.subr.mxu0 %v2899
        %2987 = vmatpush1.msra.mxu0 %v2898
        %2988 = vmatprep.subr.mxu0 %v2907
        %2989 = vmatpush1.msra.mxu0 %v2906
        %2990 = vmatprep.subr.mxu0 %v2915
        %2991 = vmatpush1.msra.mxu0 %v2914
        %2992 = vmatprep.mubr.f32.mxu0 %v2665
        %2993 = vmatmul.mubr.f32.gmra.mrb[0].mxu0 %v2664
        %v2994 = vpop.f32.mrb[0].mxu0
        %v2995 = vadd.f32 %v2926, %v2994
        %v2996 = vpop.f32.mrb[0].mxu0
        %v2997 = vadd.f32 %v2926, %v2996
        %2998 = vdwg.mxu0
        %2999 = vmatprep.subr.mxu0 %v2669
        %3000 = vmatpush1.msra.mxu0 %v2668
        %3001 = vmatprep.subr.mxu0 %v2677
        %3002 = vmatpush1.msra.mxu0 %v2676
        %3003 = vmatprep.subr.mxu0 %v2685
        %3004 = vmatpush1.msra.mxu0 %v2684
        %3005 = vmatprep.subr.mxu0 %v2693
        %3006 = vmatpush1.msra.mxu0 %v2692
        %3007 = vmatprep.subr.mxu0 %v2701
        %3008 = vmatpush1.msra.mxu0 %v2700
        %3009 = vmatprep.subr.mxu0 %v2709
        %3010 = vmatpush1.msra.mxu0 %v2708
        %3011 = vmatprep.subr.mxu0 %v2717
        %3012 = vmatpush1.msra.mxu0 %v2716
        %3013 = vmatprep.subr.mxu0 %v2725
        %3014 = vmatpush1.msra.mxu0 %v2724
        %3015 = vmatprep.subr.mxu0 %v2733
        %3016 = vmatpush1.msra.mxu0 %v2732
        %3017 = vmatprep.subr.mxu0 %v2741
        %3018 = vmatpush1.msra.mxu0 %v2740
        %3019 = vmatprep.subr.mxu0 %v2749
        %3020 = vmatpush1.msra.mxu0 %v2748
        %3021 = vmatprep.subr.mxu0 %v2757
        %3022 = vmatpush1.msra.mxu0 %v2756
        %3023 = vmatprep.subr.mxu0 %v2765
        %3024 = vmatpush1.msra.mxu0 %v2764
        %3025 = vmatprep.subr.mxu0 %v2773
        %3026 = vmatpush1.msra.mxu0 %v2772
        %3027 = vmatprep.subr.mxu0 %v2781
        %3028 = vmatpush1.msra.mxu0 %v2780
        %3029 = vmatprep.subr.mxu0 %v2789
        %3030 = vmatpush1.msra.mxu0 %v2788
        %3031 = vmatprep.subr.mxu0 %v2797
        %3032 = vmatpush1.msra.mxu0 %v2796
        %3033 = vmatprep.subr.mxu0 %v2805
        %3034 = vmatpush1.msra.mxu0 %v2804
        %3035 = vmatprep.subr.mxu0 %v2813
        %3036 = vmatpush1.msra.mxu0 %v2812
        %3037 = vmatprep.subr.mxu0 %v2821
        %3038 = vmatpush1.msra.mxu0 %v2820
        %3039 = vmatprep.subr.mxu0 %v2829
        %3040 = vmatpush1.msra.mxu0 %v2828
        %3041 = vmatprep.subr.mxu0 %v2837
        %3042 = vmatpush1.msra.mxu0 %v2836
        %3043 = vmatprep.subr.mxu0 %v2845
        %3044 = vmatpush1.msra.mxu0 %v2844
        %3045 = vmatprep.subr.mxu0 %v2853
        %3046 = vmatpush1.msra.mxu0 %v2852
        %3047 = vmatprep.subr.mxu0 %v2861
        %3048 = vmatpush1.msra.mxu0 %v2860
        %3049 = vmatprep.subr.mxu0 %v2869
        %3050 = vmatpush1.msra.mxu0 %v2868
        %3051 = vmatprep.subr.mxu0 %v2877
        %3052 = vmatpush1.msra.mxu0 %v2876
        %3053 = vmatprep.subr.mxu0 %v2885
        %3054 = vmatpush1.msra.mxu0 %v2884
        %3055 = vmatprep.subr.mxu0 %v2893
        %3056 = vmatpush1.msra.mxu0 %v2892
        %3057 = vmatprep.subr.mxu0 %v2901
        %3058 = vmatpush1.msra.mxu0 %v2900
        %3059 = vmatprep.subr.mxu0 %v2909
        %3060 = vmatpush1.msra.mxu0 %v2908
        %3061 = vmatprep.subr.mxu0 %v2917
        %3062 = vmatpush1.msra.mxu0 %v2916
        %3063 = vmatprep.mubr.f32.mxu0 %v2665
        %3064 = vmatmul.mubr.f32.gmra.mrb[0].mxu0 %v2664
        %v3065 = vpop.f32.mrb[0].mxu0
        %v3066 = vadd.f32 %v2926, %v3065
        %v3067 = vpop.f32.mrb[0].mxu0
        %v3068 = vadd.f32 %v2926, %v3067
        %3069 = vdwg.mxu0
        %3070 = vmatprep.subr.mxu0 %v2671
        %3071 = vmatpush1.msra.mxu0 %v2670
        %3072 = vmatprep.subr.mxu0 %v2679
        %3073 = vmatpush1.msra.mxu0 %v2678
        %3074 = vmatprep.subr.mxu0 %v2687
        %3075 = vmatpush1.msra.mxu0 %v2686
        %3076 = vmatprep.subr.mxu0 %v2695
        %3077 = vmatpush1.msra.mxu0 %v2694
        %3078 = vmatprep.subr.mxu0 %v2703
        %3079 = vmatpush1.msra.mxu0 %v2702
        %3080 = vmatprep.subr.mxu0 %v2711
        %3081 = vmatpush1.msra.mxu0 %v2710
        %3082 = vmatprep.subr.mxu0 %v2719
        %3083 = vmatpush1.msra.mxu0 %v2718
        %3084 = vmatprep.subr.mxu0 %v2727
        %3085 = vmatpush1.msra.mxu0 %v2726
        %3086 = vmatprep.subr.mxu0 %v2735
        %3087 = vmatpush1.msra.mxu0 %v2734
        %3088 = vmatprep.subr.mxu0 %v2743
        %3089 = vmatpush1.msra.mxu0 %v2742
        %3090 = vmatprep.subr.mxu0 %v2751
        %3091 = vmatpush1.msra.mxu0 %v2750
        %3092 = vmatprep.subr.mxu0 %v2759
        %3093 = vmatpush1.msra.mxu0 %v2758
        %3094 = vmatprep.subr.mxu0 %v2767
        %3095 = vmatpush1.msra.mxu0 %v2766
        %3096 = vmatprep.subr.mxu0 %v2775
        %3097 = vmatpush1.msra.mxu0 %v2774
        %3098 = vmatprep.subr.mxu0 %v2783
        %3099 = vmatpush1.msra.mxu0 %v2782
        %3100 = vmatprep.subr.mxu0 %v2791
        %3101 = vmatpush1.msra.mxu0 %v2790
        %3102 = vmatprep.subr.mxu0 %v2799
        %3103 = vmatpush1.msra.mxu0 %v2798
        %3104 = vmatprep.subr.mxu0 %v2807
        %3105 = vmatpush1.msra.mxu0 %v2806
        %3106 = vmatprep.subr.mxu0 %v2815
        %3107 = vmatpush1.msra.mxu0 %v2814
        %3108 = vmatprep.subr.mxu0 %v2823
        %3109 = vmatpush1.msra.mxu0 %v2822
        %3110 = vmatprep.subr.mxu0 %v2831
        %3111 = vmatpush1.msra.mxu0 %v2830
        %3112 = vmatprep.subr.mxu0 %v2839
        %3113 = vmatpush1.msra.mxu0 %v2838
        %3114 = vmatprep.subr.mxu0 %v2847
        %3115 = vmatpush1.msra.mxu0 %v2846
        %3116 = vmatprep.subr.mxu0 %v2855
        %3117 = vmatpush1.msra.mxu0 %v2854
        %3118 = vmatprep.subr.mxu0 %v2863
        %3119 = vmatpush1.msra.mxu0 %v2862
        %3120 = vmatprep.subr.mxu0 %v2871
        %3121 = vmatpush1.msra.mxu0 %v2870
        %3122 = vmatprep.subr.mxu0 %v2879
        %3123 = vmatpush1.msra.mxu0 %v2878
        %3124 = vmatprep.subr.mxu0 %v2887
        %3125 = vmatpush1.msra.mxu0 %v2886
        %3126 = vmatprep.subr.mxu0 %v2895
        %3127 = vmatpush1.msra.mxu0 %v2894
        %3128 = vmatprep.subr.mxu0 %v2903
        %3129 = vmatpush1.msra.mxu0 %v2902
        %3130 = vmatprep.subr.mxu0 %v2911
        %3131 = vmatpush1.msra.mxu0 %v2910
        %3132 = vmatprep.subr.mxu0 %v2919
        %3133 = vmatpush1.msra.mxu0 %v2918
        %3134 = vmatprep.mubr.f32.mxu0 %v2665
        %3135 = vmatmul.mubr.f32.gmra.mrb[0].mxu0 %v2664
        %v3136 = vpop.f32.mrb[0].mxu0
        %v3137 = vadd.f32 %v2926, %v3136
        %v3138 = vpop.f32.mrb[0].mxu0
        %v3139 = vadd.f32 %v2926, %v3138
        %3140 = vdwg.mxu0
        %3141 = vmatprep.subr.mxu0 %v2673
        %3142 = vmatpush1.msra.mxu0 %v2672
        %3143 = vmatprep.subr.mxu0 %v2681
        %3144 = vmatpush1.msra.mxu0 %v2680
        %3145 = vmatprep.subr.mxu0 %v2689
        %3146 = vmatpush1.msra.mxu0 %v2688
        %3147 = vmatprep.subr.mxu0 %v2697
        %3148 = vmatpush1.msra.mxu0 %v2696
        %3149 = vmatprep.subr.mxu0 %v2705
        %3150 = vmatpush1.msra.mxu0 %v2704
        %3151 = vmatprep.subr.mxu0 %v2713
        %3152 = vmatpush1.msra.mxu0 %v2712
        %3153 = vmatprep.subr.mxu0 %v2721
        %3154 = vmatpush1.msra.mxu0 %v2720
        %3155 = vmatprep.subr.mxu0 %v2729
        %3156 = vmatpush1.msra.mxu0 %v2728
        %3157 = vmatprep.subr.mxu0 %v2737
        %3158 = vmatpush1.msra.mxu0 %v2736
        %3159 = vmatprep.subr.mxu0 %v2745
        %3160 = vmatpush1.msra.mxu0 %v2744
        %3161 = vmatprep.subr.mxu0 %v2753
        %3162 = vmatpush1.msra.mxu0 %v2752
        %3163 = vmatprep.subr.mxu0 %v2761
        %3164 = vmatpush1.msra.mxu0 %v2760
        %3165 = vmatprep.subr.mxu0 %v2769
        %3166 = vmatpush1.msra.mxu0 %v2768
        %3167 = vmatprep.subr.mxu0 %v2777
        %3168 = vmatpush1.msra.mxu0 %v2776
        %3169 = vmatprep.subr.mxu0 %v2785
        %3170 = vmatpush1.msra.mxu0 %v2784
        %3171 = vmatprep.subr.mxu0 %v2793
        %3172 = vmatpush1.msra.mxu0 %v2792
        %3173 = vmatprep.subr.mxu0 %v2801
        %3174 = vmatpush1.msra.mxu0 %v2800
        %3175 = vmatprep.subr.mxu0 %v2809
        %3176 = vmatpush1.msra.mxu0 %v2808
        %3177 = vmatprep.subr.mxu0 %v2817
        %3178 = vmatpush1.msra.mxu0 %v2816
        %3179 = vmatprep.subr.mxu0 %v2825
        %3180 = vmatpush1.msra.mxu0 %v2824
        %3181 = vmatprep.subr.mxu0 %v2833
        %3182 = vmatpush1.msra.mxu0 %v2832
        %3183 = vmatprep.subr.mxu0 %v2841
        %3184 = vmatpush1.msra.mxu0 %v2840
        %3185 = vmatprep.subr.mxu0 %v2849
        %3186 = vmatpush1.msra.mxu0 %v2848
        %3187 = vmatprep.subr.mxu0 %v2857
        %3188 = vmatpush1.msra.mxu0 %v2856
        %3189 = vmatprep.subr.mxu0 %v2865
        %3190 = vmatpush1.msra.mxu0 %v2864
        %3191 = vmatprep.subr.mxu0 %v2873
        %3192 = vmatpush1.msra.mxu0 %v2872
        %3193 = vmatprep.subr.mxu0 %v2881
        %3194 = vmatpush1.msra.mxu0 %v2880
        %3195 = vmatprep.subr.mxu0 %v2889
        %3196 = vmatpush1.msra.mxu0 %v2888
        %3197 = vmatprep.subr.mxu0 %v2897
        %3198 = vmatpush1.msra.mxu0 %v2896
        %3199 = vmatprep.subr.mxu0 %v2905
        %3200 = vmatpush1.msra.mxu0 %v2904
        %3201 = vmatprep.subr.mxu0 %v2913
        %3202 = vmatpush1.msra.mxu0 %v2912
        %3203 = vmatprep.subr.mxu0 %v2921
        %3204 = vmatpush1.msra.mxu0 %v2920
        %3205 = vmatprep.mubr.f32.mxu0 %v2665
        %3206 = vmatmul.mubr.f32.gmra.mrb[0].mxu0 %v2664
        %v3207 = vpop.f32.mrb[0].mxu0
        %v3208 = vadd.f32 %v2926, %v3207
        %v3209 = vpop.f32.mrb[0].mxu0
        %v3210 = vadd.f32 %v2926, %v3209
        %3211 = vdwg.mxu0
        %v3220 = vcombine.low %v2995, %v2997
        %v3221 = vcombine.low %v3066, %v3068
        %v3222 = vcombine.low %v3137, %v3139
        %v3223 = vcombine.low %v3208, %v3210
        %3228 = vst [vmem:[%s313] sm:$0xff] %v3220
        %3229 = vst [vmem:[%s313 + $0x8] sm:$0xff] %v3221
        %3230 = vst [vmem:[%s313 + $0x10] sm:$0xff] %v3222
        %3231 = vst [vmem:[%s313 + $0x18] sm:$0xff] %v3223
        %s3232 = sand.u32 %s204, 1
        %s3233 = scalar_lea.sflag [#allocation5], %s3232
        %s3234 = sand.u32 %s204, 1
        %s3235 = smul.addr %s3234, 32
        %s3236 = scalar_lea.vmem [#allocation6], %s3235
        // Predicated region
        $region57: #{tpu_custom_call.1} parent=51 // pred_check
          %p3237 = pneg %p214
        $region58: #{tpu_custom_call.1} parent=51 // pred_check_branch
          %3239 = sbr.rel (%p3237) target = $region60
        $region59: #{tpu_custom_call.1} parent=51 // pred_region
          %s3241 = ssub.s32 512, 512
          %3242 = vsyncadd %s3233, %s3241
          %s3243 = smul.addr %s23, 8
          %s3244 = smul.addr %s3243, 64
          %s3245 = scalar_lea.hbm %s8, %s3244
          %s3247 = sshll.u32 %s3236, 4
          %s3248 = int_to_ptr.vmem [resolvable:$true] %s3247
          %3250 = dma.vmem_to_hbm [thread:$0]  %s3248, 512, %s3245, %s3233
        $region60: #{tpu_custom_call.1} parent=51 // pred_fallthru
          _
      $region52: #{tpu_custom_call.1} parent=5 // pred_fallthru
        _
      %p3251 = scmp.le.s32.totalorder 2, %s18
      // Predicated region
      $region61: #{tpu_custom_call.1} parent=5 // pred_check
        %p3252 = pneg %p3251
      $region62: #{tpu_custom_call.1} parent=5 // pred_check_branch
        %3254 = sbr.rel (%p3252) target = $region64
      $region63: #{tpu_custom_call.1} parent=5 // pred_region
        %s3255 = ssub.s32 %s18, 2
        // Predicated region
        $region65: #{tpu_custom_call.1} parent=63 // pred_check
          %p3256 = pneg %p220
        $region66: #{tpu_custom_call.1} parent=63 // pred_check_branch
          %3258 = sbr.rel (%p3256) target = $region68
        $region67: #{tpu_custom_call.1} parent=63 // pred_region
          %s3259 = sand.u32 %s205, 1
          %s3260 = scalar_lea.sflag [#allocation5], %s3259
          %s3261 = sand.u32 %s205, 1
          %s3262 = smul.addr %s3261, 32
          %s3263 = scalar_lea.vmem [#allocation6], %s3262
          %3264 = dma.done %s3260, 512
        $region68: #{tpu_custom_call.1} parent=63 // pred_fallthru
          _
      $region64: #{tpu_custom_call.1} parent=5 // pred_fallthru
        _
    $region6: #{tpu_custom_call.1} parent=1 // loop_footer
      %s22 = sadd.s32 1, %s18
    $region7: #{tpu_custom_call.1} parent=1 // loop_footer_branch
      %17 = sbr.rel target = $region3
    $region8: #{tpu_custom_call.1} parent=1 // loop_exit
      _
    %3265 = vsyncpa [#allocation4], 1
    %s3266 = scalar_lea.sflag [#allocation4], 1
    %3267 = vsyncpa %s3266, 1
    %3268 = vsyncpa [#allocation5], 1
    %s3269 = scalar_lea.sflag [#allocation5], 1
    %3270 = vsyncpa %s3269, 1

</llo_original>
